<compile_context>
chip_gen: v6e
topology: v6e:2x2x1
jax: 0.10.0
libtpu: 0.0.40
codegen_flags: <defaults>
</compile_context>

<pallas_src>
import functools

import numpy as np
import jax
import jax.numpy as jnp
from jax.experimental import pallas as pl
from jax.experimental.pallas import tpu as pltpu


# ----------------------------------------------------------------------------
# Flattened-spatial geometry.
# Channels stay on sublanes; the spatial (H, W) plane is flattened to the lane axis with a
# padded row stride Wp.  All layers share ONE chained layout (offsets are flat lane indices):
#   xin   : pixel (i,j) at 5*Wp+5 + i*Wp + j   (zero-padded input image, bf16, HBM)
#   h     : pixel (i,j) at 4*Wp+4 + i*Wp + j   (conv_in output, VMEM only)
#   out   : pixel (i,j) at 3*Wp+3 + i*Wp + j   (conv_out output == head input, bf16, HBM)
#   head  : pixel (i,j) at i*Wp + j            (head output, f32, cropped by the wrapper)
# With this chain every 3x3 / 7x7 tap is a *contiguous* lane slice at offset dh*Wp + dw,
# zero halos are produced in-kernel with a precomputed lane mask, and no crop / re-pad /
# concatenate ever happens between pallas_calls.
# ----------------------------------------------------------------------------


def _round_up(x, m):
    return ((x + m - 1) // m) * m


def _pick_wp(H, W):
    # Need >= 3 zero columns of halo room per flattened row (7x7) plus the fixed col
    # offset of 5; prefer H*Wp % 128 == 0 so head output stores are lane-dense.
    base = W + 6
    for wp in range(base, base + 129):
        if (H * wp) % 128 == 0:
            return wp
    return base


def _geometry(H, W):
    Wp = _pick_wp(H, W)
    P = H * Wp                                    # head output length (multiple of 128)
    Lo = _round_up(6 * Wp + 6 + P, 128)           # conv_out output length (7x7-halo-ready)
    Lh = 2 * Wp + 2 + Lo                          # conv_in output length (extra 3x3 halo)
    return Wp, P, Lh, Lo


def _valid_mask(length, base, H, W, Wp):
    """1.0 at flat positions that hold a real pixel (given pixel base offset), else 0.0."""
    n = np.arange(length)
    p = n - base
    valid = (p >= 0) & (p < H * Wp) & ((p % Wp) < W)
    return jnp.asarray(valid.astype(np.float32).reshape(1, length))


def _pack_conv3x3(w):
    """(Cout, Cin, 3, 3) torch-layout conv weight -> (Cout, 9*Cin_p) bf16, tap-major
    (dh, dw, cin), with Cin zero-padded to a multiple of 16 (bf16 sublane tile)."""
    cout, cin = w.shape[0], w.shape[1]
    cin_p = _round_up(cin, 16)
    w = jnp.pad(w, ((0, 0), (0, cin_p - cin), (0, 0), (0, 0)))
    w = jnp.transpose(w, (0, 2, 3, 1)).reshape(cout, 9 * cin_p)
    return w.astype(jnp.bfloat16)


# ----------------------------------------------------------------------------
# Kernel 1: fused U-Net stand-in block, ONE pallas_call per forward:
#   conv3x3(inCh -> embCh) + bias + per-sample cond + SiLU   (packed-tap K=9*Cin matmul)
#   conv3x3(embCh -> 2*inCh) + bias                           (packed-tap K=9*embCh matmul)
# The intermediate h stays in VMEM; the output is written already zero-haloed in the
# layout the 7x7 heads consume.
# TODO(synk): the real U_Net source is not in the provided module; this is a stand-in
# conditional conv network with the same I/O contract (inCh -> 2*inCh, conditioned on t, c).
# ----------------------------------------------------------------------------

def _fused_convs_kernel(x_ref, w1_ref, b1_ref, cond_ref, w2_ref, b2_ref,
                        mh_ref, mo_ref, o_ref, *, Wp, Lh, Lo):
    x = x_ref[0]                                              # (Cin_p, Lin) bf16

    # ---- conv_in: 9 taps stacked on the contraction dim -> one K=9*Cin_p MXU matmul ----
    taps = [x[:, dh * Wp + dw: dh * Wp + dw + Lh]
            for dh in range(3) for dw in range(3)]            # contiguous lane slices
    h = jnp.dot(w1_ref[...], jnp.concatenate(taps, axis=0),
                preferred_element_type=jnp.float32)           # (C1, Lh) f32
    h = h + b1_ref[...] + cond_ref[0]                         # bias + per-sample conditioning
    h = h * jax.nn.sigmoid(h)                                 # SiLU (f32)
    h = (h * mh_ref[...]).astype(jnp.bfloat16)                # zero halos / junk cols, bf16

    # ---- conv_out on the VMEM-resident h: one K=9*C1 MXU matmul ----
    taps2 = [h[:, dh * Wp + dw: dh * Wp + dw + Lo]
             for dh in range(3) for dw in range(3)]
    out = jnp.dot(w2_ref[...], jnp.concatenate(taps2, axis=0),
                  preferred_element_type=jnp.float32)         # (C2, Lo) f32
    out = (out + b2_ref[...]) * mo_ref[...]                   # bias, then zero halos
    o_ref[0] = out.astype(o_ref.dtype)


def pallas_fused_convs(x_nchw, w1p, b1, cond, w2p, b2, *, Wp, Lh, Lo):
    """x_nchw: (B, Cin, H, W) f32; returns (B, 2*inCh, Lo) bf16 in the head-ready layout."""
    B, Cin, H, W = x_nchw.shape
    Cin_p = w1p.shape[1] // 9
    C1 = w1p.shape[0]
    C2 = w2p.shape[0]
    assert Wp >= W + 6

    # One zero-pad: channels -> Cin_p (bf16 tile), image placed at row 5 / col 5 so the
    # pixel base offset is exactly 5*Wp + 5; enough bottom rows that every tap slice of
    # length Lh starting at offsets [0, 2*Wp+2] stays in bounds.
    rows = max(-(-(2 * Wp + 2 + Lh) // Wp), 5 + H + 1)
    xp = jnp.pad(x_nchw.astype(jnp.bfloat16),
                 ((0, 0), (0, Cin_p - Cin), (5, rows - 5 - H), (5, Wp - 5 - W)))
    xin = xp.reshape(B, Cin_p, rows * Wp)
    Lin = xin.shape[-1]

    mask_h = _valid_mask(Lh, 4 * Wp + 4, H, W, Wp)            # conv_in pixel mask
    mask_o = _valid_mask(Lo, 3 * Wp + 3, H, W, Wp)            # conv_out pixel mask

    return pl.pallas_call(
        functools.partial(_fused_convs_kernel, Wp=Wp, Lh=Lh, Lo=Lo),
        out_shape=jax.ShapeDtypeStruct((B, C2, Lo), jnp.bfloat16),
        grid=(B,),
        in_specs=[
            pl.BlockSpec((1, Cin_p, Lin), lambda b: (b, 0, 0)),
            pl.BlockSpec((C1, 9 * Cin_p), lambda b: (0, 0)),
            pl.BlockSpec((C1, 1), lambda b: (0, 0)),
            pl.BlockSpec((1, C1, 1), lambda b: (b, 0, 0)),
            pl.BlockSpec((C2, 9 * C1), lambda b: (0, 0)),
            pl.BlockSpec((C2, 1), lambda b: (0, 0)),
            pl.BlockSpec((1, Lh), lambda b: (0, 0)),
            pl.BlockSpec((1, Lo), lambda b: (0, 0)),
        ],
        out_specs=pl.BlockSpec((1, C2, Lo), lambda b: (b, 0, 0)),
        compiler_params=pltpu.CompilerParams(
            dimension_semantics=("parallel",),
            vmem_limit_bytes=32 * 1024 * 1024),
    )(xin, w1p, b1.reshape(C1, 1).astype(jnp.float32),
      cond.reshape(B, C1, 1).astype(jnp.float32),
      w2p, b2.reshape(C2, 1).astype(jnp.float32), mask_h, mask_o)


# ----------------------------------------------------------------------------
# Kernel 2: fused ConvNeXt-style heads (dw7x7 + bias -> LN over C -> 1x1 (4x, GELU)
# -> 1x1 -> + residual).  Both heads (out_mean / out_var) run in the same call on a
# leading "head" grid axis and read the conv output directly (index_map selects the
# channel group: head 0 = out[:, inCh:], head 1 = out[:, :inCh]).
# TODO(synk): the exact `convNext(inCh, inCh)` source is not in the provided module;
# this is the standard ConvNeXt block structure with matching (inCh -> inCh) I/O.
# ----------------------------------------------------------------------------

def _convnext_head_kernel(x_ref, dww_ref, dwb_ref, lng_ref, lnb_ref,
                          w1_ref, b1_ref, w2_ref, b2_ref, o_ref, *, Wp, P, eps):
    x = x_ref[0, 0].astype(jnp.float32)                       # (C, Lo), zero-haloed input
    C = x.shape[0]
    wdw = dww_ref[0]                                          # (C, 49)

    # depthwise 7x7: 49 contiguous lane-slice taps, 4 partial accumulators to break the
    # serial VPU add chain.
    accs = [jnp.zeros((C, P), jnp.float32) for _ in range(4)]
    for dh in range(7):
        for dw in range(7):
            t = dh * 7 + dw
            off = dh * Wp + dw
            accs[t % 4] = accs[t % 4] + x[:, off:off + P] * wdw[:, t:t + 1]
    h = (accs[0] + accs[1]) + (accs[2] + accs[3]) + dwb_ref[0]

    # LayerNorm over the channel dim (C on sublanes, spatial on lanes); f32 math.
    # TODO(synk): eps=1e-6 (ConvNeXt default); torch nn.LayerNorm default is 1e-5.
    mean = jnp.mean(h, axis=0, keepdims=True)
    var = jnp.mean(jnp.square(h - mean), axis=0, keepdims=True)
    hn = (h - mean) * jax.lax.rsqrt(var + eps)
    hn = hn * lng_ref[0] + lnb_ref[0]

    # pointwise MLP (1x1 convs): bf16 MXU operands, f32 accumulation / activations.
    h1 = jnp.dot(w1_ref[0], hn.astype(jnp.bfloat16),
                 preferred_element_type=jnp.float32) + b1_ref[0]
    h1 = jax.nn.gelu(h1)   # TODO(synk): tanh-approx GELU; torch nn.GELU default is exact erf
    h2 = jnp.dot(w2_ref[0], h1.astype(jnp.bfloat16),
                 preferred_element_type=jnp.float32) + b2_ref[0]

    # residual = the un-padded input pixels (center of the 7x7 window)
    resid = x[:, 3 * Wp + 3: 3 * Wp + 3 + P]
    o_ref[0, 0] = resid + h2


def pallas_convnext_heads(xg, hp, *, Wp, P, eps=1e-6):
    """xg: (B, 2, inCh, Lo) bf16 view of the conv output (group 1 = noise, group 0 = v).
    Returns (2, B, inCh, P) f32: row 0 = out_mean(noise), row 1 = out_var(v)."""
    B, _, C, Lo = xg.shape
    hid = hp["w1"].shape[1]

    def xmap(h, b):
        return (b, 1 - h, 0, 0)     # head 0 (out_mean) -> channel group 1 (noise), etc.

    def wmap(h, b):
        return (h, 0, 0)

    def omap(h, b):
        return (h, b, 0, 0)

    return pl.pallas_call(
        functools.partial(_convnext_head_kernel, Wp=Wp, P=P, eps=eps),
        out_shape=jax.ShapeDtypeStruct((2, B, C, P), jnp.float32),
        grid=(2, B),
        in_specs=[
            pl.BlockSpec((1, 1, C, Lo), xmap),
            pl.BlockSpec((1, C, 49), wmap),
            pl.BlockSpec((1, C, 1), wmap),
            pl.BlockSpec((1, C, 1), wmap),
            pl.BlockSpec((1, C, 1), wmap),
            pl.BlockSpec((1, hid, C), wmap),
            pl.BlockSpec((1, hid, 1), wmap),
            pl.BlockSpec((1, C, hid), wmap),
            pl.BlockSpec((1, C, 1), wmap),
        ],
        out_specs=pl.BlockSpec((1, 1, C, P), omap),
        compiler_params=pltpu.CompilerParams(
            dimension_semantics=("parallel", "parallel"),
            vmem_limit_bytes=32 * 1024 * 1024),
    )(xg, hp["dw_w"], hp["dw_b"], hp["ln_g"], hp["ln_b"],
      hp["w1"], hp["b1"], hp["w2"], hp["b2"])


# ----------------------------------------------------------------------------
# JAX glue: positional encoding, conditioning, head-parameter stacking, full forward
# ----------------------------------------------------------------------------

def positional_encoding(t, t_dim):
    # TODO(synk): exact PositionalEncoding source not provided; standard sinusoidal
    # encoding (interleaved sin/cos with 10000^(2i/t_dim) frequencies), t_dim even.
    half = t_dim // 2
    tf = t.astype(jnp.float32)[:, None]
    freqs = jnp.exp(-jnp.log(10000.0) * jnp.arange(half, dtype=jnp.float32) / half)
    ang = tf * freqs[None, :]
    return jnp.stack([jnp.sin(ang), jnp.cos(ang)], axis=-1).reshape(t.shape[0], t_dim)


def _stack_heads(pm, pv):
    """Stack out_mean / out_var params along a leading 'head' axis of size 2."""
    C = pm["dw_w"].shape[0]
    hid = pm["w1"].shape[0]

    def s(k, shape, dtype=jnp.float32):
        return jnp.stack([pm[k].reshape(shape), pv[k].reshape(shape)], axis=0).astype(dtype)

    return {
        "dw_w": s("dw_w", (C, 49)),
        "dw_b": s("dw_b", (C, 1)),
        "ln_g": s("ln_g", (C, 1)),
        "ln_b": s("ln_b", (C, 1)),
        "w1": s("w1", (hid, C), jnp.bfloat16),     # bf16 MXU operands
        "b1": s("b1", (hid, 1)),
        "w2": s("w2", (C, hid), jnp.bfloat16),
        "b2": s("b2", (C, 1)),
    }


def diff_model_forward(params, x_t, t, c=None, nullCls=None):
    """x_t: (B, inCh, H, W) NCHW float32; t: python int / scalar / (B,) int array."""
    B, inCh, H, W = x_t.shape
    t_dim = params["t_proj_w"].shape[0]
    embCh = params["t_proj_w"].shape[1]
    assert embCh % 16 == 0, "embCh must be a multiple of 16 (bf16 sublane tile)"

    # --- time embedding --------------------------------------------------------
    t = jnp.asarray(t)
    if t.ndim == 0:
        t = jnp.full((B,), t, dtype=jnp.int32)
    t_emb = positional_encoding(t, t_dim)                          # (B, t_dim)

    # --- class embedding + conditioning projection (tiny GEMM; plain XLA, no launch) ---
    if c is not None:
        # one_hot(c) @ c_emb  ==  row gather (exact: Linear without bias on one-hot)
        c_vec = jnp.take(params["c_emb_w"], c.astype(jnp.int32), axis=0)
        if nullCls is not None:
            c_vec = jnp.where((nullCls == 1)[:, None], 0.0, c_vec)
        cond_in = jnp.concatenate([t_emb, c_vec], axis=1)
        cond_w = jnp.concatenate([params["t_proj_w"], params["c_proj_w"]], axis=0)
        cond_b = params["t_proj_b"] + params["c_proj_b"]
    else:
        cond_in, cond_w, cond_b = t_emb, params["t_proj_w"], params["t_proj_b"]
    cond = jnp.dot(cond_in, cond_w) + cond_b                       # (B, embCh)

    # --- shared flattened geometry ---------------------------------------------
    Wp, P, Lh, Lo = _geometry(H, W)

    # --- U_Net stand-in: fused conv_in(+cond+SiLU) -> conv_out, ONE pallas_call ---
    w1p = _pack_conv3x3(params["conv_in_w"])
    w2p = _pack_conv3x3(params["conv_out_w"])
    out_wide = pallas_fused_convs(x_t, w1p, params["conv_in_b"], cond,
                                  w2p, params["conv_out_b"], Wp=Wp, Lh=Lh, Lo=Lo)
    # out_wide: (B, 2*inCh, Lo) bf16, zero-haloed, directly consumable by the heads.

    # --- output heads fed straight from out_wide (no slice / concat HBM copies) ---
    # group 0 = out[:, :inCh] = v -> out_var (head 1); group 1 = out[:, inCh:] = noise -> out_mean (head 0)
    xg = out_wide.reshape(B, 2, inCh, Lo)                          # metadata-only reshape
    hp = _stack_heads(params["out_mean"], params["out_var"])
    heads = pallas_convnext_heads(xg, hp, Wp=Wp, P=P)              # (2, B, inCh, P)

    res = heads.reshape(2, B, inCh, H, Wp)[..., :W]                # crop the padded columns
    noise_out = res[0]
    v_out = res[1]
    return noise_out, v_out


# ----------------------------------------------------------------------------
# Deterministic parameter init (synthetic weights, no checkpoint)
# ----------------------------------------------------------------------------

def init_params(key, inCh, embCh, t_dim, c_dim, num_classes):
    assert t_dim % 2 == 0, "t_dim must be even for the sinusoidal encoding"
    assert embCh % 16 == 0
    ks = iter(jax.random.split(key, 16))

    def nrm(shape, scale=0.05):
        return scale * jax.random.normal(next(ks), shape, jnp.float32)

    def convnext_params(C):
        return {
            "dw_w": nrm((C, 49)),
            "dw_b": jnp.zeros((C,), jnp.float32),
            "ln_g": jnp.ones((C,), jnp.float32),
            "ln_b": jnp.zeros((C,), jnp.float32),
            "w1": nrm((4 * C, C)),
            "b1": jnp.zeros((4 * C,), jnp.float32),
            "w2": nrm((C, 4 * C)),
            "b2": jnp.zeros((C,), jnp.float32),
        }

    return {
        # c_emb: nn.Linear(num_classes, c_dim, bias=False), stored as (num_classes, c_dim)
        "c_emb_w": nrm((num_classes, c_dim)),
        # conditioning projections (t and c), fused at call time
        "t_proj_w": nrm((t_dim, embCh)),
        "t_proj_b": jnp.zeros((embCh,), jnp.float32),
        "c_proj_w": nrm((c_dim, embCh)),
        "c_proj_b": jnp.zeros((embCh,), jnp.float32),
        # stand-in U_Net 3x3 convs, torch layout (Cout, Cin, 3, 3)
        "conv_in_w": nrm((embCh, inCh, 3, 3)),
        "conv_in_b": jnp.zeros((embCh,), jnp.float32),
        "conv_out_w": nrm((2 * inCh, embCh, 3, 3)),
        "conv_out_b": jnp.zeros((2 * inCh,), jnp.float32),
        # output heads: convNext(inCh, inCh)
        "out_mean": convnext_params(inCh),
        "out_var": convnext_params(inCh),
    }


# ----------------------------------------------------------------------------
if __name__ == "__main__":
    B, inCh, H, W = 2, 3, 16, 16
    embCh, t_dim, c_dim, num_classes = 32, 32, 16, 4

    key = jax.random.PRNGKey(0)
    k_par, k_x = jax.random.split(key)
    params = init_params(k_par, inCh, embCh, t_dim, c_dim, num_classes)

    x_t = jax.random.normal(k_x, (B, inCh, H, W), jnp.float32)
    t = 5                                    # scalar timestep (as in the torch forward)
    c = jnp.array([1, 2], dtype=jnp.int32)   # class labels
    nullCls = jnp.array([0, 1], dtype=jnp.int32)

    fwd = jax.jit(diff_model_forward)
    noise, v = fwd(params, x_t, t, c, nullCls)
    noise = jax.block_until_ready(noise)
    v = jax.block_until_ready(v)

    assert noise.shape == (B, inCh, H, W) and v.shape == (B, inCh, H, W)
    assert not bool(jnp.any(jnp.isnan(noise))) and not bool(jnp.any(jnp.isnan(v)))
    print("KERNEL_OK")
</pallas_src>

<mosaic_0001>
module attributes {stable_mosaic.version = 11 : i64} {
  func.func @_fused_convs_kernel(%arg0: i32, %arg1: memref<1x16x744xbf16, #tpu.memory_space<vmem>>, %arg2: memref<32x144xbf16, #tpu.memory_space<vmem>>, %arg3: memref<32x1xf32, #tpu.memory_space<vmem>>, %arg4: memref<1x32x1xf32, #tpu.memory_space<vmem>>, %arg5: memref<6x288xbf16, #tpu.memory_space<vmem>>, %arg6: memref<6x1xf32, #tpu.memory_space<vmem>>, %arg7: memref<1x690xf32, #tpu.memory_space<vmem>>, %arg8: memref<1x640xf32, #tpu.memory_space<vmem>>, %arg9: memref<1x6x640xbf16, #tpu.memory_space<vmem>>) attributes {dimension_semantics = [#tpu.dimension_semantics<parallel>], iteration_bounds = array<i64: 2>, scalar_prefetch = 0 : i64, scratch_operands = 0 : i64, tpu.core_type = #tpu.core_type<tc>, window_params = [{transform_indices = @transform_0, window_bounds = array<i64: 1, 16, 744>}, {pipeline_mode = #tpu.pipeline_mode<synchronous>, transform_indices = @transform_1, window_bounds = array<i64: 32, 144>}, {pipeline_mode = #tpu.pipeline_mode<synchronous>, transform_indices = @transform_2, window_bounds = array<i64: 32, 1>}, {transform_indices = @transform_3, window_bounds = array<i64: 1, 32, 1>}, {pipeline_mode = #tpu.pipeline_mode<synchronous>, transform_indices = @transform_4, window_bounds = array<i64: 6, 288>}, {pipeline_mode = #tpu.pipeline_mode<synchronous>, transform_indices = @transform_5, window_bounds = array<i64: 6, 1>}, {pipeline_mode = #tpu.pipeline_mode<synchronous>, transform_indices = @transform_6, window_bounds = array<i64: 1, 690>}, {pipeline_mode = #tpu.pipeline_mode<synchronous>, transform_indices = @transform_7, window_bounds = array<i64: 1, 640>}, {transform_indices = @transform_8, window_bounds = array<i64: 1, 6, 640>}]} {
    %c0 = arith.constant 0 : index
    %c0_0 = arith.constant 0 : index
    %c0_1 = arith.constant 0 : index
    %0 = vector.load %arg1[%c0, %c0_0, %c0_1] : memref<1x16x744xbf16, #tpu.memory_space<vmem>>, vector<1x16x744xbf16>
    %1 = vector.shape_cast %0 : vector<1x16x744xbf16> to vector<16x744xbf16>
    %2 = vector.extract_strided_slice %1 {offsets = [0, 0], sizes = [16, 690], strides = [1, 1]} : vector<16x744xbf16> to vector<16x690xbf16>
    %3 = vector.extract_strided_slice %1 {offsets = [0, 1], sizes = [16, 690], strides = [1, 1]} : vector<16x744xbf16> to vector<16x690xbf16>
    %4 = vector.extract_strided_slice %1 {offsets = [0, 2], sizes = [16, 690], strides = [1, 1]} : vector<16x744xbf16> to vector<16x690xbf16>
    %5 = vector.extract_strided_slice %1 {offsets = [0, 24], sizes = [16, 690], strides = [1, 1]} : vector<16x744xbf16> to vector<16x690xbf16>
    %6 = vector.extract_strided_slice %1 {offsets = [0, 25], sizes = [16, 690], strides = [1, 1]} : vector<16x744xbf16> to vector<16x690xbf16>
    %7 = vector.extract_strided_slice %1 {offsets = [0, 26], sizes = [16, 690], strides = [1, 1]} : vector<16x744xbf16> to vector<16x690xbf16>
    %8 = vector.extract_strided_slice %1 {offsets = [0, 48], sizes = [16, 690], strides = [1, 1]} : vector<16x744xbf16> to vector<16x690xbf16>
    %9 = vector.extract_strided_slice %1 {offsets = [0, 49], sizes = [16, 690], strides = [1, 1]} : vector<16x744xbf16> to vector<16x690xbf16>
    %10 = vector.extract_strided_slice %1 {offsets = [0, 50], sizes = [16, 690], strides = [1, 1]} : vector<16x744xbf16> to vector<16x690xbf16>
    %c0_2 = arith.constant 0 : index
    %c0_3 = arith.constant 0 : index
    %11 = vector.load %arg2[%c0_2, %c0_3] : memref<32x144xbf16, #tpu.memory_space<vmem>>, vector<32x144xbf16>
    %12 = tpu.concatenate %2, %3, %4, %5, %6, %7, %8, %9, %10 in 0 : vector<16x690xbf16>, vector<16x690xbf16>, vector<16x690xbf16>, vector<16x690xbf16>, vector<16x690xbf16>, vector<16x690xbf16>, vector<16x690xbf16>, vector<16x690xbf16>, vector<16x690xbf16> -> vector<144x690xbf16>
    %cst = arith.constant dense<0.000000e+00> : vector<32x690xf32>
    %13 = tpu.matmul %11, %12, %cst {dimension_numbers = #tpu.dot_dimension_numbers<[1], [0], [0], [1], [0, 0, 1, 1], [], []>} : vector<32x144xbf16>, vector<144x690xbf16>, vector<32x690xf32> -> vector<32x690xf32>
    %c0_4 = arith.constant 0 : index
    %c0_5 = arith.constant 0 : index
    %14 = vector.load %arg3[%c0_4, %c0_5] : memref<32x1xf32, #tpu.memory_space<vmem>>, vector<32x1xf32>
    %15 = vector.broadcast %14 : vector<32x1xf32> to vector<32x690xf32>
    %16 = arith.addf %13, %15 : vector<32x690xf32>
    %c0_6 = arith.constant 0 : index
    %c0_7 = arith.constant 0 : index
    %c0_8 = arith.constant 0 : index
    %17 = vector.load %arg4[%c0_6, %c0_7, %c0_8] : memref<1x32x1xf32, #tpu.memory_space<vmem>>, vector<1x32x1xf32>
    %18 = vector.shape_cast %17 : vector<1x32x1xf32> to vector<32x1xf32>
    %19 = vector.broadcast %18 : vector<32x1xf32> to vector<32x690xf32>
    %20 = arith.addf %16, %19 : vector<32x690xf32>
    %21 = arith.negf %20 : vector<32x690xf32>
    %22 = math.exp %21 : vector<32x690xf32>
    %cst_9 = arith.constant 1.000000e+00 : f32
    %23 = vector.broadcast %cst_9 : f32 to vector<32x690xf32>
    %24 = arith.addf %23, %22 : vector<32x690xf32>
    %25 = arith.divf %23, %24 : vector<32x690xf32>
    %26 = arith.mulf %20, %25 : vector<32x690xf32>
    %c0_10 = arith.constant 0 : index
    %c0_11 = arith.constant 0 : index
    %27 = vector.load %arg7[%c0_10, %c0_11] : memref<1x690xf32, #tpu.memory_space<vmem>>, vector<1x690xf32>
    %28 = vector.broadcast %27 : vector<1x690xf32> to vector<32x690xf32>
    %29 = arith.mulf %26, %28 : vector<32x690xf32>
    %30 = arith.truncf %29 : vector<32x690xf32> to vector<32x690xbf16>
    %31 = vector.extract_strided_slice %30 {offsets = [0, 0], sizes = [32, 640], strides = [1, 1]} : vector<32x690xbf16> to vector<32x640xbf16>
    %32 = vector.extract_strided_slice %30 {offsets = [0, 1], sizes = [32, 640], strides = [1, 1]} : vector<32x690xbf16> to vector<32x640xbf16>
    %33 = vector.extract_strided_slice %30 {offsets = [0, 2], sizes = [32, 640], strides = [1, 1]} : vector<32x690xbf16> to vector<32x640xbf16>
    %34 = vector.extract_strided_slice %30 {offsets = [0, 24], sizes = [32, 640], strides = [1, 1]} : vector<32x690xbf16> to vector<32x640xbf16>
    %35 = vector.extract_strided_slice %30 {offsets = [0, 25], sizes = [32, 640], strides = [1, 1]} : vector<32x690xbf16> to vector<32x640xbf16>
    %36 = vector.extract_strided_slice %30 {offsets = [0, 26], sizes = [32, 640], strides = [1, 1]} : vector<32x690xbf16> to vector<32x640xbf16>
    %37 = vector.extract_strided_slice %30 {offsets = [0, 48], sizes = [32, 640], strides = [1, 1]} : vector<32x690xbf16> to vector<32x640xbf16>
    %38 = vector.extract_strided_slice %30 {offsets = [0, 49], sizes = [32, 640], strides = [1, 1]} : vector<32x690xbf16> to vector<32x640xbf16>
    %39 = vector.extract_strided_slice %30 {offsets = [0, 50], sizes = [32, 640], strides = [1, 1]} : vector<32x690xbf16> to vector<32x640xbf16>
    %c0_12 = arith.constant 0 : index
    %c0_13 = arith.constant 0 : index
    %40 = vector.load %arg5[%c0_12, %c0_13] : memref<6x288xbf16, #tpu.memory_space<vmem>>, vector<6x288xbf16>
    %41 = tpu.concatenate %31, %32, %33, %34, %35, %36, %37, %38, %39 in 0 : vector<32x640xbf16>, vector<32x640xbf16>, vector<32x640xbf16>, vector<32x640xbf16>, vector<32x640xbf16>, vector<32x640xbf16>, vector<32x640xbf16>, vector<32x640xbf16>, vector<32x640xbf16> -> vector<288x640xbf16>
    %cst_14 = arith.constant dense<0.000000e+00> : vector<6x640xf32>
    %42 = tpu.matmul %40, %41, %cst_14 {dimension_numbers = #tpu.dot_dimension_numbers<[1], [0], [0], [1], [0, 0, 1, 1], [], []>} : vector<6x288xbf16>, vector<288x640xbf16>, vector<6x640xf32> -> vector<6x640xf32>
    %c0_15 = arith.constant 0 : index
    %c0_16 = arith.constant 0 : index
    %43 = vector.load %arg6[%c0_15, %c0_16] : memref<6x1xf32, #tpu.memory_space<vmem>>, vector<6x1xf32>
    %44 = vector.broadcast %43 : vector<6x1xf32> to vector<6x640xf32>
    %45 = arith.addf %42, %44 : vector<6x640xf32>
    %c0_17 = arith.constant 0 : index
    %c0_18 = arith.constant 0 : index
    %46 = vector.load %arg8[%c0_17, %c0_18] : memref<1x640xf32, #tpu.memory_space<vmem>>, vector<1x640xf32>
    %47 = vector.broadcast %46 : vector<1x640xf32> to vector<6x640xf32>
    %48 = arith.mulf %45, %47 : vector<6x640xf32>
    %49 = arith.truncf %48 : vector<6x640xf32> to vector<6x640xbf16>
    %c0_19 = arith.constant 0 : index
    %c0_20 = arith.constant 0 : index
    %c0_21 = arith.constant 0 : index
    %50 = vector.load %arg9[%c0_19, %c0_20, %c0_21] : memref<1x6x640xbf16, #tpu.memory_space<vmem>>, vector<1x6x640xbf16>
    %51 = vector.shape_cast %50 : vector<1x6x640xbf16> to vector<6x640xbf16>
    %52 = vector.shape_cast %49 : vector<6x640xbf16> to vector<1x6x640xbf16>
    tpu.vector_store %arg9[%c0_19, %c0_20, %c0_21], %52 {strides = array<i32>} : memref<1x6x640xbf16, #tpu.memory_space<vmem>>, vector<1x6x640xbf16>,
    return
  }
  func.func @transform_0(%arg0: i32) -> (i32, i32, i32) {
    %c0_i32 = arith.constant 0 : i32
    %c0_i32_0 = arith.constant 0 : i32
    %c0_i32_1 = arith.constant 0 : i32
    return %arg0, %c0_i32, %c0_i32_0 : i32, i32, i32
  }
  func.func @transform_1(%arg0: i32) -> (i32, i32) {
    %c0_i32 = arith.constant 0 : i32
    %c0_i32_0 = arith.constant 0 : i32
    %c0_i32_1 = arith.constant 0 : i32
    return %c0_i32, %c0_i32_0 : i32, i32
  }
  func.func @transform_2(%arg0: i32) -> (i32, i32) {
    %c0_i32 = arith.constant 0 : i32
    %c0_i32_0 = arith.constant 0 : i32
    %c0_i32_1 = arith.constant 0 : i32
    return %c0_i32, %c0_i32_0 : i32, i32
  }
  func.func @transform_3(%arg0: i32) -> (i32, i32, i32) {
    %c0_i32 = arith.constant 0 : i32
    %c0_i32_0 = arith.constant 0 : i32
    %c0_i32_1 = arith.constant 0 : i32
    return %arg0, %c0_i32, %c0_i32_0 : i32, i32, i32
  }
  func.func @transform_4(%arg0: i32) -> (i32, i32) {
    %c0_i32 = arith.constant 0 : i32
    %c0_i32_0 = arith.constant 0 : i32
    %c0_i32_1 = arith.constant 0 : i32
    return %c0_i32, %c0_i32_0 : i32, i32
  }
  func.func @transform_5(%arg0: i32) -> (i32, i32) {
    %c0_i32 = arith.constant 0 : i32
    %c0_i32_0 = arith.constant 0 : i32
    %c0_i32_1 = arith.constant 0 : i32
    return %c0_i32, %c0_i32_0 : i32, i32
  }
  func.func @transform_6(%arg0: i32) -> (i32, i32) {
    %c0_i32 = arith.constant 0 : i32
    %c0_i32_0 = arith.constant 0 : i32
    %c0_i32_1 = arith.constant 0 : i32
    return %c0_i32, %c0_i32_0 : i32, i32
  }
  func.func @transform_7(%arg0: i32) -> (i32, i32) {
    %c0_i32 = arith.constant 0 : i32
    %c0_i32_0 = arith.constant 0 : i32
    %c0_i32_1 = arith.constant 0 : i32
    return %c0_i32, %c0_i32_0 : i32, i32
  }
  func.func @transform_8(%arg0: i32) -> (i32, i32, i32) {
    %c0_i32 = arith.constant 0 : i32
    %c0_i32_0 = arith.constant 0 : i32
    %c0_i32_1 = arith.constant 0 : i32
    return %arg0, %c0_i32, %c0_i32_0 : i32, i32, i32
  }
}

module attributes {stable_mosaic.version = 11 : i64} {
  func.func @_convnext_head_kernel(%arg0: i32, %arg1: i32, %arg2: memref<1x1x3x640xbf16, #tpu.memory_space<vmem>>, %arg3: memref<1x3x49xf32, #tpu.memory_space<vmem>>, %arg4: memref<1x3x1xf32, #tpu.memory_space<vmem>>, %arg5: memref<1x3x1xf32, #tpu.memory_space<vmem>>, %arg6: memref<1x3x1xf32, #tpu.memory_space<vmem>>, %arg7: memref<1x12x3xbf16, #tpu.memory_space<vmem>>, %arg8: memref<1x12x1xf32, #tpu.memory_space<vmem>>, %arg9: memref<1x3x12xbf16, #tpu.memory_space<vmem>>, %arg10: memref<1x3x1xf32, #tpu.memory_space<vmem>>, %arg11: memref<1x1x3x384xf32, #tpu.memory_space<vmem>>) attributes {dimension_semantics = [#tpu.dimension_semantics<parallel>, #tpu.dimension_semantics<parallel>], iteration_bounds = array<i64: 2, 2>, scalar_prefetch = 0 : i64, scratch_operands = 0 : i64, tpu.core_type = #tpu.core_type<tc>, window_params = [{transform_indices = @transform_0, window_bounds = array<i64: 1, 1, 3, 640>}, {transform_indices = @transform_1, window_bounds = array<i64: 1, 3, 49>}, {transform_indices = @transform_2, window_bounds = array<i64: 1, 3, 1>}, {transform_indices = @transform_3, window_bounds = array<i64: 1, 3, 1>}, {transform_indices = @transform_4, window_bounds = array<i64: 1, 3, 1>}, {transform_indices = @transform_5, window_bounds = array<i64: 1, 12, 3>}, {transform_indices = @transform_6, window_bounds = array<i64: 1, 12, 1>}, {transform_indices = @transform_7, window_bounds = array<i64: 1, 3, 12>}, {transform_indices = @transform_8, window_bounds = array<i64: 1, 3, 1>}, {transform_indices = @transform_9, window_bounds = array<i64: 1, 1, 3, 384>}]} {
    %c0 = arith.constant 0 : index
    %c0_0 = arith.constant 0 : index
    %c0_1 = arith.constant 0 : index
    %c0_2 = arith.constant 0 : index
    %0 = vector.load %arg2[%c0, %c0_0, %c0_1, %c0_2] : memref<1x1x3x640xbf16, #tpu.memory_space<vmem>>, vector<1x1x3x640xbf16>
    %1 = vector.shape_cast %0 : vector<1x1x3x640xbf16> to vector<3x640xbf16>
    %2 = arith.extf %1 : vector<3x640xbf16> to vector<3x640xf32>
    %c0_3 = arith.constant 0 : index
    %c0_4 = arith.constant 0 : index
    %c0_5 = arith.constant 0 : index
    %3 = vector.load %arg3[%c0_3, %c0_4, %c0_5] : memref<1x3x49xf32, #tpu.memory_space<vmem>>, vector<1x3x49xf32>
    %4 = vector.shape_cast %3 : vector<1x3x49xf32> to vector<3x49xf32>
    %cst = arith.constant 0.000000e+00 : f32
    %5 = vector.broadcast %cst : f32 to vector<3x384xf32>
    %cst_6 = arith.constant 0.000000e+00 : f32
    %6 = vector.broadcast %cst_6 : f32 to vector<3x384xf32>
    %cst_7 = arith.constant 0.000000e+00 : f32
    %7 = vector.broadcast %cst_7 : f32 to vector<3x384xf32>
    %cst_8 = arith.constant 0.000000e+00 : f32
    %8 = vector.broadcast %cst_8 : f32 to vector<3x384xf32>
    %9 = vector.extract_strided_slice %2 {offsets = [0, 0], sizes = [3, 384], strides = [1, 1]} : vector<3x640xf32> to vector<3x384xf32>
    %10 = vector.extract_strided_slice %4 {offsets = [0, 0], sizes = [3, 1], strides = [1, 1]} : vector<3x49xf32> to vector<3x1xf32>
    %11 = vector.broadcast %10 : vector<3x1xf32> to vector<3x384xf32>
    %12 = arith.mulf %9, %11 : vector<3x384xf32>
    %13 = arith.addf %5, %12 : vector<3x384xf32>
    %14 = vector.extract_strided_slice %2 {offsets = [0, 1], sizes = [3, 384], strides = [1, 1]} : vector<3x640xf32> to vector<3x384xf32>
    %15 = vector.extract_strided_slice %4 {offsets = [0, 1], sizes = [3, 1], strides = [1, 1]} : vector<3x49xf32> to vector<3x1xf32>
    %16 = vector.broadcast %15 : vector<3x1xf32> to vector<3x384xf32>
    %17 = arith.mulf %14, %16 : vector<3x384xf32>
    %18 = arith.addf %6, %17 : vector<3x384xf32>
    %19 = vector.extract_strided_slice %2 {offsets = [0, 2], sizes = [3, 384], strides = [1, 1]} : vector<3x640xf32> to vector<3x384xf32>
    %20 = vector.extract_strided_slice %4 {offsets = [0, 2], sizes = [3, 1], strides = [1, 1]} : vector<3x49xf32> to vector<3x1xf32>
    %21 = vector.broadcast %20 : vector<3x1xf32> to vector<3x384xf32>
    %22 = arith.mulf %19, %21 : vector<3x384xf32>
    %23 = arith.addf %7, %22 : vector<3x384xf32>
    %24 = vector.extract_strided_slice %2 {offsets = [0, 3], sizes = [3, 384], strides = [1, 1]} : vector<3x640xf32> to vector<3x384xf32>
    %25 = vector.extract_strided_slice %4 {offsets = [0, 3], sizes = [3, 1], strides = [1, 1]} : vector<3x49xf32> to vector<3x1xf32>
    %26 = vector.broadcast %25 : vector<3x1xf32> to vector<3x384xf32>
    %27 = arith.mulf %24, %26 : vector<3x384xf32>
    %28 = arith.addf %8, %27 : vector<3x384xf32>
    %29 = vector.extract_strided_slice %2 {offsets = [0, 4], sizes = [3, 384], strides = [1, 1]} : vector<3x640xf32> to vector<3x384xf32>
    %30 = vector.extract_strided_slice %4 {offsets = [0, 4], sizes = [3, 1], strides = [1, 1]} : vector<3x49xf32> to vector<3x1xf32>
    %31 = vector.broadcast %30 : vector<3x1xf32> to vector<3x384xf32>
    %32 = arith.mulf %29, %31 : vector<3x384xf32>
    %33 = arith.addf %13, %32 : vector<3x384xf32>
    %34 = vector.extract_strided_slice %2 {offsets = [0, 5], sizes = [3, 384], strides = [1, 1]} : vector<3x640xf32> to vector<3x384xf32>
    %35 = vector.extract_strided_slice %4 {offsets = [0, 5], sizes = [3, 1], strides = [1, 1]} : vector<3x49xf32> to vector<3x1xf32>
    %36 = vector.broadcast %35 : vector<3x1xf32> to vector<3x384xf32>
    %37 = arith.mulf %34, %36 : vector<3x384xf32>
    %38 = arith.addf %18, %37 : vector<3x384xf32>
    %39 = vector.extract_strided_slice %2 {offsets = [0, 6], sizes = [3, 384], strides = [1, 1]} : vector<3x640xf32> to vector<3x384xf32>
    %40 = vector.extract_strided_slice %4 {offsets = [0, 6], sizes = [3, 1], strides = [1, 1]} : vector<3x49xf32> to vector<3x1xf32>
    %41 = vector.broadcast %40 : vector<3x1xf32> to vector<3x384xf32>
    %42 = arith.mulf %39, %41 : vector<3x384xf32>
    %43 = arith.addf %23, %42 : vector<3x384xf32>
    %44 = vector.extract_strided_slice %2 {offsets = [0, 24], sizes = [3, 384], strides = [1, 1]} : vector<3x640xf32> to vector<3x384xf32>
    %45 = vector.extract_strided_slice %4 {offsets = [0, 7], sizes = [3, 1], strides = [1, 1]} : vector<3x49xf32> to vector<3x1xf32>
    %46 = vector.broadcast %45 : vector<3x1xf32> to vector<3x384xf32>
    %47 = arith.mulf %44, %46 : vector<3x384xf32>
    %48 = arith.addf %28, %47 : vector<3x384xf32>
    %49 = vector.extract_strided_slice %2 {offsets = [0, 25], sizes = [3, 384], strides = [1, 1]} : vector<3x640xf32> to vector<3x384xf32>
    %50 = vector.extract_strided_slice %4 {offsets = [0, 8], sizes = [3, 1], strides = [1, 1]} : vector<3x49xf32> to vector<3x1xf32>
    %51 = vector.broadcast %50 : vector<3x1xf32> to vector<3x384xf32>
    %52 = arith.mulf %49, %51 : vector<3x384xf32>
    %53 = arith.addf %33, %52 : vector<3x384xf32>
    %54 = vector.extract_strided_slice %2 {offsets = [0, 26], sizes = [3, 384], strides = [1, 1]} : vector<3x640xf32> to vector<3x384xf32>
    %55 = vector.extract_strided_slice %4 {offsets = [0, 9], sizes = [3, 1], strides = [1, 1]} : vector<3x49xf32> to vector<3x1xf32>
    %56 = vector.broadcast %55 : vector<3x1xf32> to vector<3x384xf32>
    %57 = arith.mulf %54, %56 : vector<3x384xf32>
    %58 = arith.addf %38, %57 : vector<3x384xf32>
    %59 = vector.extract_strided_slice %2 {offsets = [0, 27], sizes = [3, 384], strides = [1, 1]} : vector<3x640xf32> to vector<3x384xf32>
    %60 = vector.extract_strided_slice %4 {offsets = [0, 10], sizes = [3, 1], strides = [1, 1]} : vector<3x49xf32> to vector<3x1xf32>
    %61 = vector.broadcast %60 : vector<3x1xf32> to vector<3x384xf32>
    %62 = arith.mulf %59, %61 : vector<3x384xf32>
    %63 = arith.addf %43, %62 : vector<3x384xf32>
    %64 = vector.extract_strided_slice %2 {offsets = [0, 28], sizes = [3, 384], strides = [1, 1]} : vector<3x640xf32> to vector<3x384xf32>
    %65 = vector.extract_strided_slice %4 {offsets = [0, 11], sizes = [3, 1], strides = [1, 1]} : vector<3x49xf32> to vector<3x1xf32>
    %66 = vector.broadcast %65 : vector<3x1xf32> to vector<3x384xf32>
    %67 = arith.mulf %64, %66 : vector<3x384xf32>
    %68 = arith.addf %48, %67 : vector<3x384xf32>
    %69 = vector.extract_strided_slice %2 {offsets = [0, 29], sizes = [3, 384], strides = [1, 1]} : vector<3x640xf32> to vector<3x384xf32>
    %70 = vector.extract_strided_slice %4 {offsets = [0, 12], sizes = [3, 1], strides = [1, 1]} : vector<3x49xf32> to vector<3x1xf32>
    %71 = vector.broadcast %70 : vector<3x1xf32> to vector<3x384xf32>
    %72 = arith.mulf %69, %71 : vector<3x384xf32>
    %73 = arith.addf %53, %72 : vector<3x384xf32>
    %74 = vector.extract_strided_slice %2 {offsets = [0, 30], sizes = [3, 384], strides = [1, 1]} : vector<3x640xf32> to vector<3x384xf32>
    %75 = vector.extract_strided_slice %4 {offsets = [0, 13], sizes = [3, 1], strides = [1, 1]} : vector<3x49xf32> to vector<3x1xf32>
    %76 = vector.broadcast %75 : vector<3x1xf32> to vector<3x384xf32>
    %77 = arith.mulf %74, %76 : vector<3x384xf32>
    %78 = arith.addf %58, %77 : vector<3x384xf32>
    %79 = vector.extract_strided_slice %2 {offsets = [0, 48], sizes = [3, 384], strides = [1, 1]} : vector<3x640xf32> to vector<3x384xf32>
    %80 = vector.extract_strided_slice %4 {offsets = [0, 14], sizes = [3, 1], strides = [1, 1]} : vector<3x49xf32> to vector<3x1xf32>
    %81 = vector.broadcast %80 : vector<3x1xf32> to vector<3x384xf32>
    %82 = arith.mulf %79, %81 : vector<3x384xf32>
    %83 = arith.addf %63, %82 : vector<3x384xf32>
    %84 = vector.extract_strided_slice %2 {offsets = [0, 49], sizes = [3, 384], strides = [1, 1]} : vector<3x640xf32> to vector<3x384xf32>
    %85 = vector.extract_strided_slice %4 {offsets = [0, 15], sizes = [3, 1], strides = [1, 1]} : vector<3x49xf32> to vector<3x1xf32>
    %86 = vector.broadcast %85 : vector<3x1xf32> to vector<3x384xf32>
    %87 = arith.mulf %84, %86 : vector<3x384xf32>
    %88 = arith.addf %68, %87 : vector<3x384xf32>
    %89 = vector.extract_strided_slice %2 {offsets = [0, 50], sizes = [3, 384], strides = [1, 1]} : vector<3x640xf32> to vector<3x384xf32>
    %90 = vector.extract_strided_slice %4 {offsets = [0, 16], sizes = [3, 1], strides = [1, 1]} : vector<3x49xf32> to vector<3x1xf32>
    %91 = vector.broadcast %90 : vector<3x1xf32> to vector<3x384xf32>
    %92 = arith.mulf %89, %91 : vector<3x384xf32>
    %93 = arith.addf %73, %92 : vector<3x384xf32>
    %94 = vector.extract_strided_slice %2 {offsets = [0, 51], sizes = [3, 384], strides = [1, 1]} : vector<3x640xf32> to vector<3x384xf32>
    %95 = vector.extract_strided_slice %4 {offsets = [0, 17], sizes = [3, 1], strides = [1, 1]} : vector<3x49xf32> to vector<3x1xf32>
    %96 = vector.broadcast %95 : vector<3x1xf32> to vector<3x384xf32>
    %97 = arith.mulf %94, %96 : vector<3x384xf32>
    %98 = arith.addf %78, %97 : vector<3x384xf32>
    %99 = vector.extract_strided_slice %2 {offsets = [0, 52], sizes = [3, 384], strides = [1, 1]} : vector<3x640xf32> to vector<3x384xf32>
    %100 = vector.extract_strided_slice %4 {offsets = [0, 18], sizes = [3, 1], strides = [1, 1]} : vector<3x49xf32> to vector<3x1xf32>
    %101 = vector.broadcast %100 : vector<3x1xf32> to vector<3x384xf32>
    %102 = arith.mulf %99, %101 : vector<3x384xf32>
    %103 = arith.addf %83, %102 : vector<3x384xf32>
    %104 = vector.extract_strided_slice %2 {offsets = [0, 53], sizes = [3, 384], strides = [1, 1]} : vector<3x640xf32> to vector<3x384xf32>
    %105 = vector.extract_strided_slice %4 {offsets = [0, 19], sizes = [3, 1], strides = [1, 1]} : vector<3x49xf32> to vector<3x1xf32>
    %106 = vector.broadcast %105 : vector<3x1xf32> to vector<3x384xf32>
    %107 = arith.mulf %104, %106 : vector<3x384xf32>
    %108 = arith.addf %88, %107 : vector<3x384xf32>
    %109 = vector.extract_strided_slice %2 {offsets = [0, 54], sizes = [3, 384], strides = [1, 1]} : vector<3x640xf32> to vector<3x384xf32>
    %110 = vector.extract_strided_slice %4 {offsets = [0, 20], sizes = [3, 1], strides = [1, 1]} : vector<3x49xf32> to vector<3x1xf32>
    %111 = vector.broadcast %110 : vector<3x1xf32> to vector<3x384xf32>
    %112 = arith.mulf %109, %111 : vector<3x384xf32>
    %113 = arith.addf %93, %112 : vector<3x384xf32>
    %114 = vector.extract_strided_slice %2 {offsets = [0, 72], sizes = [3, 384], strides = [1, 1]} : vector<3x640xf32> to vector<3x384xf32>
    %115 = vector.extract_strided_slice %4 {offsets = [0, 21], sizes = [3, 1], strides = [1, 1]} : vector<3x49xf32> to vector<3x1xf32>
    %116 = vector.broadcast %115 : vector<3x1xf32> to vector<3x384xf32>
    %117 = arith.mulf %114, %116 : vector<3x384xf32>
    %118 = arith.addf %98, %117 : vector<3x384xf32>
    %119 = vector.extract_strided_slice %2 {offsets = [0, 73], sizes = [3, 384], strides = [1, 1]} : vector<3x640xf32> to vector<3x384xf32>
    %120 = vector.extract_strided_slice %4 {offsets = [0, 22], sizes = [3, 1], strides = [1, 1]} : vector<3x49xf32> to vector<3x1xf32>
    %121 = vector.broadcast %120 : vector<3x1xf32> to vector<3x384xf32>
    %122 = arith.mulf %119, %121 : vector<3x384xf32>
    %123 = arith.addf %103, %122 : vector<3x384xf32>
    %124 = vector.extract_strided_slice %2 {offsets = [0, 74], sizes = [3, 384], strides = [1, 1]} : vector<3x640xf32> to vector<3x384xf32>
    %125 = vector.extract_strided_slice %4 {offsets = [0, 23], sizes = [3, 1], strides = [1, 1]} : vector<3x49xf32> to vector<3x1xf32>
    %126 = vector.broadcast %125 : vector<3x1xf32> to vector<3x384xf32>
    %127 = arith.mulf %124, %126 : vector<3x384xf32>
    %128 = arith.addf %108, %127 : vector<3x384xf32>
    %129 = vector.extract_strided_slice %2 {offsets = [0, 75], sizes = [3, 384], strides = [1, 1]} : vector<3x640xf32> to vector<3x384xf32>
    %130 = vector.extract_strided_slice %4 {offsets = [0, 24], sizes = [3, 1], strides = [1, 1]} : vector<3x49xf32> to vector<3x1xf32>
    %131 = vector.broadcast %130 : vector<3x1xf32> to vector<3x384xf32>
    %132 = arith.mulf %129, %131 : vector<3x384xf32>
    %133 = arith.addf %113, %132 : vector<3x384xf32>
    %134 = vector.extract_strided_slice %2 {offsets = [0, 76], sizes = [3, 384], strides = [1, 1]} : vector<3x640xf32> to vector<3x384xf32>
    %135 = vector.extract_strided_slice %4 {offsets = [0, 25], sizes = [3, 1], strides = [1, 1]} : vector<3x49xf32> to vector<3x1xf32>
    %136 = vector.broadcast %135 : vector<3x1xf32> to vector<3x384xf32>
    %137 = arith.mulf %134, %136 : vector<3x384xf32>
    %138 = arith.addf %118, %137 : vector<3x384xf32>
    %139 = vector.extract_strided_slice %2 {offsets = [0, 77], sizes = [3, 384], strides = [1, 1]} : vector<3x640xf32> to vector<3x384xf32>
    %140 = vector.extract_strided_slice %4 {offsets = [0, 26], sizes = [3, 1], strides = [1, 1]} : vector<3x49xf32> to vector<3x1xf32>
    %141 = vector.broadcast %140 : vector<3x1xf32> to vector<3x384xf32>
    %142 = arith.mulf %139, %141 : vector<3x384xf32>
    %143 = arith.addf %123, %142 : vector<3x384xf32>
    %144 = vector.extract_strided_slice %2 {offsets = [0, 78], sizes = [3, 384], strides = [1, 1]} : vector<3x640xf32> to vector<3x384xf32>
    %145 = vector.extract_strided_slice %4 {offsets = [0, 27], sizes = [3, 1], strides = [1, 1]} : vector<3x49xf32> to vector<3x1xf32>
    %146 = vector.broadcast %145 : vector<3x1xf32> to vector<3x384xf32>
    %147 = arith.mulf %144, %146 : vector<3x384xf32>
    %148 = arith.addf %128, %147 : vector<3x384xf32>
    %149 = vector.extract_strided_slice %2 {offsets = [0, 96], sizes = [3, 384], strides = [1, 1]} : vector<3x640xf32> to vector<3x384xf32>
    %150 = vector.extract_strided_slice %4 {offsets = [0, 28], sizes = [3, 1], strides = [1, 1]} : vector<3x49xf32> to vector<3x1xf32>
    %151 = vector.broadcast %150 : vector<3x1xf32> to vector<3x384xf32>
    %152 = arith.mulf %149, %151 : vector<3x384xf32>
    %153 = arith.addf %133, %152 : vector<3x384xf32>
    %154 = vector.extract_strided_slice %2 {offsets = [0, 97], sizes = [3, 384], strides = [1, 1]} : vector<3x640xf32> to vector<3x384xf32>
    %155 = vector.extract_strided_slice %4 {offsets = [0, 29], sizes = [3, 1], strides = [1, 1]} : vector<3x49xf32> to vector<3x1xf32>
    %156 = vector.broadcast %155 : vector<3x1xf32> to vector<3x384xf32>
    %157 = arith.mulf %154, %156 : vector<3x384xf32>
    %158 = arith.addf %138, %157 : vector<3x384xf32>
    %159 = vector.extract_strided_slice %2 {offsets = [0, 98], sizes = [3, 384], strides = [1, 1]} : vector<3x640xf32> to vector<3x384xf32>
    %160 = vector.extract_strided_slice %4 {offsets = [0, 30], sizes = [3, 1], strides = [1, 1]} : vector<3x49xf32> to vector<3x1xf32>
    %161 = vector.broadcast %160 : vector<3x1xf32> to vector<3x384xf32>
    %162 = arith.mulf %159, %161 : vector<3x384xf32>
    %163 = arith.addf %143, %162 : vector<3x384xf32>
    %164 = vector.extract_strided_slice %2 {offsets = [0, 99], sizes = [3, 384], strides = [1, 1]} : vector<3x640xf32> to vector<3x384xf32>
    %165 = vector.extract_strided_slice %4 {offsets = [0, 31], sizes = [3, 1], strides = [1, 1]} : vector<3x49xf32> to vector<3x1xf32>
    %166 = vector.broadcast %165 : vector<3x1xf32> to vector<3x384xf32>
    %167 = arith.mulf %164, %166 : vector<3x384xf32>
    %168 = arith.addf %148, %167 : vector<3x384xf32>
    %169 = vector.extract_strided_slice %2 {offsets = [0, 100], sizes = [3, 384], strides = [1, 1]} : vector<3x640xf32> to vector<3x384xf32>
    %170 = vector.extract_strided_slice %4 {offsets = [0, 32], sizes = [3, 1], strides = [1, 1]} : vector<3x49xf32> to vector<3x1xf32>
    %171 = vector.broadcast %170 : vector<3x1xf32> to vector<3x384xf32>
    %172 = arith.mulf %169, %171 : vector<3x384xf32>
    %173 = arith.addf %153, %172 : vector<3x384xf32>
    %174 = vector.extract_strided_slice %2 {offsets = [0, 101], sizes = [3, 384], strides = [1, 1]} : vector<3x640xf32> to vector<3x384xf32>
    %175 = vector.extract_strided_slice %4 {offsets = [0, 33], sizes = [3, 1], strides = [1, 1]} : vector<3x49xf32> to vector<3x1xf32>
    %176 = vector.broadcast %175 : vector<3x1xf32> to vector<3x384xf32>
    %177 = arith.mulf %174, %176 : vector<3x384xf32>
    %178 = arith.addf %158, %177 : vector<3x384xf32>
    %179 = vector.extract_strided_slice %2 {offsets = [0, 102], sizes = [3, 384], strides = [1, 1]} : vector<3x640xf32> to vector<3x384xf32>
    %180 = vector.extract_strided_slice %4 {offsets = [0, 34], sizes = [3, 1], strides = [1, 1]} : vector<3x49xf32> to vector<3x1xf32>
    %181 = vector.broadcast %180 : vector<3x1xf32> to vector<3x384xf32>
    %182 = arith.mulf %179, %181 : vector<3x384xf32>
    %183 = arith.addf %163, %182 : vector<3x384xf32>
    %184 = vector.extract_strided_slice %2 {offsets = [0, 120], sizes = [3, 384], strides = [1, 1]} : vector<3x640xf32> to vector<3x384xf32>
    %185 = vector.extract_strided_slice %4 {offsets = [0, 35], sizes = [3, 1], strides = [1, 1]} : vector<3x49xf32> to vector<3x1xf32>
    %186 = vector.broadcast %185 : vector<3x1xf32> to vector<3x384xf32>
    %187 = arith.mulf %184, %186 : vector<3x384xf32>
    %188 = arith.addf %168, %187 : vector<3x384xf32>
    %189 = vector.extract_strided_slice %2 {offsets = [0, 121], sizes = [3, 384], strides = [1, 1]} : vector<3x640xf32> to vector<3x384xf32>
    %190 = vector.extract_strided_slice %4 {offsets = [0, 36], sizes = [3, 1], strides = [1, 1]} : vector<3x49xf32> to vector<3x1xf32>
    %191 = vector.broadcast %190 : vector<3x1xf32> to vector<3x384xf32>
    %192 = arith.mulf %189, %191 : vector<3x384xf32>
    %193 = arith.addf %173, %192 : vector<3x384xf32>
    %194 = vector.extract_strided_slice %2 {offsets = [0, 122], sizes = [3, 384], strides = [1, 1]} : vector<3x640xf32> to vector<3x384xf32>
    %195 = vector.extract_strided_slice %4 {offsets = [0, 37], sizes = [3, 1], strides = [1, 1]} : vector<3x49xf32> to vector<3x1xf32>
    %196 = vector.broadcast %195 : vector<3x1xf32> to vector<3x384xf32>
    %197 = arith.mulf %194, %196 : vector<3x384xf32>
    %198 = arith.addf %178, %197 : vector<3x384xf32>
    %199 = vector.extract_strided_slice %2 {offsets = [0, 123], sizes = [3, 384], strides = [1, 1]} : vector<3x640xf32> to vector<3x384xf32>
    %200 = vector.extract_strided_slice %4 {offsets = [0, 38], sizes = [3, 1], strides = [1, 1]} : vector<3x49xf32> to vector<3x1xf32>
    %201 = vector.broadcast %200 : vector<3x1xf32> to vector<3x384xf32>
    %202 = arith.mulf %199, %201 : vector<3x384xf32>
    %203 = arith.addf %183, %202 : vector<3x384xf32>
    %204 = vector.extract_strided_slice %2 {offsets = [0, 124], sizes = [3, 384], strides = [1, 1]} : vector<3x640xf32> to vector<3x384xf32>
    %205 = vector.extract_strided_slice %4 {offsets = [0, 39], sizes = [3, 1], strides = [1, 1]} : vector<3x49xf32> to vector<3x1xf32>
    %206 = vector.broadcast %205 : vector<3x1xf32> to vector<3x384xf32>
    %207 = arith.mulf %204, %206 : vector<3x384xf32>
    %208 = arith.addf %188, %207 : vector<3x384xf32>
    %209 = vector.extract_strided_slice %2 {offsets = [0, 125], sizes = [3, 384], strides = [1, 1]} : vector<3x640xf32> to vector<3x384xf32>
    %210 = vector.extract_strided_slice %4 {offsets = [0, 40], sizes = [3, 1], strides = [1, 1]} : vector<3x49xf32> to vector<3x1xf32>
    %211 = vector.broadcast %210 : vector<3x1xf32> to vector<3x384xf32>
    %212 = arith.mulf %209, %211 : vector<3x384xf32>
    %213 = arith.addf %193, %212 : vector<3x384xf32>
    %214 = vector.extract_strided_slice %2 {offsets = [0, 126], sizes = [3, 384], strides = [1, 1]} : vector<3x640xf32> to vector<3x384xf32>
    %215 = vector.extract_strided_slice %4 {offsets = [0, 41], sizes = [3, 1], strides = [1, 1]} : vector<3x49xf32> to vector<3x1xf32>
    %216 = vector.broadcast %215 : vector<3x1xf32> to vector<3x384xf32>
    %217 = arith.mulf %214, %216 : vector<3x384xf32>
    %218 = arith.addf %198, %217 : vector<3x384xf32>
    %219 = vector.extract_strided_slice %2 {offsets = [0, 144], sizes = [3, 384], strides = [1, 1]} : vector<3x640xf32> to vector<3x384xf32>
    %220 = vector.extract_strided_slice %4 {offsets = [0, 42], sizes = [3, 1], strides = [1, 1]} : vector<3x49xf32> to vector<3x1xf32>
    %221 = vector.broadcast %220 : vector<3x1xf32> to vector<3x384xf32>
    %222 = arith.mulf %219, %221 : vector<3x384xf32>
    %223 = arith.addf %203, %222 : vector<3x384xf32>
    %224 = vector.extract_strided_slice %2 {offsets = [0, 145], sizes = [3, 384], strides = [1, 1]} : vector<3x640xf32> to vector<3x384xf32>
    %225 = vector.extract_strided_slice %4 {offsets = [0, 43], sizes = [3, 1], strides = [1, 1]} : vector<3x49xf32> to vector<3x1xf32>
    %226 = vector.broadcast %225 : vector<3x1xf32> to vector<3x384xf32>
    %227 = arith.mulf %224, %226 : vector<3x384xf32>
    %228 = arith.addf %208, %227 : vector<3x384xf32>
    %229 = vector.extract_strided_slice %2 {offsets = [0, 146], sizes = [3, 384], strides = [1, 1]} : vector<3x640xf32> to vector<3x384xf32>
    %230 = vector.extract_strided_slice %4 {offsets = [0, 44], sizes = [3, 1], strides = [1, 1]} : vector<3x49xf32> to vector<3x1xf32>
    %231 = vector.broadcast %230 : vector<3x1xf32> to vector<3x384xf32>
    %232 = arith.mulf %229, %231 : vector<3x384xf32>
    %233 = arith.addf %213, %232 : vector<3x384xf32>
    %234 = vector.extract_strided_slice %2 {offsets = [0, 147], sizes = [3, 384], strides = [1, 1]} : vector<3x640xf32> to vector<3x384xf32>
    %235 = vector.extract_strided_slice %4 {offsets = [0, 45], sizes = [3, 1], strides = [1, 1]} : vector<3x49xf32> to vector<3x1xf32>
    %236 = vector.broadcast %235 : vector<3x1xf32> to vector<3x384xf32>
    %237 = arith.mulf %234, %236 : vector<3x384xf32>
    %238 = arith.addf %218, %237 : vector<3x384xf32>
    %239 = vector.extract_strided_slice %2 {offsets = [0, 148], sizes = [3, 384], strides = [1, 1]} : vector<3x640xf32> to vector<3x384xf32>
    %240 = vector.extract_strided_slice %4 {offsets = [0, 46], sizes = [3, 1], strides = [1, 1]} : vector<3x49xf32> to vector<3x1xf32>
    %241 = vector.broadcast %240 : vector<3x1xf32> to vector<3x384xf32>
    %242 = arith.mulf %239, %241 : vector<3x384xf32>
    %243 = arith.addf %223, %242 : vector<3x384xf32>
    %244 = vector.extract_strided_slice %2 {offsets = [0, 149], sizes = [3, 384], strides = [1, 1]} : vector<3x640xf32> to vector<3x384xf32>
    %245 = vector.extract_strided_slice %4 {offsets = [0, 47], sizes = [3, 1], strides = [1, 1]} : vector<3x49xf32> to vector<3x1xf32>
    %246 = vector.broadcast %245 : vector<3x1xf32> to vector<3x384xf32>
    %247 = arith.mulf %244, %246 : vector<3x384xf32>
    %248 = arith.addf %228, %247 : vector<3x384xf32>
    %249 = vector.extract_strided_slice %2 {offsets = [0, 150], sizes = [3, 384], strides = [1, 1]} : vector<3x640xf32> to vector<3x384xf32>
    %250 = vector.extract_strided_slice %4 {offsets = [0, 48], sizes = [3, 1], strides = [1, 1]} : vector<3x49xf32> to vector<3x1xf32>
    %251 = vector.broadcast %250 : vector<3x1xf32> to vector<3x384xf32>
    %252 = arith.mulf %249, %251 : vector<3x384xf32>
    %253 = arith.addf %233, %252 : vector<3x384xf32>
    %254 = arith.addf %253, %238 : vector<3x384xf32>
    %255 = arith.addf %243, %248 : vector<3x384xf32>
    %256 = arith.addf %254, %255 : vector<3x384xf32>
    %c0_9 = arith.constant 0 : index
    %c0_10 = arith.constant 0 : index
    %c0_11 = arith.constant 0 : index
    %257 = vector.load %arg4[%c0_9, %c0_10, %c0_11] : memref<1x3x1xf32, #tpu.memory_space<vmem>>, vector<1x3x1xf32>
    %258 = vector.shape_cast %257 : vector<1x3x1xf32> to vector<3x1xf32>
    %259 = vector.broadcast %258 : vector<3x1xf32> to vector<3x384xf32>
    %260 = arith.addf %256, %259 : vector<3x384xf32>
    %cst_12 = arith.constant dense<0.000000e+00> : vector<384xf32>
    %261 = vector.multi_reduction <add>, %260, %cst_12 [0] : vector<3x384xf32> to vector<384xf32>
    %262 = vector.shape_cast %261 : vector<384xf32> to vector<1x384xf32>
    %cst_13 = arith.constant 3.000000e+00 : f32
    %263 = vector.broadcast %cst_13 : f32 to vector<1x384xf32>
    %264 = arith.divf %262, %263 : vector<1x384xf32>
    %265 = vector.broadcast %264 : vector<1x384xf32> to vector<3x384xf32>
    %266 = arith.subf %260, %265 : vector<3x384xf32>
    %267 = arith.mulf %266, %266 : vector<3x384xf32>
    %cst_14 = arith.constant dense<0.000000e+00> : vector<384xf32>
    %268 = vector.multi_reduction <add>, %267, %cst_14 [0] : vector<3x384xf32> to vector<384xf32>
    %269 = vector.shape_cast %268 : vector<384xf32> to vector<1x384xf32>
    %cst_15 = arith.constant 3.000000e+00 : f32
    %270 = vector.broadcast %cst_15 : f32 to vector<1x384xf32>
    %271 = arith.divf %269, %270 : vector<1x384xf32>
    %272 = vector.broadcast %264 : vector<1x384xf32> to vector<3x384xf32>
    %273 = arith.subf %260, %272 : vector<3x384xf32>
    %cst_16 = arith.constant 9.99999997E-7 : f32
    %274 = vector.broadcast %cst_16 : f32 to vector<1x384xf32>
    %275 = arith.addf %271, %274 : vector<1x384xf32>
    %276 = math.rsqrt %275 : vector<1x384xf32>
    %277 = vector.broadcast %276 : vector<1x384xf32> to vector<3x384xf32>
    %278 = arith.mulf %273, %277 : vector<3x384xf32>
    %c0_17 = arith.constant 0 : index
    %c0_18 = arith.constant 0 : index
    %c0_19 = arith.constant 0 : index
    %279 = vector.load %arg5[%c0_17, %c0_18, %c0_19] : memref<1x3x1xf32, #tpu.memory_space<vmem>>, vector<1x3x1xf32>
    %280 = vector.shape_cast %279 : vector<1x3x1xf32> to vector<3x1xf32>
    %281 = vector.broadcast %280 : vector<3x1xf32> to vector<3x384xf32>
    %282 = arith.mulf %278, %281 : vector<3x384xf32>
    %c0_20 = arith.constant 0 : index
    %c0_21 = arith.constant 0 : index
    %c0_22 = arith.constant 0 : index
    %283 = vector.load %arg6[%c0_20, %c0_21, %c0_22] : memref<1x3x1xf32, #tpu.memory_space<vmem>>, vector<1x3x1xf32>
    %284 = vector.shape_cast %283 : vector<1x3x1xf32> to vector<3x1xf32>
    %285 = vector.broadcast %284 : vector<3x1xf32> to vector<3x384xf32>
    %286 = arith.addf %282, %285 : vector<3x384xf32>
    %c0_23 = arith.constant 0 : index
    %c0_24 = arith.constant 0 : index
    %c0_25 = arith.constant 0 : index
    %287 = vector.load %arg7[%c0_23, %c0_24, %c0_25] : memref<1x12x3xbf16, #tpu.memory_space<vmem>>, vector<1x12x3xbf16>
    %288 = vector.shape_cast %287 : vector<1x12x3xbf16> to vector<12x3xbf16>
    %289 = arith.truncf %286 : vector<3x384xf32> to vector<3x384xbf16>
    %cst_26 = arith.constant dense<0.000000e+00> : vector<12x384xf32>
    %290 = tpu.matmul %288, %289, %cst_26 {dimension_numbers = #tpu.dot_dimension_numbers<[1], [0], [0], [1], [0, 0, 1, 1], [], []>} : vector<12x3xbf16>, vector<3x384xbf16>, vector<12x384xf32> -> vector<12x384xf32>
    %c0_27 = arith.constant 0 : index
    %c0_28 = arith.constant 0 : index
    %c0_29 = arith.constant 0 : index
    %291 = vector.load %arg8[%c0_27, %c0_28, %c0_29] : memref<1x12x1xf32, #tpu.memory_space<vmem>>, vector<1x12x1xf32>
    %292 = vector.shape_cast %291 : vector<1x12x1xf32> to vector<12x1xf32>
    %293 = vector.broadcast %292 : vector<12x1xf32> to vector<12x384xf32>
    %294 = arith.addf %290, %293 : vector<12x384xf32>
    %295 = arith.mulf %294, %294 : vector<12x384xf32>
    %296 = arith.mulf %294, %295 : vector<12x384xf32>
    %cst_30 = arith.constant 4.471500e-02 : f32
    %297 = vector.broadcast %cst_30 : f32 to vector<12x384xf32>
    %298 = arith.mulf %297, %296 : vector<12x384xf32>
    %299 = arith.addf %294, %298 : vector<12x384xf32>
    %cst_31 = arith.constant 0.797884583 : f32
    %300 = vector.broadcast %cst_31 : f32 to vector<12x384xf32>
    %301 = arith.mulf %300, %299 : vector<12x384xf32>
    %302 = math.tanh %301 : vector<12x384xf32>
    %cst_32 = arith.constant 1.000000e+00 : f32
    %303 = vector.broadcast %cst_32 : f32 to vector<12x384xf32>
    %304 = arith.addf %303, %302 : vector<12x384xf32>
    %cst_33 = arith.constant 5.000000e-01 : f32
    %305 = vector.broadcast %cst_33 : f32 to vector<12x384xf32>
    %306 = arith.mulf %305, %304 : vector<12x384xf32>
    %307 = arith.mulf %294, %306 : vector<12x384xf32>
    %c0_34 = arith.constant 0 : index
    %c0_35 = arith.constant 0 : index
    %c0_36 = arith.constant 0 : index
    %308 = vector.load %arg9[%c0_34, %c0_35, %c0_36] : memref<1x3x12xbf16, #tpu.memory_space<vmem>>, vector<1x3x12xbf16>
    %309 = vector.shape_cast %308 : vector<1x3x12xbf16> to vector<3x12xbf16>
    %310 = arith.truncf %307 : vector<12x384xf32> to vector<12x384xbf16>
    %cst_37 = arith.constant dense<0.000000e+00> : vector<3x384xf32>
    %311 = tpu.matmul %309, %310, %cst_37 {dimension_numbers = #tpu.dot_dimension_numbers<[1], [0], [0], [1], [0, 0, 1, 1], [], []>} : vector<3x12xbf16>, vector<12x384xbf16>, vector<3x384xf32> -> vector<3x384xf32>
    %c0_38 = arith.constant 0 : index
    %c0_39 = arith.constant 0 : index
    %c0_40 = arith.constant 0 : index
    %312 = vector.load %arg10[%c0_38, %c0_39, %c0_40] : memref<1x3x1xf32, #tpu.memory_space<vmem>>, vector<1x3x1xf32>
    %313 = vector.shape_cast %312 : vector<1x3x1xf32> to vector<3x1xf32>
    %314 = vector.broadcast %313 : vector<3x1xf32> to vector<3x384xf32>
    %315 = arith.addf %311, %314 : vector<3x384xf32>
    %316 = vector.extract_strided_slice %2 {offsets = [0, 75], sizes = [3, 384], strides = [1, 1]} : vector<3x640xf32> to vector<3x384xf32>
    %317 = arith.addf %316, %315 : vector<3x384xf32>
    %c0_41 = arith.constant 0 : index
    %c0_42 = arith.constant 0 : index
    %c0_43 = arith.constant 0 : index
    %c0_44 = arith.constant 0 : index
    %318 = vector.load %arg11[%c0_41, %c0_42, %c0_43, %c0_44] : memref<1x1x3x384xf32, #tpu.memory_space<vmem>>, vector<1x1x3x384xf32>
    %319 = vector.shape_cast %318 : vector<1x1x3x384xf32> to vector<3x384xf32>
    %320 = vector.shape_cast %317 : vector<3x384xf32> to vector<1x1x3x384xf32>
    tpu.vector_store %arg11[%c0_41, %c0_42, %c0_43, %c0_44], %320 {strides = array<i32>} : memref<1x1x3x384xf32, #tpu.memory_space<vmem>>, vector<1x1x3x384xf32>,
    return
  }
  func.func @transform_0(%arg0: i32, %arg1: i32) -> (i32, i32, i32, i32) {
    %c1_i32 = arith.constant 1 : i32
    %0 = arith.subi %c1_i32, %arg0 : i32
    %c0_i32 = arith.constant 0 : i32
    %c0_i32_0 = arith.constant 0 : i32
    %c0_i32_1 = arith.constant 0 : i32
    return %arg1, %0, %c0_i32, %c0_i32_0 : i32, i32, i32, i32
  }
  func.func @transform_1(%arg0: i32, %arg1: i32) -> (i32, i32, i32) {
    %c0_i32 = arith.constant 0 : i32
    %c0_i32_0 = arith.constant 0 : i32
    %c0_i32_1 = arith.constant 0 : i32
    return %arg0, %c0_i32, %c0_i32_0 : i32, i32, i32
  }
  func.func @transform_2(%arg0: i32, %arg1: i32) -> (i32, i32, i32) {
    %c0_i32 = arith.constant 0 : i32
    %c0_i32_0 = arith.constant 0 : i32
    %c0_i32_1 = arith.constant 0 : i32
    return %arg0, %c0_i32, %c0_i32_0 : i32, i32, i32
  }
  func.func @transform_3(%arg0: i32, %arg1: i32) -> (i32, i32, i32) {
    %c0_i32 = arith.constant 0 : i32
    %c0_i32_0 = arith.constant 0 : i32
    %c0_i32_1 = arith.constant 0 : i32
    return %arg0, %c0_i32, %c0_i32_0 : i32, i32, i32
  }
  func.func @transform_4(%arg0: i32, %arg1: i32) -> (i32, i32, i32) {
    %c0_i32 = arith.constant 0 : i32
    %c0_i32_0 = arith.constant 0 : i32
    %c0_i32_1 = arith.constant 0 : i32
    return %arg0, %c0_i32, %c0_i32_0 : i32, i32, i32
  }
  func.func @transform_5(%arg0: i32, %arg1: i32) -> (i32, i32, i32) {
    %c0_i32 = arith.constant 0 : i32
    %c0_i32_0 = arith.constant 0 : i32
    %c0_i32_1 = arith.constant 0 : i32
    return %arg0, %c0_i32, %c0_i32_0 : i32, i32, i32
  }
  func.func @transform_6(%arg0: i32, %arg1: i32) -> (i32, i32, i32) {
    %c0_i32 = arith.constant 0 : i32
    %c0_i32_0 = arith.constant 0 : i32
    %c0_i32_1 = arith.constant 0 : i32
    return %arg0, %c0_i32, %c0_i32_0 : i32, i32, i32
  }
  func.func @transform_7(%arg0: i32, %arg1: i32) -> (i32, i32, i32) {
    %c0_i32 = arith.constant 0 : i32
    %c0_i32_0 = arith.constant 0 : i32
    %c0_i32_1 = arith.constant 0 : i32
    return %arg0, %c0_i32, %c0_i32_0 : i32, i32, i32
  }
  func.func @transform_8(%arg0: i32, %arg1: i32) -> (i32, i32, i32) {
    %c0_i32 = arith.constant 0 : i32
    %c0_i32_0 = arith.constant 0 : i32
    %c0_i32_1 = arith.constant 0 : i32
    return %arg0, %c0_i32, %c0_i32_0 : i32, i32, i32
  }
  func.func @transform_9(%arg0: i32, %arg1: i32) -> (i32, i32, i32, i32) {
    %c0_i32 = arith.constant 0 : i32
    %c0_i32_0 = arith.constant 0 : i32
    %c0_i32_1 = arith.constant 0 : i32
    return %arg0, %arg1, %c0_i32, %c0_i32_0 : i32, i32, i32, i32
  }
}

</mosaic_0001>

<llo_original>
// kernel: diff_model_forward.2
$region0: #{diff_model_forward.2}
  #allocation0 [shape = 'u32[]', space=smem, size = 0x4, offset = 0x4, fixed_abs, tag = 'smem constant byte address 0x4 - core index']
  #allocation1 [shape = 'u32[144,128]{1,0:T(1,128)}', space=vmem, size = 0x12000, scoped, tag = 'internal scratch']
  %s0 = inlined_call_operand.vmem [shape: bf16[2,16,744], index: 0, kind: input, shape index: {}]
  %s1 = inlined_call_operand.vmem [shape: bf16[32,144], index: 1, kind: input, shape index: {}]
  %s2 = inlined_call_operand.vmem [shape: f32[32,1], index: 2, kind: input, shape index: {}]
  %s3 = inlined_call_operand.vmem [shape: f32[2,32,1], index: 3, kind: input, shape index: {}]
  %s4 = inlined_call_operand.vmem [shape: bf16[6,288], index: 4, kind: input, shape index: {}]
  %s5 = inlined_call_operand.vmem [shape: f32[6,1], index: 5, kind: input, shape index: {}]
  %s6 = inlined_call_operand.vmem [shape: f32[1,690], index: 6, kind: input, shape index: {}]
  %s7 = inlined_call_operand.vmem [shape: f32[1,640], index: 7, kind: input, shape index: {}]
  %s8 = inlined_call_operand.vmem [shape: bf16[2,6,640], index: 8, kind: output, shape index: {}]
  %s9 = sld [smem:[#allocation0]]
  $region65: #{diff_model_forward.2} parent=0
    _
  %s11 = ssub.s32 1, %s9
  %s12 = scalar_select 0, %s11, %s9
  loop: start=0, step=1, limit=4
  $region2: #{diff_model_forward.2} parent=0 // loop_pre_header
    _
  $region3: #{diff_model_forward.2} parent=0 // loop_header
    %s14 = sphi 0, %s18
    %p15 = scmp.ge.s32.totalorder %s14, 4
    %s24 = sphi 0, %s26
    %s27 = sphi 0, %s24
    %s28 = sphi 0, %s27
    %s44 = sphi 0, %s28
    %s48 = sphi 0, %s48
    %s50 = sphi 0, %s48
    %s51 = sphi 0, %s50
    %s65 = sphi 0, %s51
    %s69 = sphi 0, %s69
    %s71 = sphi 0, %s69
    %s72 = sphi 0, %s71
    %s86 = sphi 0, %s72
    %s92 = sphi 0, %s94
    %s95 = sphi 0, %s92
    %s96 = sphi 0, %s95
    %s112 = sphi 0, %s96
    %s116 = sphi 0, %s116
    %s118 = sphi 0, %s116
    %s119 = sphi 0, %s118
    %s133 = sphi 0, %s119
    %s137 = sphi 0, %s137
    %s139 = sphi 0, %s137
    %s140 = sphi 0, %s139
    %s154 = sphi 0, %s140
    %s158 = sphi 0, %s158
    %s160 = sphi 0, %s158
    %s161 = sphi 0, %s160
    %s175 = sphi 0, %s161
    %s179 = sphi 0, %s179
    %s181 = sphi 0, %s179
    %s182 = sphi 0, %s181
    %s196 = sphi 0, %s182
    %s202 = sphi 0, %s204
    %s205 = sphi 0, %s202
    %s206 = sphi 0, %s205
    %s222 = sphi 0, %s206
  $region4: #{diff_model_forward.2} parent=0 // loop_header_branch
    %17 = sbr.rel (%p15) target = $region8
  $region5: #{diff_model_forward.2} parent=0 // loop_body
    %s19 = ssub.s32 %s14, 1
    %s20 = ssub.s32 %s14, 2
    %s21 = sadd.s32 %s14, 1
    %s22 = ssub.s32 %s14, %s21
    %p23 = scmp.eq.s32.totalorder %s22, 0
    %s25 = sadd.s32 %s24, 1
    %s26 = scalar_select %p23, %s24, %s25
    %p29 = pneg %p23
    %p30 = scmp.eq.s32.totalorder %s14, 1
    %p31 = por %p29, %p30
    %p32 = scmp.ne.s32.totalorder %s24, %s27
    %p33 = scmp.eq.s32.totalorder %s14, 0
    %p34 = por %p32, %p33
    %p35 = scmp.ne.s32.totalorder %s24, %s27
    %p36 = scmp.eq.s32.totalorder %s19, 1
    %p37 = por %p35, %p36
    %p38 = scmp.ne.s32.totalorder %s27, %s28
    %p39 = scmp.eq.s32.totalorder %s19, 0
    %p40 = por %p38, %p39
    %p41 = scmp.ne.s32.totalorder %s27, %s28
    %p42 = scmp.eq.s32.totalorder %s20, 1
    %p43 = por %p41, %p42
    %p45 = scmp.ne.s32.totalorder %s28, %s44
    %p46 = scmp.eq.s32.totalorder %s20, 0
    %p47 = por %p45, %p46
    %s49 = sadd.s32 %s48, 1
    %p52 = scmp.eq.s32.totalorder %s14, 1
    %p53 = scmp.ne.s32.totalorder %s48, %s50
    %p54 = scmp.eq.s32.totalorder %s14, 0
    %p55 = por %p53, %p54
    %p56 = scmp.ne.s32.totalorder %s48, %s50
    %p57 = scmp.eq.s32.totalorder %s19, 1
    %p58 = por %p56, %p57
    %p59 = scmp.ne.s32.totalorder %s50, %s51
    %p60 = scmp.eq.s32.totalorder %s19, 0
    %p61 = por %p59, %p60
    %p62 = scmp.ne.s32.totalorder %s50, %s51
    %p63 = scmp.eq.s32.totalorder %s20, 1
    %p64 = por %p62, %p63
    %p66 = scmp.ne.s32.totalorder %s51, %s65
    %p67 = scmp.eq.s32.totalorder %s20, 0
    %p68 = por %p66, %p67
    %s70 = sadd.s32 %s69, 1
    %p73 = scmp.eq.s32.totalorder %s14, 1
    %p74 = scmp.ne.s32.totalorder %s69, %s71
    %p75 = scmp.eq.s32.totalorder %s14, 0
    %p76 = por %p74, %p75
    %p77 = scmp.ne.s32.totalorder %s69, %s71
    %p78 = scmp.eq.s32.totalorder %s19, 1
    %p79 = por %p77, %p78
    %p80 = scmp.ne.s32.totalorder %s71, %s72
    %p81 = scmp.eq.s32.totalorder %s19, 0
    %p82 = por %p80, %p81
    %p83 = scmp.ne.s32.totalorder %s71, %s72
    %p84 = scmp.eq.s32.totalorder %s20, 1
    %p85 = por %p83, %p84
    %p87 = scmp.ne.s32.totalorder %s72, %s86
    %p88 = scmp.eq.s32.totalorder %s20, 0
    %p89 = por %p87, %p88
    %s90 = ssub.s32 %s14, %s21
    %p91 = scmp.eq.s32.totalorder %s90, 0
    %s93 = sadd.s32 %s92, 1
    %s94 = scalar_select %p91, %s92, %s93
    %p97 = pneg %p91
    %p98 = scmp.eq.s32.totalorder %s14, 1
    %p99 = por %p97, %p98
    %p100 = scmp.ne.s32.totalorder %s92, %s95
    %p101 = scmp.eq.s32.totalorder %s14, 0
    %p102 = por %p100, %p101
    %p103 = scmp.ne.s32.totalorder %s92, %s95
    %p104 = scmp.eq.s32.totalorder %s19, 1
    %p105 = por %p103, %p104
    %p106 = scmp.ne.s32.totalorder %s95, %s96
    %p107 = scmp.eq.s32.totalorder %s19, 0
    %p108 = por %p106, %p107
    %p109 = scmp.ne.s32.totalorder %s95, %s96
    %p110 = scmp.eq.s32.totalorder %s20, 1
    %p111 = por %p109, %p110
    %p113 = scmp.ne.s32.totalorder %s96, %s112
    %p114 = scmp.eq.s32.totalorder %s20, 0
    %p115 = por %p113, %p114
    %s117 = sadd.s32 %s116, 1
    %p120 = scmp.eq.s32.totalorder %s14, 1
    %p121 = scmp.ne.s32.totalorder %s116, %s118
    %p122 = scmp.eq.s32.totalorder %s14, 0
    %p123 = por %p121, %p122
    %p124 = scmp.ne.s32.totalorder %s116, %s118
    %p125 = scmp.eq.s32.totalorder %s19, 1
    %p126 = por %p124, %p125
    %p127 = scmp.ne.s32.totalorder %s118, %s119
    %p128 = scmp.eq.s32.totalorder %s19, 0
    %p129 = por %p127, %p128
    %p130 = scmp.ne.s32.totalorder %s118, %s119
    %p131 = scmp.eq.s32.totalorder %s20, 1
    %p132 = por %p130, %p131
    %p134 = scmp.ne.s32.totalorder %s119, %s133
    %p135 = scmp.eq.s32.totalorder %s20, 0
    %p136 = por %p134, %p135
    %s138 = sadd.s32 %s137, 1
    %p141 = scmp.eq.s32.totalorder %s14, 1
    %p142 = scmp.ne.s32.totalorder %s137, %s139
    %p143 = scmp.eq.s32.totalorder %s14, 0
    %p144 = por %p142, %p143
    %p145 = scmp.ne.s32.totalorder %s137, %s139
    %p146 = scmp.eq.s32.totalorder %s19, 1
    %p147 = por %p145, %p146
    %p148 = scmp.ne.s32.totalorder %s139, %s140
    %p149 = scmp.eq.s32.totalorder %s19, 0
    %p150 = por %p148, %p149
    %p151 = scmp.ne.s32.totalorder %s139, %s140
    %p152 = scmp.eq.s32.totalorder %s20, 1
    %p153 = por %p151, %p152
    %p155 = scmp.ne.s32.totalorder %s140, %s154
    %p156 = scmp.eq.s32.totalorder %s20, 0
    %p157 = por %p155, %p156
    %s159 = sadd.s32 %s158, 1
    %p162 = scmp.eq.s32.totalorder %s14, 1
    %p163 = scmp.ne.s32.totalorder %s158, %s160
    %p164 = scmp.eq.s32.totalorder %s14, 0
    %p165 = por %p163, %p164
    %p166 = scmp.ne.s32.totalorder %s158, %s160
    %p167 = scmp.eq.s32.totalorder %s19, 1
    %p168 = por %p166, %p167
    %p169 = scmp.ne.s32.totalorder %s160, %s161
    %p170 = scmp.eq.s32.totalorder %s19, 0
    %p171 = por %p169, %p170
    %p172 = scmp.ne.s32.totalorder %s160, %s161
    %p173 = scmp.eq.s32.totalorder %s20, 1
    %p174 = por %p172, %p173
    %p176 = scmp.ne.s32.totalorder %s161, %s175
    %p177 = scmp.eq.s32.totalorder %s20, 0
    %p178 = por %p176, %p177
    %s180 = sadd.s32 %s179, 1
    %p183 = scmp.eq.s32.totalorder %s14, 1
    %p184 = scmp.ne.s32.totalorder %s179, %s181
    %p185 = scmp.eq.s32.totalorder %s14, 0
    %p186 = por %p184, %p185
    %p187 = scmp.ne.s32.totalorder %s179, %s181
    %p188 = scmp.eq.s32.totalorder %s19, 1
    %p189 = por %p187, %p188
    %p190 = scmp.ne.s32.totalorder %s181, %s182
    %p191 = scmp.eq.s32.totalorder %s19, 0
    %p192 = por %p190, %p191
    %p193 = scmp.ne.s32.totalorder %s181, %s182
    %p194 = scmp.eq.s32.totalorder %s20, 1
    %p195 = por %p193, %p194
    %p197 = scmp.ne.s32.totalorder %s182, %s196
    %p198 = scmp.eq.s32.totalorder %s20, 0
    %p199 = por %p197, %p198
    %s200 = ssub.s32 %s14, %s21
    %p201 = scmp.eq.s32.totalorder %s200, 0
    %s203 = sadd.s32 %s202, 1
    %s204 = scalar_select %p201, %s202, %s203
    %p207 = pneg %p201
    %p208 = scmp.eq.s32.totalorder %s14, 1
    %p209 = por %p207, %p208
    %p210 = scmp.ne.s32.totalorder %s202, %s205
    %p211 = scmp.eq.s32.totalorder %s14, 0
    %p212 = por %p210, %p211
    %p213 = scmp.ne.s32.totalorder %s202, %s205
    %p214 = scmp.eq.s32.totalorder %s19, 1
    %p215 = por %p213, %p214
    %p216 = scmp.ne.s32.totalorder %s205, %s206
    %p217 = scmp.eq.s32.totalorder %s19, 0
    %p218 = por %p216, %p217
    %p219 = scmp.ne.s32.totalorder %s205, %s206
    %p220 = scmp.eq.s32.totalorder %s20, 1
    %p221 = por %p219, %p220
    %p223 = scmp.ne.s32.totalorder %s206, %s222
    %p224 = scmp.eq.s32.totalorder %s20, 0
    %p225 = por %p223, %p224
    %p226 = scmp.le.s32.totalorder 1, %s14
    %p227 = scmp.lt.s32.totalorder %s14, 3
    %p228 = pnand %p226, %p227
    %p229 = pneg %p228
    // Predicated region
    $region9: #{diff_model_forward.2} parent=5 // pred_check
      _
    $region10: #{diff_model_forward.2} parent=5 // pred_check_branch
      %231 = sbr.rel (%p228) target = $region12
    $region11: #{diff_model_forward.2} parent=5 // pred_region
      %s232 = ssub.s32 %s14, 1
      // Predicated region
      $region13: #{diff_model_forward.2} parent=11 // pred_check
        %p233 = pneg %p61
      $region14: #{diff_model_forward.2} parent=11 // pred_check_branch
        %235 = sbr.rel (%p233) target = $region16
      $region15: #{diff_model_forward.2} parent=11 // pred_region
        _
      $region16: #{diff_model_forward.2} parent=11 // pred_fallthru
        _
      // Predicated region
      $region17: #{diff_model_forward.2} parent=11 // pred_check
        %p236 = pneg %p82
      $region18: #{diff_model_forward.2} parent=11 // pred_check_branch
        %238 = sbr.rel (%p236) target = $region20
      $region19: #{diff_model_forward.2} parent=11 // pred_region
        _
      $region20: #{diff_model_forward.2} parent=11 // pred_fallthru
        _
      // Predicated region
      $region21: #{diff_model_forward.2} parent=11 // pred_check
        %p239 = pneg %p129
      $region22: #{diff_model_forward.2} parent=11 // pred_check_branch
        %241 = sbr.rel (%p239) target = $region24
      $region23: #{diff_model_forward.2} parent=11 // pred_region
        _
      $region24: #{diff_model_forward.2} parent=11 // pred_fallthru
        _
      // Predicated region
      $region25: #{diff_model_forward.2} parent=11 // pred_check
        %p242 = pneg %p150
      $region26: #{diff_model_forward.2} parent=11 // pred_check_branch
        %244 = sbr.rel (%p242) target = $region28
      $region27: #{diff_model_forward.2} parent=11 // pred_region
        _
      $region28: #{diff_model_forward.2} parent=11 // pred_fallthru
        _
      // Predicated region
      $region29: #{diff_model_forward.2} parent=11 // pred_check
        %p245 = pneg %p171
      $region30: #{diff_model_forward.2} parent=11 // pred_check_branch
        %247 = sbr.rel (%p245) target = $region32
      $region31: #{diff_model_forward.2} parent=11 // pred_region
        _
      $region32: #{diff_model_forward.2} parent=11 // pred_fallthru
        _
      // Predicated region
      $region33: #{diff_model_forward.2} parent=11 // pred_check
        %p248 = pneg %p192
      $region34: #{diff_model_forward.2} parent=11 // pred_check_branch
        %250 = sbr.rel (%p248) target = $region36
      $region35: #{diff_model_forward.2} parent=11 // pred_region
        _
      $region36: #{diff_model_forward.2} parent=11 // pred_fallthru
        _
    $region12: #{diff_model_forward.2} parent=5 // pred_fallthru
      _
    %p251 = scmp.lt.s32.totalorder %s14, 2
    // Predicated region
    $region37: #{diff_model_forward.2} parent=5 // pred_check
      %p252 = pneg %p251
    $region38: #{diff_model_forward.2} parent=5 // pred_check_branch
      %254 = sbr.rel (%p252) target = $region40
    $region39: #{diff_model_forward.2} parent=5 // pred_region
      // Predicated region
      $region41: #{diff_model_forward.2} parent=39 // pred_check
        %p255 = pneg %p34
      $region42: #{diff_model_forward.2} parent=39 // pred_check_branch
        %257 = sbr.rel (%p255) target = $region44
      $region43: #{diff_model_forward.2} parent=39 // pred_region
        %p258 = scmp.lt.s32.totalorder %s14, 1
        %s259 = scalar_select %p258, %s14, 1
        %s260 = smul.addr %s259, 12
        %s261 = smul.addr %s260, 4
        %s262 = scalar_lea.vmem %s0, %s261
      $region44: #{diff_model_forward.2} parent=39 // pred_fallthru
        _
      // Predicated region
      $region45: #{diff_model_forward.2} parent=39 // pred_check
        %p263 = pneg %p102
      $region46: #{diff_model_forward.2} parent=39 // pred_check_branch
        %265 = sbr.rel (%p263) target = $region48
      $region47: #{diff_model_forward.2} parent=39 // pred_region
        %p266 = scmp.lt.s32.totalorder %s14, 1
        %s267 = scalar_select %p266, %s14, 1
        %s268 = smul.addr %s267, 4
        %s269 = smul.addr %s268, 8
        %s270 = scalar_lea.vmem %s3, %s269
      $region48: #{diff_model_forward.2} parent=39 // pred_fallthru
        _
    $region40: #{diff_model_forward.2} parent=5 // pred_fallthru
      _
    %p271 = scmp.le.s32.totalorder 1, %s14
    %p272 = scmp.lt.s32.totalorder %s14, 3
    %p273 = pnand %p271, %p272
    %p274 = pneg %p273
    // Predicated region
    $region49: #{diff_model_forward.2} parent=5 // pred_check
      _
    $region50: #{diff_model_forward.2} parent=5 // pred_check_branch
      %276 = sbr.rel (%p273) target = $region52
    $region51: #{diff_model_forward.2} parent=5 // pred_region
      %s277 = ssub.s32 %s14, 1
      %p278 = scmp.lt.s32.totalorder %s19, 1
      %s279 = scalar_select %p278, %s19, 1
      %s280 = smul.addr %s279, 12
      %s281 = smul.addr %s280, 4
      %s282 = scalar_lea.vmem %s0, %s281
      %p283 = pneg %p40
      %p284 = pneg %p37
      %p285 = pneg %p61
      %p286 = pneg %p58
      %p287 = pneg %p82
      %p288 = pneg %p79
      %p289 = scmp.lt.s32.totalorder %s19, 1
      %s290 = scalar_select %p289, %s19, 1
      %s291 = smul.addr %s290, 4
      %s292 = smul.addr %s291, 8
      %s293 = scalar_lea.vmem %s3, %s292
      %p294 = pneg %p108
      %p295 = pneg %p105
      %p296 = pneg %p129
      %p297 = pneg %p126
      %p298 = pneg %p150
      %p299 = pneg %p147
      %p300 = pneg %p171
      %p301 = pneg %p168
      %p302 = pneg %p192
      %p303 = pneg %p189
      %p304 = pneg %p218
      %p305 = pneg %p215
      %p306 = scmp.lt.s32.totalorder %s19, 1
      %s307 = scalar_select %p306, %s19, 1
      %s308 = smul.addr %s307, 5
      %s309 = smul.addr %s308, 4
      %s310 = scalar_lea.vmem %s8, %s309
      %p311 = scmp.lt.s32.totalorder %s19, 1
      %s312 = scalar_select %p311, %s19, 1
      %s313 = smul.addr %s312, 12
      %s314 = smul.addr %s313, 4
      %s315 = scalar_lea.vmem %s0, %s314
      %p316 = scmp.lt.s32.totalorder %s19, 1
      %s317 = scalar_select %p316, %s19, 1
      %s318 = smul.addr %s317, 4
      %s319 = smul.addr %s318, 8
      %s320 = scalar_lea.vmem %s3, %s319
      %p321 = scmp.lt.s32.totalorder %s19, 1
      %s322 = scalar_select %p321, %s19, 1
      %s323 = smul.addr %s322, 5
      %s324 = smul.addr %s323, 4
      %s325 = scalar_lea.vmem %s8, %s324
      %v327 = vld [vmem:[%s315] sm:$0xff]
      %v328 = vld [vmem:[%s315 + $0x8] sm:$0xff]
      %v329 = vld [vmem:[%s315 + $0x10] sm:$0xff]
      %v330 = vld [vmem:[%s315 + $0x18] sm:$0xff]
      %v331 = vld [vmem:[%s315 + $0x20] sm:$0xff]
      %v332 = vld [vmem:[%s315 + $0x28] sm:$0xff]
      %v333 = vld [vmem:[%s1] sm:$0xff]
      %v334 = vld [vmem:[%s1 + $0x8] sm:$0xff]
      %v335 = vld [vmem:[%s1 + $0x10] sm:$0xff]
      %v336 = vld [vmem:[%s1 + $0x18] sm:$0xff]
      %v343 = vunpack.c.l.b16 %v327
      %v344 = vunpack.c.h.b16 %v327
      %v345 = vunpack.c.l.b16 %v328
      %v346 = vunpack.c.h.b16 %v328
      %v347 = vunpack.c.l.b16 %v329
      %v348 = vunpack.c.h.b16 %v329
      %v349 = vunpack.c.l.b16 %v330
      %v350 = vunpack.c.h.b16 %v330
      %v351 = vunpack.c.l.b16 %v331
      %v352 = vunpack.c.h.b16 %v331
      %v353 = vunpack.c.l.b16 %v332
      %v354 = vunpack.c.h.b16 %v332
      %v355 = vpack.c.b16 %v349, %v343
      %v356 = vpack.c.b16 %v350, %v344
      %v357 = vpack.c.b16 %v351, %v345
      %v358 = vpack.c.b16 %v352, %v346
      %v359 = vpack.c.b16 %v353, %v347
      %v360 = vpack.c.b16 %v354, %v348
      %367 = vrot.lane.b32.xlu0 %v355, 127
      %v368 = vpop.permute.xlu0 %367
      %369 = vrot.lane.b32.xlu0 %v356, 127
      %v370 = vpop.permute.xlu0 %369
      %371 = vrot.lane.b32.xlu0 %v357, 127
      %v372 = vpop.permute.xlu0 %371
      %373 = vrot.lane.b32.xlu0 %v358, 127
      %v374 = vpop.permute.xlu0 %373
      %375 = vrot.lane.b32.xlu0 %v359, 127
      %v376 = vpop.permute.xlu0 %375
      %377 = vrot.lane.b32.xlu0 %v360, 127
      %v378 = vpop.permute.xlu0 %377
      %vm379 = vcmask 1039360
      %v380 = vsel %vm379, %v368, %v370
      %v381 = vsel %vm379, %v370, %v372
      %v382 = vsel %vm379, %v372, %v374
      %v383 = vsel %vm379, %v374, %v376
      %v384 = vsel %vm379, %v376, %v378
      %391 = vrot.lane.b32.xlu0 %v355, 126
      %v392 = vpop.permute.xlu0 %391
      %393 = vrot.lane.b32.xlu0 %v356, 126
      %v394 = vpop.permute.xlu0 %393
      %395 = vrot.lane.b32.xlu0 %v357, 126
      %v396 = vpop.permute.xlu0 %395
      %397 = vrot.lane.b32.xlu0 %v358, 126
      %v398 = vpop.permute.xlu0 %397
      %399 = vrot.lane.b32.xlu0 %v359, 126
      %v400 = vpop.permute.xlu0 %399
      %401 = vrot.lane.b32.xlu0 %v360, 126
      %v402 = vpop.permute.xlu0 %401
      %vm403 = vcmask 1031168
      %v404 = vsel %vm403, %v392, %v394
      %v405 = vsel %vm403, %v394, %v396
      %v406 = vsel %vm403, %v396, %v398
      %v407 = vsel %vm403, %v398, %v400
      %v408 = vsel %vm403, %v400, %v402
      %415 = vrot.lane.b32.xlu0 %v355, 104
      %v416 = vpop.permute.xlu0 %415
      %417 = vrot.lane.b32.xlu0 %v356, 104
      %v418 = vpop.permute.xlu0 %417
      %419 = vrot.lane.b32.xlu0 %v357, 104
      %v420 = vpop.permute.xlu0 %419
      %421 = vrot.lane.b32.xlu0 %v358, 104
      %v422 = vpop.permute.xlu0 %421
      %423 = vrot.lane.b32.xlu0 %v359, 104
      %v424 = vpop.permute.xlu0 %423
      %425 = vrot.lane.b32.xlu0 %v360, 104
      %v426 = vpop.permute.xlu0 %425
      %vm427 = vcmask 850944
      %v428 = vsel %vm427, %v416, %v418
      %v429 = vsel %vm427, %v418, %v420
      %v430 = vsel %vm427, %v420, %v422
      %v431 = vsel %vm427, %v422, %v424
      %v432 = vsel %vm427, %v424, %v426
      %439 = vrot.lane.b32.xlu0 %v355, 103
      %v440 = vpop.permute.xlu0 %439
      %441 = vrot.lane.b32.xlu0 %v356, 103
      %v442 = vpop.permute.xlu0 %441
      %443 = vrot.lane.b32.xlu0 %v357, 103
      %v444 = vpop.permute.xlu0 %443
      %445 = vrot.lane.b32.xlu0 %v358, 103
      %v446 = vpop.permute.xlu0 %445
      %447 = vrot.lane.b32.xlu0 %v359, 103
      %v448 = vpop.permute.xlu0 %447
      %449 = vrot.lane.b32.xlu0 %v360, 103
      %v450 = vpop.permute.xlu0 %449
      %vm451 = vcmask 842752
      %v452 = vsel %vm451, %v440, %v442
      %v453 = vsel %vm451, %v442, %v444
      %v454 = vsel %vm451, %v444, %v446
      %v455 = vsel %vm451, %v446, %v448
      %v456 = vsel %vm451, %v448, %v450
      %463 = vrot.lane.b32.xlu0 %v355, 102
      %v464 = vpop.permute.xlu0 %463
      %465 = vrot.lane.b32.xlu0 %v356, 102
      %v466 = vpop.permute.xlu0 %465
      %467 = vrot.lane.b32.xlu0 %v357, 102
      %v468 = vpop.permute.xlu0 %467
      %469 = vrot.lane.b32.xlu0 %v358, 102
      %v470 = vpop.permute.xlu0 %469
      %471 = vrot.lane.b32.xlu0 %v359, 102
      %v472 = vpop.permute.xlu0 %471
      %473 = vrot.lane.b32.xlu0 %v360, 102
      %v474 = vpop.permute.xlu0 %473
      %vm475 = vcmask 834560
      %v476 = vsel %vm475, %v464, %v466
      %v477 = vsel %vm475, %v466, %v468
      %v478 = vsel %vm475, %v468, %v470
      %v479 = vsel %vm475, %v470, %v472
      %v480 = vsel %vm475, %v472, %v474
      %487 = vrot.lane.b32.xlu0 %v355, 80
      %v488 = vpop.permute.xlu0 %487
      %489 = vrot.lane.b32.xlu0 %v356, 80
      %v490 = vpop.permute.xlu0 %489
      %491 = vrot.lane.b32.xlu0 %v357, 80
      %v492 = vpop.permute.xlu0 %491
      %493 = vrot.lane.b32.xlu0 %v358, 80
      %v494 = vpop.permute.xlu0 %493
      %495 = vrot.lane.b32.xlu0 %v359, 80
      %v496 = vpop.permute.xlu0 %495
      %497 = vrot.lane.b32.xlu0 %v360, 80
      %v498 = vpop.permute.xlu0 %497
      %vm499 = vcmask 654336
      %v500 = vsel %vm499, %v488, %v490
      %v501 = vsel %vm499, %v490, %v492
      %v502 = vsel %vm499, %v492, %v494
      %v503 = vsel %vm499, %v494, %v496
      %v504 = vsel %vm499, %v496, %v498
      %511 = vrot.lane.b32.xlu0 %v355, 79
      %v512 = vpop.permute.xlu0 %511
      %513 = vrot.lane.b32.xlu0 %v356, 79
      %v514 = vpop.permute.xlu0 %513
      %515 = vrot.lane.b32.xlu0 %v357, 79
      %v516 = vpop.permute.xlu0 %515
      %517 = vrot.lane.b32.xlu0 %v358, 79
      %v518 = vpop.permute.xlu0 %517
      %519 = vrot.lane.b32.xlu0 %v359, 79
      %v520 = vpop.permute.xlu0 %519
      %521 = vrot.lane.b32.xlu0 %v360, 79
      %v522 = vpop.permute.xlu0 %521
      %vm523 = vcmask 646144
      %v524 = vsel %vm523, %v512, %v514
      %v525 = vsel %vm523, %v514, %v516
      %v526 = vsel %vm523, %v516, %v518
      %v527 = vsel %vm523, %v518, %v520
      %v528 = vsel %vm523, %v520, %v522
      %535 = vrot.lane.b32.xlu0 %v355, 78
      %v536 = vpop.permute.xlu0 %535
      %537 = vrot.lane.b32.xlu0 %v356, 78
      %v538 = vpop.permute.xlu0 %537
      %539 = vrot.lane.b32.xlu0 %v357, 78
      %v540 = vpop.permute.xlu0 %539
      %541 = vrot.lane.b32.xlu0 %v358, 78
      %v542 = vpop.permute.xlu0 %541
      %543 = vrot.lane.b32.xlu0 %v359, 78
      %v544 = vpop.permute.xlu0 %543
      %545 = vrot.lane.b32.xlu0 %v360, 78
      %v546 = vpop.permute.xlu0 %545
      %vm547 = vcmask 637952
      %v548 = vsel %vm547, %v536, %v538
      %v549 = vsel %vm547, %v538, %v540
      %v550 = vsel %vm547, %v540, %v542
      %v551 = vsel %vm547, %v542, %v544
      %v552 = vsel %vm547, %v544, %v546
      %v559 = vld [vmem:[%s2] sm:$0xff]
      %v560 = vld [vmem:[%s2 + $0x8] sm:$0xff]
      %v561 = vld [vmem:[%s2 + $0x10] sm:$0xff]
      %v562 = vld [vmem:[%s2 + $0x18] sm:$0xff]
      %564 = vset.pattern.permute.xlu0 0
      %565 = vperm.xlu0 %564, %v559
      %v566 = vpop.permute.xlu0 %565
      %569 = vset.pattern.permute.xlu0 0
      %570 = vperm.xlu0 %569, %v560
      %v571 = vpop.permute.xlu0 %570
      %574 = vset.pattern.permute.xlu0 0
      %575 = vperm.xlu0 %574, %v561
      %v576 = vpop.permute.xlu0 %575
      %579 = vset.pattern.permute.xlu0 0
      %580 = vperm.xlu0 %579, %v562
      %v581 = vpop.permute.xlu0 %580
      %v587 = vunpack.c.l.b16 %v333
      %v588 = vunpack.c.h.b16 %v333
      %v589 = vunpack.c.l.b16 %v334
      %v590 = vunpack.c.h.b16 %v334
      %v591 = vunpack.c.l.b16 %v335
      %v592 = vunpack.c.h.b16 %v335
      %v593 = vunpack.c.l.b16 %v336
      %v594 = vunpack.c.h.b16 %v336
      %v595 = vpack.c.b16 %v589, %v587
      %v596 = vpack.c.b16 %v590, %v588
      %v597 = vpack.c.b16 %v593, %v591
      %v598 = vpack.c.b16 %v594, %v592
      %vm601 = vcmask 130048
      %v603 = vsel %vm601, %v596, 0
      %v606 = vsel %vm601, %v598, 0
      %608 = vmatprep.subr.bf16.mxu0 %v525
      %609 = vmatpush1.bf16.msra.mxu0 %v524
      %610 = vmatprep.subr.bf16.mxu0 %v501
      %611 = vmatpush1.bf16.msra.mxu0 %v500
      %612 = vmatprep.subr.bf16.mxu0 %v477
      %613 = vmatpush1.bf16.msra.mxu0 %v476
      %614 = vmatprep.subr.bf16.mxu0 %v453
      %615 = vmatpush1.bf16.msra.mxu0 %v452
      %616 = vmatprep.subr.bf16.mxu0 %v429
      %617 = vmatpush1.bf16.msra.mxu0 %v428
      %618 = vmatprep.subr.bf16.mxu0 %v405
      %619 = vmatpush1.bf16.msra.mxu0 %v404
      %620 = vmatprep.subr.bf16.mxu0 %v381
      %621 = vmatpush1.bf16.msra.mxu0 %v380
      %622 = vmatprep.subr.bf16.mxu0 %v356
      %623 = vmatpush1.bf16.msra.mxu0 %v355
      %624 = vmatprep.subr.bf16.mxu0 0
      %625 = vmatpush2.bf16.msra.mxu0 0
      %626 = vmatprep.subr.bf16.mxu0 0
      %627 = vmatpush2.bf16.msra.mxu0 0
      %628 = vmatprep.subr.bf16.mxu0 0
      %629 = vmatpush2.bf16.msra.mxu0 0
      %630 = vmatprep.subr.bf16.mxu0 0
      %631 = vmatpush2.bf16.msra.mxu0 0
      %632 = vmatprep.subr.bf16.mxu0 0
      %633 = vmatpush2.bf16.msra.mxu0 0
      %634 = vmatprep.subr.bf16.mxu0 0
      %635 = vmatpush2.bf16.msra.mxu0 0
      %636 = vmatprep.subr.bf16.mxu0 0
      %637 = vmatpush2.bf16.msra.mxu0 0
      %638 = vmatprep.subr.bf16.mxu0 %v549
      %639 = vmatpush2.bf16.msra.mxu0 %v548
      %640 = vmatprep.mubr.bf16.mxu0 %v603
      %641 = vmatmul.mubr.bf16.gmra.mxu0 %v595
      %v642 = vpop.f32.mrf.mxu0
      %v643 = vadd.f32 %v566, %v642
      %v644 = vpop.f32.mrf.mxu0
      %v645 = vadd.f32 %v566, %v644
      %v646 = vpop.f32.mrf.mxu0
      %v647 = vadd.f32 %v571, %v646
      %v648 = vpop.f32.mrf.mxu0
      %v649 = vadd.f32 %v571, %v648
      %650 = vmatprep.mubr.bf16.mxu0 %v606
      %651 = vmatmul.mubr.bf16.gmra.mxu0 %v597
      %v652 = vpop.f32.mrf.mxu0
      %v653 = vadd.f32 %v576, %v652
      %v654 = vpop.f32.mrf.mxu0
      %v655 = vadd.f32 %v576, %v654
      %v656 = vpop.f32.mrf.mxu0
      %v657 = vadd.f32 %v581, %v656
      %v658 = vpop.f32.mrf.mxu0
      %v659 = vadd.f32 %v581, %v658
      %660 = vdwg.mxu0
      %661 = vmatprep.subr.bf16.mxu0 %v527
      %662 = vmatpush1.bf16.msra.mxu0 %v526
      %663 = vmatprep.subr.bf16.mxu0 %v503
      %664 = vmatpush1.bf16.msra.mxu0 %v502
      %665 = vmatprep.subr.bf16.mxu0 %v479
      %666 = vmatpush1.bf16.msra.mxu0 %v478
      %667 = vmatprep.subr.bf16.mxu0 %v455
      %668 = vmatpush1.bf16.msra.mxu0 %v454
      %669 = vmatprep.subr.bf16.mxu0 %v431
      %670 = vmatpush1.bf16.msra.mxu0 %v430
      %671 = vmatprep.subr.bf16.mxu0 %v407
      %672 = vmatpush1.bf16.msra.mxu0 %v406
      %673 = vmatprep.subr.bf16.mxu0 %v383
      %674 = vmatpush1.bf16.msra.mxu0 %v382
      %675 = vmatprep.subr.bf16.mxu0 %v358
      %676 = vmatpush1.bf16.msra.mxu0 %v357
      %677 = vmatprep.subr.bf16.mxu0 0
      %678 = vmatpush2.bf16.msra.mxu0 0
      %679 = vmatprep.subr.bf16.mxu0 0
      %680 = vmatpush2.bf16.msra.mxu0 0
      %681 = vmatprep.subr.bf16.mxu0 0
      %682 = vmatpush2.bf16.msra.mxu0 0
      %683 = vmatprep.subr.bf16.mxu0 0
      %684 = vmatpush2.bf16.msra.mxu0 0
      %685 = vmatprep.subr.bf16.mxu0 0
      %686 = vmatpush2.bf16.msra.mxu0 0
      %687 = vmatprep.subr.bf16.mxu0 0
      %688 = vmatpush2.bf16.msra.mxu0 0
      %689 = vmatprep.subr.bf16.mxu0 0
      %690 = vmatpush2.bf16.msra.mxu0 0
      %691 = vmatprep.subr.bf16.mxu0 %v551
      %692 = vmatpush2.bf16.msra.mxu0 %v550
      %693 = vmatprep.mubr.bf16.mxu0 %v603
      %694 = vmatmul.mubr.bf16.gmra.mxu0 %v595
      %v695 = vpop.f32.mrf.mxu0
      %v696 = vadd.f32 %v566, %v695
      %v697 = vpop.f32.mrf.mxu0
      %v698 = vadd.f32 %v566, %v697
      %v699 = vpop.f32.mrf.mxu0
      %v700 = vadd.f32 %v571, %v699
      %v701 = vpop.f32.mrf.mxu0
      %v702 = vadd.f32 %v571, %v701
      %703 = vmatprep.mubr.bf16.mxu0 %v606
      %704 = vmatmul.mubr.bf16.gmra.mxu0 %v597
      %v705 = vpop.f32.mrf.mxu0
      %v706 = vadd.f32 %v576, %v705
      %v707 = vpop.f32.mrf.mxu0
      %v708 = vadd.f32 %v576, %v707
      %v709 = vpop.f32.mrf.mxu0
      %v710 = vadd.f32 %v581, %v709
      %v711 = vpop.f32.mrf.mxu0
      %v712 = vadd.f32 %v581, %v711
      %713 = vdwg.mxu0
      %714 = vmatprep.subr.bf16.mxu0 %v522
      %715 = vmatpush1.bf16.msra.mxu0 %v528
      %716 = vmatprep.subr.bf16.mxu0 %v498
      %717 = vmatpush1.bf16.msra.mxu0 %v504
      %718 = vmatprep.subr.bf16.mxu0 %v474
      %719 = vmatpush1.bf16.msra.mxu0 %v480
      %720 = vmatprep.subr.bf16.mxu0 %v450
      %721 = vmatpush1.bf16.msra.mxu0 %v456
      %722 = vmatprep.subr.bf16.mxu0 %v426
      %723 = vmatpush1.bf16.msra.mxu0 %v432
      %724 = vmatprep.subr.bf16.mxu0 %v402
      %725 = vmatpush1.bf16.msra.mxu0 %v408
      %726 = vmatprep.subr.bf16.mxu0 %v378
      %727 = vmatpush1.bf16.msra.mxu0 %v384
      %728 = vmatprep.subr.bf16.mxu0 %v360
      %729 = vmatpush1.bf16.msra.mxu0 %v359
      %730 = vmatprep.subr.bf16.mxu0 0
      %731 = vmatpush2.bf16.msra.mxu0 0
      %732 = vmatprep.subr.bf16.mxu0 0
      %733 = vmatpush2.bf16.msra.mxu0 0
      %734 = vmatprep.subr.bf16.mxu0 0
      %735 = vmatpush2.bf16.msra.mxu0 0
      %736 = vmatprep.subr.bf16.mxu0 0
      %737 = vmatpush2.bf16.msra.mxu0 0
      %738 = vmatprep.subr.bf16.mxu0 0
      %739 = vmatpush2.bf16.msra.mxu0 0
      %740 = vmatprep.subr.bf16.mxu0 0
      %741 = vmatpush2.bf16.msra.mxu0 0
      %742 = vmatprep.subr.bf16.mxu0 0
      %743 = vmatpush2.bf16.msra.mxu0 0
      %744 = vmatprep.subr.bf16.mxu0 %v546
      %745 = vmatpush2.bf16.msra.mxu0 %v552
      %746 = vmatprep.mubr.bf16.mxu0 %v603
      %747 = vmatmul.mubr.bf16.gmra.mxu0 %v595
      %v748 = vpop.f32.mrf.mxu0
      %v749 = vadd.f32 %v566, %v748
      %v750 = vpop.f32.mrf.mxu0
      %v751 = vadd.f32 %v566, %v750
      %v752 = vpop.f32.mrf.mxu0
      %v753 = vadd.f32 %v571, %v752
      %v754 = vpop.f32.mrf.mxu0
      %v755 = vadd.f32 %v571, %v754
      %756 = vmatprep.mubr.bf16.mxu0 %v606
      %757 = vmatmul.mubr.bf16.gmra.mxu0 %v597
      %v758 = vpop.f32.mrf.mxu0
      %v759 = vadd.f32 %v576, %v758
      %v760 = vpop.f32.mrf.mxu0
      %v761 = vadd.f32 %v576, %v760
      %v762 = vpop.f32.mrf.mxu0
      %v763 = vadd.f32 %v581, %v762
      %v764 = vpop.f32.mrf.mxu0
      %v765 = vadd.f32 %v581, %v764
      %766 = vdwg.mxu0
      %v767 = vld [vmem:[%s320] sm:$0xff]
      %v768 = vld [vmem:[%s320 + $0x8] sm:$0xff]
      %v769 = vld [vmem:[%s320 + $0x10] sm:$0xff]
      %v770 = vld [vmem:[%s320 + $0x18] sm:$0xff]
      %772 = vset.pattern.permute.xlu0 0
      %773 = vperm.xlu0 %772, %v767
      %v774 = vpop.permute.xlu0 %773
      %777 = vset.pattern.permute.xlu0 0
      %778 = vperm.xlu0 %777, %v768
      %v779 = vpop.permute.xlu0 %778
      %782 = vset.pattern.permute.xlu0 0
      %783 = vperm.xlu0 %782, %v769
      %v784 = vpop.permute.xlu0 %783
      %787 = vset.pattern.permute.xlu0 0
      %788 = vperm.xlu0 %787, %v770
      %v789 = vpop.permute.xlu0 %788
      %v791 = vadd.f32 %v643, %v774
      %v792 = vadd.f32 %v645, %v774
      %v793 = vadd.f32 %v696, %v774
      %v794 = vadd.f32 %v698, %v774
      %v795 = vadd.f32 %v749, %v774
      %v796 = vadd.f32 %v751, %v774
      %v797 = vadd.f32 %v647, %v779
      %v798 = vadd.f32 %v649, %v779
      %v799 = vadd.f32 %v700, %v779
      %v800 = vadd.f32 %v702, %v779
      %v801 = vadd.f32 %v753, %v779
      %v802 = vadd.f32 %v755, %v779
      %v803 = vadd.f32 %v653, %v784
      %v804 = vadd.f32 %v655, %v784
      %v805 = vadd.f32 %v706, %v784
      %v806 = vadd.f32 %v708, %v784
      %v807 = vadd.f32 %v759, %v784
      %v808 = vadd.f32 %v761, %v784
      %v809 = vadd.f32 %v657, %v789
      %v810 = vadd.f32 %v659, %v789
      %v811 = vadd.f32 %v710, %v789
      %v812 = vadd.f32 %v712, %v789
      %v813 = vadd.f32 %v763, %v789
      %v814 = vadd.f32 %v765, %v789
      %v815 = vxor.u32 %v791, 2147483648
      %v816 = vxor.u32 %v792, 2147483648
      %v817 = vxor.u32 %v793, 2147483648
      %v818 = vxor.u32 %v794, 2147483648
      %v819 = vxor.u32 %v795, 2147483648
      %v820 = vxor.u32 %v796, 2147483648
      %v821 = vxor.u32 %v797, 2147483648
      %v822 = vxor.u32 %v798, 2147483648
      %v823 = vxor.u32 %v799, 2147483648
      %v824 = vxor.u32 %v800, 2147483648
      %v825 = vxor.u32 %v801, 2147483648
      %v826 = vxor.u32 %v802, 2147483648
      %v827 = vxor.u32 %v803, 2147483648
      %v828 = vxor.u32 %v804, 2147483648
      %v829 = vxor.u32 %v805, 2147483648
      %v830 = vxor.u32 %v806, 2147483648
      %v831 = vxor.u32 %v807, 2147483648
      %v832 = vxor.u32 %v808, 2147483648
      %v833 = vxor.u32 %v809, 2147483648
      %v834 = vxor.u32 %v810, 2147483648
      %v835 = vxor.u32 %v811, 2147483648
      %v836 = vxor.u32 %v812, 2147483648
      %v837 = vxor.u32 %v813, 2147483648
      %v838 = vxor.u32 %v814, 2147483648
      %v839 = vmul.f32 %v815, 1.442695
      %v840 = vpow.pop %v839
      %v841 = vmul.f32 %v816, 1.442695
      %v842 = vpow.pop %v841
      %v843 = vmul.f32 %v817, 1.442695
      %v844 = vpow.pop %v843
      %v845 = vmul.f32 %v818, 1.442695
      %v846 = vpow.pop %v845
      %v847 = vmul.f32 %v819, 1.442695
      %v848 = vpow.pop %v847
      %v849 = vmul.f32 %v820, 1.442695
      %v850 = vpow.pop %v849
      %v851 = vmul.f32 %v821, 1.442695
      %v852 = vpow.pop %v851
      %v853 = vmul.f32 %v822, 1.442695
      %v854 = vpow.pop %v853
      %v855 = vmul.f32 %v823, 1.442695
      %v856 = vpow.pop %v855
      %v857 = vmul.f32 %v824, 1.442695
      %v858 = vpow.pop %v857
      %v859 = vmul.f32 %v825, 1.442695
      %v860 = vpow.pop %v859
      %v861 = vmul.f32 %v826, 1.442695
      %v862 = vpow.pop %v861
      %v863 = vmul.f32 %v827, 1.442695
      %v864 = vpow.pop %v863
      %v865 = vmul.f32 %v828, 1.442695
      %v866 = vpow.pop %v865
      %v867 = vmul.f32 %v829, 1.442695
      %v868 = vpow.pop %v867
      %v869 = vmul.f32 %v830, 1.442695
      %v870 = vpow.pop %v869
      %v871 = vmul.f32 %v831, 1.442695
      %v872 = vpow.pop %v871
      %v873 = vmul.f32 %v832, 1.442695
      %v874 = vpow.pop %v873
      %v875 = vmul.f32 %v833, 1.442695
      %v876 = vpow.pop %v875
      %v877 = vmul.f32 %v834, 1.442695
      %v878 = vpow.pop %v877
      %v879 = vmul.f32 %v835, 1.442695
      %v880 = vpow.pop %v879
      %v881 = vmul.f32 %v836, 1.442695
      %v882 = vpow.pop %v881
      %v883 = vmul.f32 %v837, 1.442695
      %v884 = vpow.pop %v883
      %v885 = vmul.f32 %v838, 1.442695
      %v886 = vpow.pop %v885
      %v887 = vadd.f32 %v840, 1.0
      %v888 = vadd.f32 %v842, 1.0
      %v889 = vadd.f32 %v844, 1.0
      %v890 = vadd.f32 %v846, 1.0
      %v891 = vadd.f32 %v848, 1.0
      %v892 = vadd.f32 %v850, 1.0
      %v893 = vadd.f32 %v852, 1.0
      %v894 = vadd.f32 %v854, 1.0
      %v895 = vadd.f32 %v856, 1.0
      %v896 = vadd.f32 %v858, 1.0
      %v897 = vadd.f32 %v860, 1.0
      %v898 = vadd.f32 %v862, 1.0
      %v899 = vadd.f32 %v864, 1.0
      %v900 = vadd.f32 %v866, 1.0
      %v901 = vadd.f32 %v868, 1.0
      %v902 = vadd.f32 %v870, 1.0
      %v903 = vadd.f32 %v872, 1.0
      %v904 = vadd.f32 %v874, 1.0
      %v905 = vadd.f32 %v876, 1.0
      %v906 = vadd.f32 %v878, 1.0
      %v907 = vadd.f32 %v880, 1.0
      %v908 = vadd.f32 %v882, 1.0
      %v909 = vadd.f32 %v884, 1.0
      %v910 = vadd.f32 %v886, 1.0
      %v911 = vrcp.pop %v887
      %v912 = vmul.f32 1.0, %v911
      %v913 = vrcp.pop %v888
      %v914 = vmul.f32 1.0, %v913
      %v915 = vrcp.pop %v889
      %v916 = vmul.f32 1.0, %v915
      %v917 = vrcp.pop %v890
      %v918 = vmul.f32 1.0, %v917
      %v919 = vrcp.pop %v891
      %v920 = vmul.f32 1.0, %v919
      %v921 = vrcp.pop %v892
      %v922 = vmul.f32 1.0, %v921
      %v923 = vrcp.pop %v893
      %v924 = vmul.f32 1.0, %v923
      %v925 = vrcp.pop %v894
      %v926 = vmul.f32 1.0, %v925
      %v927 = vrcp.pop %v895
      %v928 = vmul.f32 1.0, %v927
      %v929 = vrcp.pop %v896
      %v930 = vmul.f32 1.0, %v929
      %v931 = vrcp.pop %v897
      %v932 = vmul.f32 1.0, %v931
      %v933 = vrcp.pop %v898
      %v934 = vmul.f32 1.0, %v933
      %v935 = vrcp.pop %v899
      %v936 = vmul.f32 1.0, %v935
      %v937 = vrcp.pop %v900
      %v938 = vmul.f32 1.0, %v937
      %v939 = vrcp.pop %v901
      %v940 = vmul.f32 1.0, %v939
      %v941 = vrcp.pop %v902
      %v942 = vmul.f32 1.0, %v941
      %v943 = vrcp.pop %v903
      %v944 = vmul.f32 1.0, %v943
      %v945 = vrcp.pop %v904
      %v946 = vmul.f32 1.0, %v945
      %v947 = vrcp.pop %v905
      %v948 = vmul.f32 1.0, %v947
      %v949 = vrcp.pop %v906
      %v950 = vmul.f32 1.0, %v949
      %v951 = vrcp.pop %v907
      %v952 = vmul.f32 1.0, %v951
      %v953 = vrcp.pop %v908
      %v954 = vmul.f32 1.0, %v953
      %v955 = vrcp.pop %v909
      %v956 = vmul.f32 1.0, %v955
      %v957 = vrcp.pop %v910
      %v958 = vmul.f32 1.0, %v957
      %v959 = vmul.f32 %v791, %v912
      %v960 = vmul.f32 %v792, %v914
      %v961 = vmul.f32 %v793, %v916
      %v962 = vmul.f32 %v794, %v918
      %v963 = vmul.f32 %v795, %v920
      %v964 = vmul.f32 %v796, %v922
      %v965 = vmul.f32 %v797, %v924
      %v966 = vmul.f32 %v798, %v926
      %v967 = vmul.f32 %v799, %v928
      %v968 = vmul.f32 %v800, %v930
      %v969 = vmul.f32 %v801, %v932
      %v970 = vmul.f32 %v802, %v934
      %v971 = vmul.f32 %v803, %v936
      %v972 = vmul.f32 %v804, %v938
      %v973 = vmul.f32 %v805, %v940
      %v974 = vmul.f32 %v806, %v942
      %v975 = vmul.f32 %v807, %v944
      %v976 = vmul.f32 %v808, %v946
      %v977 = vmul.f32 %v809, %v948
      %v978 = vmul.f32 %v810, %v950
      %v979 = vmul.f32 %v811, %v952
      %v980 = vmul.f32 %v812, %v954
      %v981 = vmul.f32 %v813, %v956
      %v982 = vmul.f32 %v814, %v958
      %v983 = vld [vmem:[%s6] sm:$0x3f]
      %v985 = vlaneseq
      %v986 = vshrl.u32 %v985, 7
      %v987 = vsub.s32 0, %v986
      %v988 = vrot.slane %v983, %v987
      %v989 = vlaneseq
      %v990 = vshrl.u32 %v989, 7
      %v991 = vsub.s32 1, %v990
      %v992 = vrot.slane %v983, %v991
      %v993 = vlaneseq
      %v994 = vshrl.u32 %v993, 7
      %v995 = vsub.s32 2, %v994
      %v996 = vrot.slane %v983, %v995
      %v997 = vlaneseq
      %v998 = vshrl.u32 %v997, 7
      %v999 = vsub.s32 3, %v998
      %v1000 = vrot.slane %v983, %v999
      %v1001 = vlaneseq
      %v1002 = vshrl.u32 %v1001, 7
      %v1003 = vsub.s32 4, %v1002
      %v1004 = vrot.slane %v983, %v1003
      %v1005 = vlaneseq
      %v1006 = vshrl.u32 %v1005, 7
      %v1007 = vsub.s32 5, %v1006
      %v1008 = vrot.slane %v983, %v1007
      %v1015 = vmul.f32 %v959, %v988
      %v1016 = vmul.f32 %v960, %v992
      %v1017 = vmul.f32 %v961, %v996
      %v1018 = vmul.f32 %v962, %v1000
      %v1019 = vmul.f32 %v963, %v1004
      %v1020 = vmul.f32 %v964, %v1008
      %v1021 = vmul.f32 %v965, %v988
      %v1022 = vmul.f32 %v966, %v992
      %v1023 = vmul.f32 %v967, %v996
      %v1024 = vmul.f32 %v968, %v1000
      %v1025 = vmul.f32 %v969, %v1004
      %v1026 = vmul.f32 %v970, %v1008
      %v1027 = vmul.f32 %v971, %v988
      %v1028 = vmul.f32 %v972, %v992
      %v1029 = vmul.f32 %v973, %v996
      %v1030 = vmul.f32 %v974, %v1000
      %v1031 = vmul.f32 %v975, %v1004
      %v1032 = vmul.f32 %v976, %v1008
      %v1033 = vmul.f32 %v977, %v988
      %v1034 = vmul.f32 %v978, %v992
      %v1035 = vmul.f32 %v979, %v996
      %v1036 = vmul.f32 %v980, %v1000
      %v1037 = vmul.f32 %v981, %v1004
      %v1038 = vmul.f32 %v982, %v1008
      %v1039 = vpack.c.bf16 %v1021, %v1015
      %v1040 = vpack.c.bf16 %v1022, %v1016
      %v1041 = vpack.c.bf16 %v1023, %v1017
      %v1042 = vpack.c.bf16 %v1024, %v1018
      %v1043 = vpack.c.bf16 %v1025, %v1019
      %v1044 = vpack.c.bf16 %v1026, %v1020
      %v1045 = vpack.c.bf16 %v1033, %v1027
      %v1046 = vpack.c.bf16 %v1034, %v1028
      %v1047 = vpack.c.bf16 %v1035, %v1029
      %v1048 = vpack.c.bf16 %v1036, %v1030
      %v1049 = vpack.c.bf16 %v1037, %v1031
      %v1050 = vpack.c.bf16 %v1038, %v1032
      %v1051 = vld [vmem:[%s4] sm:$0x77]
      %v1052 = vld [vmem:[%s4 + $0x8] sm:$0x7]
      %1065 = vrot.lane.b32.xlu0 %v1039, 127
      %v1066 = vpop.permute.xlu0 %1065
      %1067 = vrot.lane.b32.xlu0 %v1040, 127
      %v1068 = vpop.permute.xlu0 %1067
      %1069 = vrot.lane.b32.xlu0 %v1041, 127
      %v1070 = vpop.permute.xlu0 %1069
      %1071 = vrot.lane.b32.xlu0 %v1042, 127
      %v1072 = vpop.permute.xlu0 %1071
      %1073 = vrot.lane.b32.xlu0 %v1043, 127
      %v1074 = vpop.permute.xlu0 %1073
      %1075 = vrot.lane.b32.xlu0 %v1044, 127
      %v1076 = vpop.permute.xlu0 %1075
      %1077 = vrot.lane.b32.xlu0 %v1045, 127
      %v1078 = vpop.permute.xlu0 %1077
      %1079 = vrot.lane.b32.xlu0 %v1046, 127
      %v1080 = vpop.permute.xlu0 %1079
      %1081 = vrot.lane.b32.xlu0 %v1047, 127
      %v1082 = vpop.permute.xlu0 %1081
      %1083 = vrot.lane.b32.xlu0 %v1048, 127
      %v1084 = vpop.permute.xlu0 %1083
      %1085 = vrot.lane.b32.xlu0 %v1049, 127
      %v1086 = vpop.permute.xlu0 %1085
      %1087 = vrot.lane.b32.xlu0 %v1050, 127
      %v1088 = vpop.permute.xlu0 %1087
      %v1089 = vsel %vm379, %v1066, %v1068
      %v1090 = vsel %vm379, %v1068, %v1070
      %v1091 = vsel %vm379, %v1070, %v1072
      %v1092 = vsel %vm379, %v1072, %v1074
      %v1093 = vsel %vm379, %v1074, %v1076
      %v1094 = vsel %vm379, %v1078, %v1080
      %v1095 = vsel %vm379, %v1080, %v1082
      %v1096 = vsel %vm379, %v1082, %v1084
      %v1097 = vsel %vm379, %v1084, %v1086
      %v1098 = vsel %vm379, %v1086, %v1088
      %1109 = vrot.lane.b32.xlu0 %v1039, 126
      %v1110 = vpop.permute.xlu0 %1109
      %1111 = vrot.lane.b32.xlu0 %v1040, 126
      %v1112 = vpop.permute.xlu0 %1111
      %1113 = vrot.lane.b32.xlu0 %v1041, 126
      %v1114 = vpop.permute.xlu0 %1113
      %1115 = vrot.lane.b32.xlu0 %v1042, 126
      %v1116 = vpop.permute.xlu0 %1115
      %1117 = vrot.lane.b32.xlu0 %v1043, 126
      %v1118 = vpop.permute.xlu0 %1117
      %1119 = vrot.lane.b32.xlu0 %v1044, 126
      %v1120 = vpop.permute.xlu0 %1119
      %1121 = vrot.lane.b32.xlu0 %v1045, 126
      %v1122 = vpop.permute.xlu0 %1121
      %1123 = vrot.lane.b32.xlu0 %v1046, 126
      %v1124 = vpop.permute.xlu0 %1123
      %1125 = vrot.lane.b32.xlu0 %v1047, 126
      %v1126 = vpop.permute.xlu0 %1125
      %1127 = vrot.lane.b32.xlu0 %v1048, 126
      %v1128 = vpop.permute.xlu0 %1127
      %1129 = vrot.lane.b32.xlu0 %v1049, 126
      %v1130 = vpop.permute.xlu0 %1129
      %1131 = vrot.lane.b32.xlu0 %v1050, 126
      %v1132 = vpop.permute.xlu0 %1131
      %v1133 = vsel %vm403, %v1110, %v1112
      %v1134 = vsel %vm403, %v1112, %v1114
      %v1135 = vsel %vm403, %v1114, %v1116
      %v1136 = vsel %vm403, %v1116, %v1118
      %v1137 = vsel %vm403, %v1118, %v1120
      %v1138 = vsel %vm403, %v1122, %v1124
      %v1139 = vsel %vm403, %v1124, %v1126
      %v1140 = vsel %vm403, %v1126, %v1128
      %v1141 = vsel %vm403, %v1128, %v1130
      %v1142 = vsel %vm403, %v1130, %v1132
      %1153 = vrot.lane.b32.xlu0 %v1039, 104
      %v1154 = vpop.permute.xlu0 %1153
      %1155 = vrot.lane.b32.xlu0 %v1040, 104
      %v1156 = vpop.permute.xlu0 %1155
      %1157 = vrot.lane.b32.xlu0 %v1041, 104
      %v1158 = vpop.permute.xlu0 %1157
      %1159 = vrot.lane.b32.xlu0 %v1042, 104
      %v1160 = vpop.permute.xlu0 %1159
      %1161 = vrot.lane.b32.xlu0 %v1043, 104
      %v1162 = vpop.permute.xlu0 %1161
      %1163 = vrot.lane.b32.xlu0 %v1044, 104
      %v1164 = vpop.permute.xlu0 %1163
      %1165 = vrot.lane.b32.xlu0 %v1045, 104
      %v1166 = vpop.permute.xlu0 %1165
      %1167 = vrot.lane.b32.xlu0 %v1046, 104
      %v1168 = vpop.permute.xlu0 %1167
      %1169 = vrot.lane.b32.xlu0 %v1047, 104
      %v1170 = vpop.permute.xlu0 %1169
      %1171 = vrot.lane.b32.xlu0 %v1048, 104
      %v1172 = vpop.permute.xlu0 %1171
      %1173 = vrot.lane.b32.xlu0 %v1049, 104
      %v1174 = vpop.permute.xlu0 %1173
      %1175 = vrot.lane.b32.xlu0 %v1050, 104
      %v1176 = vpop.permute.xlu0 %1175
      %v1177 = vsel %vm427, %v1154, %v1156
      %v1178 = vsel %vm427, %v1156, %v1158
      %v1179 = vsel %vm427, %v1158, %v1160
      %v1180 = vsel %vm427, %v1160, %v1162
      %v1181 = vsel %vm427, %v1162, %v1164
      %v1182 = vsel %vm427, %v1166, %v1168
      %v1183 = vsel %vm427, %v1168, %v1170
      %v1184 = vsel %vm427, %v1170, %v1172
      %v1185 = vsel %vm427, %v1172, %v1174
      %v1186 = vsel %vm427, %v1174, %v1176
      %1197 = vrot.lane.b32.xlu0 %v1039, 103
      %v1198 = vpop.permute.xlu0 %1197
      %1199 = vrot.lane.b32.xlu0 %v1040, 103
      %v1200 = vpop.permute.xlu0 %1199
      %1201 = vrot.lane.b32.xlu0 %v1041, 103
      %v1202 = vpop.permute.xlu0 %1201
      %1203 = vrot.lane.b32.xlu0 %v1042, 103
      %v1204 = vpop.permute.xlu0 %1203
      %1205 = vrot.lane.b32.xlu0 %v1043, 103
      %v1206 = vpop.permute.xlu0 %1205
      %1207 = vrot.lane.b32.xlu0 %v1044, 103
      %v1208 = vpop.permute.xlu0 %1207
      %1209 = vrot.lane.b32.xlu0 %v1045, 103
      %v1210 = vpop.permute.xlu0 %1209
      %1211 = vrot.lane.b32.xlu0 %v1046, 103
      %v1212 = vpop.permute.xlu0 %1211
      %1213 = vrot.lane.b32.xlu0 %v1047, 103
      %v1214 = vpop.permute.xlu0 %1213
      %1215 = vrot.lane.b32.xlu0 %v1048, 103
      %v1216 = vpop.permute.xlu0 %1215
      %1217 = vrot.lane.b32.xlu0 %v1049, 103
      %v1218 = vpop.permute.xlu0 %1217
      %1219 = vrot.lane.b32.xlu0 %v1050, 103
      %v1220 = vpop.permute.xlu0 %1219
      %v1221 = vsel %vm451, %v1198, %v1200
      %v1222 = vsel %vm451, %v1200, %v1202
      %v1223 = vsel %vm451, %v1202, %v1204
      %v1224 = vsel %vm451, %v1204, %v1206
      %v1225 = vsel %vm451, %v1206, %v1208
      %v1226 = vsel %vm451, %v1210, %v1212
      %v1227 = vsel %vm451, %v1212, %v1214
      %v1228 = vsel %vm451, %v1214, %v1216
      %v1229 = vsel %vm451, %v1216, %v1218
      %v1230 = vsel %vm451, %v1218, %v1220
      %1241 = vrot.lane.b32.xlu0 %v1039, 102
      %v1242 = vpop.permute.xlu0 %1241
      %1243 = vrot.lane.b32.xlu0 %v1040, 102
      %v1244 = vpop.permute.xlu0 %1243
      %1245 = vrot.lane.b32.xlu0 %v1041, 102
      %v1246 = vpop.permute.xlu0 %1245
      %1247 = vrot.lane.b32.xlu0 %v1042, 102
      %v1248 = vpop.permute.xlu0 %1247
      %1249 = vrot.lane.b32.xlu0 %v1043, 102
      %v1250 = vpop.permute.xlu0 %1249
      %1251 = vrot.lane.b32.xlu0 %v1044, 102
      %v1252 = vpop.permute.xlu0 %1251
      %1253 = vrot.lane.b32.xlu0 %v1045, 102
      %v1254 = vpop.permute.xlu0 %1253
      %1255 = vrot.lane.b32.xlu0 %v1046, 102
      %v1256 = vpop.permute.xlu0 %1255
      %1257 = vrot.lane.b32.xlu0 %v1047, 102
      %v1258 = vpop.permute.xlu0 %1257
      %1259 = vrot.lane.b32.xlu0 %v1048, 102
      %v1260 = vpop.permute.xlu0 %1259
      %1261 = vrot.lane.b32.xlu0 %v1049, 102
      %v1262 = vpop.permute.xlu0 %1261
      %1263 = vrot.lane.b32.xlu0 %v1050, 102
      %v1264 = vpop.permute.xlu0 %1263
      %v1265 = vsel %vm475, %v1242, %v1244
      %v1266 = vsel %vm475, %v1244, %v1246
      %v1267 = vsel %vm475, %v1246, %v1248
      %v1268 = vsel %vm475, %v1248, %v1250
      %v1269 = vsel %vm475, %v1250, %v1252
      %v1270 = vsel %vm475, %v1254, %v1256
      %v1271 = vsel %vm475, %v1256, %v1258
      %v1272 = vsel %vm475, %v1258, %v1260
      %v1273 = vsel %vm475, %v1260, %v1262
      %v1274 = vsel %vm475, %v1262, %v1264
      %1285 = vrot.lane.b32.xlu0 %v1039, 80
      %v1286 = vpop.permute.xlu0 %1285
      %1287 = vrot.lane.b32.xlu0 %v1040, 80
      %v1288 = vpop.permute.xlu0 %1287
      %1289 = vrot.lane.b32.xlu0 %v1041, 80
      %v1290 = vpop.permute.xlu0 %1289
      %1291 = vrot.lane.b32.xlu0 %v1042, 80
      %v1292 = vpop.permute.xlu0 %1291
      %1293 = vrot.lane.b32.xlu0 %v1043, 80
      %v1294 = vpop.permute.xlu0 %1293
      %1295 = vrot.lane.b32.xlu0 %v1044, 80
      %v1296 = vpop.permute.xlu0 %1295
      %1297 = vrot.lane.b32.xlu0 %v1045, 80
      %v1298 = vpop.permute.xlu0 %1297
      %1299 = vrot.lane.b32.xlu0 %v1046, 80
      %v1300 = vpop.permute.xlu0 %1299
      %1301 = vrot.lane.b32.xlu0 %v1047, 80
      %v1302 = vpop.permute.xlu0 %1301
      %1303 = vrot.lane.b32.xlu0 %v1048, 80
      %v1304 = vpop.permute.xlu0 %1303
      %1305 = vrot.lane.b32.xlu0 %v1049, 80
      %v1306 = vpop.permute.xlu0 %1305
      %1307 = vrot.lane.b32.xlu0 %v1050, 80
      %v1308 = vpop.permute.xlu0 %1307
      %v1309 = vsel %vm499, %v1286, %v1288
      %v1310 = vsel %vm499, %v1288, %v1290
      %v1311 = vsel %vm499, %v1290, %v1292
      %v1312 = vsel %vm499, %v1292, %v1294
      %v1313 = vsel %vm499, %v1294, %v1296
      %v1314 = vsel %vm499, %v1298, %v1300
      %v1315 = vsel %vm499, %v1300, %v1302
      %v1316 = vsel %vm499, %v1302, %v1304
      %v1317 = vsel %vm499, %v1304, %v1306
      %v1318 = vsel %vm499, %v1306, %v1308
      %1329 = vrot.lane.b32.xlu0 %v1039, 79
      %v1330 = vpop.permute.xlu0 %1329
      %1331 = vrot.lane.b32.xlu0 %v1040, 79
      %v1332 = vpop.permute.xlu0 %1331
      %1333 = vrot.lane.b32.xlu0 %v1041, 79
      %v1334 = vpop.permute.xlu0 %1333
      %1335 = vrot.lane.b32.xlu0 %v1042, 79
      %v1336 = vpop.permute.xlu0 %1335
      %1337 = vrot.lane.b32.xlu0 %v1043, 79
      %v1338 = vpop.permute.xlu0 %1337
      %1339 = vrot.lane.b32.xlu0 %v1044, 79
      %v1340 = vpop.permute.xlu0 %1339
      %1341 = vrot.lane.b32.xlu0 %v1045, 79
      %v1342 = vpop.permute.xlu0 %1341
      %1343 = vrot.lane.b32.xlu0 %v1046, 79
      %v1344 = vpop.permute.xlu0 %1343
      %1345 = vrot.lane.b32.xlu0 %v1047, 79
      %v1346 = vpop.permute.xlu0 %1345
      %1347 = vrot.lane.b32.xlu0 %v1048, 79
      %v1348 = vpop.permute.xlu0 %1347
      %1349 = vrot.lane.b32.xlu0 %v1049, 79
      %v1350 = vpop.permute.xlu0 %1349
      %1351 = vrot.lane.b32.xlu0 %v1050, 79
      %v1352 = vpop.permute.xlu0 %1351
      %v1353 = vsel %vm523, %v1330, %v1332
      %v1354 = vsel %vm523, %v1332, %v1334
      %v1355 = vsel %vm523, %v1334, %v1336
      %v1356 = vsel %vm523, %v1336, %v1338
      %v1357 = vsel %vm523, %v1338, %v1340
      %v1358 = vsel %vm523, %v1342, %v1344
      %v1359 = vsel %vm523, %v1344, %v1346
      %v1360 = vsel %vm523, %v1346, %v1348
      %v1361 = vsel %vm523, %v1348, %v1350
      %v1362 = vsel %vm523, %v1350, %v1352
      %1373 = vrot.lane.b32.xlu0 %v1039, 78
      %v1374 = vpop.permute.xlu0 %1373
      %1375 = vrot.lane.b32.xlu0 %v1040, 78
      %v1376 = vpop.permute.xlu0 %1375
      %1377 = vrot.lane.b32.xlu0 %v1041, 78
      %v1378 = vpop.permute.xlu0 %1377
      %1379 = vrot.lane.b32.xlu0 %v1042, 78
      %v1380 = vpop.permute.xlu0 %1379
      %1381 = vrot.lane.b32.xlu0 %v1043, 78
      %v1382 = vpop.permute.xlu0 %1381
      %1383 = vrot.lane.b32.xlu0 %v1044, 78
      %v1384 = vpop.permute.xlu0 %1383
      %1385 = vrot.lane.b32.xlu0 %v1045, 78
      %v1386 = vpop.permute.xlu0 %1385
      %1387 = vrot.lane.b32.xlu0 %v1046, 78
      %v1388 = vpop.permute.xlu0 %1387
      %1389 = vrot.lane.b32.xlu0 %v1047, 78
      %v1390 = vpop.permute.xlu0 %1389
      %1391 = vrot.lane.b32.xlu0 %v1048, 78
      %v1392 = vpop.permute.xlu0 %1391
      %1393 = vrot.lane.b32.xlu0 %v1049, 78
      %v1394 = vpop.permute.xlu0 %1393
      %1395 = vrot.lane.b32.xlu0 %v1050, 78
      %v1396 = vpop.permute.xlu0 %1395
      %v1397 = vsel %vm547, %v1374, %v1376
      %v1398 = vsel %vm547, %v1376, %v1378
      %v1399 = vsel %vm547, %v1378, %v1380
      %v1400 = vsel %vm547, %v1380, %v1382
      %v1401 = vsel %vm547, %v1382, %v1384
      %v1402 = vsel %vm547, %v1386, %v1388
      %v1403 = vsel %vm547, %v1388, %v1390
      %v1404 = vsel %vm547, %v1390, %v1392
      %v1405 = vsel %vm547, %v1392, %v1394
      %v1406 = vsel %vm547, %v1394, %v1396
      %v1417 = vld [vmem:[%s5] sm:$0x3f]
      %1419 = vset.pattern.permute.xlu0 0
      %1420 = vperm.xlu0 %1419, %v1417
      %v1421 = vpop.permute.xlu0 %1420
      %v1425 = vunpack.c.l.b16 %v1051
      %v1426 = vunpack.c.h.b16 %v1051
      %v1427 = vunpack.c.l.b16 %v1052
      %v1428 = vpack.c.b16 %v1425, %v1425
      %v1429 = vpack.c.b16 %v1426, %v1426
      %v1430 = vpack.c.b16 %v1427, %v1427
      %vm1433 = vcmask 261120
      %v1435 = vsel %vm1433, %v1430, 0
      %1437 = vmatprep.subr.bf16.mxu0 %v1183
      %1438 = vmatpush1.bf16.msra.mxu0 %v1182
      %1439 = vmatprep.subr.bf16.mxu0 %v1178
      %1440 = vmatpush1.bf16.msra.mxu0 %v1177
      %1441 = vmatprep.subr.bf16.mxu0 %v1139
      %1442 = vmatpush1.bf16.msra.mxu0 %v1138
      %1443 = vmatprep.subr.bf16.mxu0 %v1134
      %1444 = vmatpush1.bf16.msra.mxu0 %v1133
      %1445 = vmatprep.subr.bf16.mxu0 %v1095
      %1446 = vmatpush1.bf16.msra.mxu0 %v1094
      %1447 = vmatprep.subr.bf16.mxu0 %v1090
      %1448 = vmatpush1.bf16.msra.mxu0 %v1089
      %1449 = vmatprep.subr.bf16.mxu0 %v1046
      %1450 = vmatpush1.bf16.msra.mxu0 %v1045
      %1451 = vmatprep.subr.bf16.mxu0 %v1040
      %1452 = vmatpush1.bf16.msra.mxu0 %v1039
      %1453 = vmatprep.subr.bf16.mxu0 %v1359
      %1454 = vmatpush2.bf16.msra.mxu0 %v1358
      %1455 = vmatprep.subr.bf16.mxu0 %v1354
      %1456 = vmatpush2.bf16.msra.mxu0 %v1353
      %1457 = vmatprep.subr.bf16.mxu0 %v1315
      %1458 = vmatpush2.bf16.msra.mxu0 %v1314
      %1459 = vmatprep.subr.bf16.mxu0 %v1310
      %1460 = vmatpush2.bf16.msra.mxu0 %v1309
      %1461 = vmatprep.subr.bf16.mxu0 %v1271
      %1462 = vmatpush2.bf16.msra.mxu0 %v1270
      %1463 = vmatprep.subr.bf16.mxu0 %v1266
      %1464 = vmatpush2.bf16.msra.mxu0 %v1265
      %1465 = vmatprep.subr.bf16.mxu0 %v1227
      %1466 = vmatpush2.bf16.msra.mxu0 %v1226
      %1467 = vmatprep.subr.bf16.mxu0 %v1222
      %1468 = vmatpush2.bf16.msra.mxu0 %v1221
      %1469 = vmatprep.mubr.bf16.mxu0 %v1429
      %1470 = vmatmul.mubr.bf16.gmra.mxu0 %v1428
      %v1471 = vpop.f32.mrf.mxu0
      %v1472 = vadd.f32 %v1421, %v1471
      %v1473 = vpop.f32.mrf.mxu0
      %v1474 = vadd.f32 %v1421, %v1473
      %v1475 = vpop.f32.mrf.mxu0
      %v1476 = vpop.f32.mrf.mxu0
      %1477 = vdwg.mxu0
      %1478 = vmatprep.subr.bf16.mxu0 0
      %1479 = vmatpush1.bf16.msra.mxu0 0
      %1480 = vmatprep.subr.bf16.mxu0 0
      %1481 = vmatpush1.bf16.msra.mxu0 0
      %1482 = vmatprep.subr.bf16.mxu0 0
      %1483 = vmatpush1.bf16.msra.mxu0 0
      %1484 = vmatprep.subr.bf16.mxu0 0
      %1485 = vmatpush1.bf16.msra.mxu0 0
      %1486 = vmatprep.subr.bf16.mxu0 0
      %1487 = vmatpush1.bf16.msra.mxu0 0
      %1488 = vmatprep.subr.bf16.mxu0 0
      %1489 = vmatpush1.bf16.msra.mxu0 0
      %1490 = vmatprep.subr.bf16.mxu0 %v1403
      %1491 = vmatpush1.bf16.msra.mxu0 %v1402
      %1492 = vmatprep.subr.bf16.mxu0 %v1398
      %1493 = vmatpush1.bf16.msra.mxu0 %v1397
      %1494 = vmatprep.subr.bf16.mxu0 0
      %1495 = vmatpush2.bf16.msra.mxu0 0
      %1496 = vmatprep.subr.bf16.mxu0 0
      %1497 = vmatpush2.bf16.msra.mxu0 0
      %1498 = vmatprep.subr.bf16.mxu0 0
      %1499 = vmatpush2.bf16.msra.mxu0 0
      %1500 = vmatprep.subr.bf16.mxu0 0
      %1501 = vmatpush2.bf16.msra.mxu0 0
      %1502 = vmatprep.subr.bf16.mxu0 0
      %1503 = vmatpush2.bf16.msra.mxu0 0
      %1504 = vmatprep.subr.bf16.mxu0 0
      %1505 = vmatpush2.bf16.msra.mxu0 0
      %1506 = vmatprep.subr.bf16.mxu0 0
      %1507 = vmatpush2.bf16.msra.mxu0 0
      %1508 = vmatprep.subr.bf16.mxu0 0
      %1509 = vmatpush2.bf16.msra.mxu0 0
      %1510 = vmatprep.mubr.bf16.mxu0 0
      %1511 = vmatmul.mubr.bf16.gmra.mxu0 %v1435
      %v1512 = vpop.f32.mrf.mxu0
      %v1513 = vadd.f32 %v1472, %v1512
      %v1514 = vpop.f32.mrf.mxu0
      %v1515 = vadd.f32 %v1474, %v1514
      %v1516 = vpop.f32.mrf.mxu0
      %v1517 = vpop.f32.mrf.mxu0
      %1518 = vdwg.mxu0
      %1519 = vmatprep.subr.bf16.mxu0 %v1185
      %1520 = vmatpush1.bf16.msra.mxu0 %v1184
      %1521 = vmatprep.subr.bf16.mxu0 %v1180
      %1522 = vmatpush1.bf16.msra.mxu0 %v1179
      %1523 = vmatprep.subr.bf16.mxu0 %v1141
      %1524 = vmatpush1.bf16.msra.mxu0 %v1140
      %1525 = vmatprep.subr.bf16.mxu0 %v1136
      %1526 = vmatpush1.bf16.msra.mxu0 %v1135
      %1527 = vmatprep.subr.bf16.mxu0 %v1097
      %1528 = vmatpush1.bf16.msra.mxu0 %v1096
      %1529 = vmatprep.subr.bf16.mxu0 %v1092
      %1530 = vmatpush1.bf16.msra.mxu0 %v1091
      %1531 = vmatprep.subr.bf16.mxu0 %v1048
      %1532 = vmatpush1.bf16.msra.mxu0 %v1047
      %1533 = vmatprep.subr.bf16.mxu0 %v1042
      %1534 = vmatpush1.bf16.msra.mxu0 %v1041
      %1535 = vmatprep.subr.bf16.mxu0 %v1361
      %1536 = vmatpush2.bf16.msra.mxu0 %v1360
      %1537 = vmatprep.subr.bf16.mxu0 %v1356
      %1538 = vmatpush2.bf16.msra.mxu0 %v1355
      %1539 = vmatprep.subr.bf16.mxu0 %v1317
      %1540 = vmatpush2.bf16.msra.mxu0 %v1316
      %1541 = vmatprep.subr.bf16.mxu0 %v1312
      %1542 = vmatpush2.bf16.msra.mxu0 %v1311
      %1543 = vmatprep.subr.bf16.mxu0 %v1273
      %1544 = vmatpush2.bf16.msra.mxu0 %v1272
      %1545 = vmatprep.subr.bf16.mxu0 %v1268
      %1546 = vmatpush2.bf16.msra.mxu0 %v1267
      %1547 = vmatprep.subr.bf16.mxu0 %v1229
      %1548 = vmatpush2.bf16.msra.mxu0 %v1228
      %1549 = vmatprep.subr.bf16.mxu0 %v1224
      %1550 = vmatpush2.bf16.msra.mxu0 %v1223
      %1551 = vmatprep.mubr.bf16.mxu0 %v1429
      %1552 = vmatmul.mubr.bf16.gmra.mxu0 %v1428
      %v1553 = vpop.f32.mrf.mxu0
      %v1554 = vadd.f32 %v1421, %v1553
      %v1555 = vpop.f32.mrf.mxu0
      %v1556 = vadd.f32 %v1421, %v1555
      %v1557 = vpop.f32.mrf.mxu0
      %v1558 = vpop.f32.mrf.mxu0
      %1559 = vdwg.mxu0
      %1560 = vmatprep.subr.bf16.mxu0 0
      %1561 = vmatpush1.bf16.msra.mxu0 0
      %1562 = vmatprep.subr.bf16.mxu0 0
      %1563 = vmatpush1.bf16.msra.mxu0 0
      %1564 = vmatprep.subr.bf16.mxu0 0
      %1565 = vmatpush1.bf16.msra.mxu0 0
      %1566 = vmatprep.subr.bf16.mxu0 0
      %1567 = vmatpush1.bf16.msra.mxu0 0
      %1568 = vmatprep.subr.bf16.mxu0 0
      %1569 = vmatpush1.bf16.msra.mxu0 0
      %1570 = vmatprep.subr.bf16.mxu0 0
      %1571 = vmatpush1.bf16.msra.mxu0 0
      %1572 = vmatprep.subr.bf16.mxu0 %v1405
      %1573 = vmatpush1.bf16.msra.mxu0 %v1404
      %1574 = vmatprep.subr.bf16.mxu0 %v1400
      %1575 = vmatpush1.bf16.msra.mxu0 %v1399
      %1576 = vmatprep.subr.bf16.mxu0 0
      %1577 = vmatpush2.bf16.msra.mxu0 0
      %1578 = vmatprep.subr.bf16.mxu0 0
      %1579 = vmatpush2.bf16.msra.mxu0 0
      %1580 = vmatprep.subr.bf16.mxu0 0
      %1581 = vmatpush2.bf16.msra.mxu0 0
      %1582 = vmatprep.subr.bf16.mxu0 0
      %1583 = vmatpush2.bf16.msra.mxu0 0
      %1584 = vmatprep.subr.bf16.mxu0 0
      %1585 = vmatpush2.bf16.msra.mxu0 0
      %1586 = vmatprep.subr.bf16.mxu0 0
      %1587 = vmatpush2.bf16.msra.mxu0 0
      %1588 = vmatprep.subr.bf16.mxu0 0
      %1589 = vmatpush2.bf16.msra.mxu0 0
      %1590 = vmatprep.subr.bf16.mxu0 0
      %1591 = vmatpush2.bf16.msra.mxu0 0
      %1592 = vmatprep.mubr.bf16.mxu0 0
      %1593 = vmatmul.mubr.bf16.gmra.mxu0 %v1435
      %v1594 = vpop.f32.mrf.mxu0
      %v1595 = vadd.f32 %v1554, %v1594
      %v1596 = vpop.f32.mrf.mxu0
      %v1597 = vadd.f32 %v1556, %v1596
      %v1598 = vpop.f32.mrf.mxu0
      %v1599 = vpop.f32.mrf.mxu0
      %1600 = vdwg.mxu0
      %1601 = vmatprep.subr.bf16.mxu0 0
      %1602 = vmatpush1.bf16.msra.mxu0 %v1186
      %1603 = vmatprep.subr.bf16.mxu0 0
      %1604 = vmatpush1.bf16.msra.mxu0 %v1181
      %1605 = vmatprep.subr.bf16.mxu0 0
      %1606 = vmatpush1.bf16.msra.mxu0 %v1142
      %1607 = vmatprep.subr.bf16.mxu0 0
      %1608 = vmatpush1.bf16.msra.mxu0 %v1137
      %1609 = vmatprep.subr.bf16.mxu0 0
      %1610 = vmatpush1.bf16.msra.mxu0 %v1098
      %1611 = vmatprep.subr.bf16.mxu0 0
      %1612 = vmatpush1.bf16.msra.mxu0 %v1093
      %1613 = vmatprep.subr.bf16.mxu0 0
      %1614 = vmatpush1.bf16.msra.mxu0 %v1049
      %1615 = vmatprep.subr.bf16.mxu0 0
      %1616 = vmatpush1.bf16.msra.mxu0 %v1043
      %1617 = vmatprep.subr.bf16.mxu0 0
      %1618 = vmatpush2.bf16.msra.mxu0 %v1362
      %1619 = vmatprep.subr.bf16.mxu0 0
      %1620 = vmatpush2.bf16.msra.mxu0 %v1357
      %1621 = vmatprep.subr.bf16.mxu0 0
      %1622 = vmatpush2.bf16.msra.mxu0 %v1318
      %1623 = vmatprep.subr.bf16.mxu0 0
      %1624 = vmatpush2.bf16.msra.mxu0 %v1313
      %1625 = vmatprep.subr.bf16.mxu0 0
      %1626 = vmatpush2.bf16.msra.mxu0 %v1274
      %1627 = vmatprep.subr.bf16.mxu0 0
      %1628 = vmatpush2.bf16.msra.mxu0 %v1269
      %1629 = vmatprep.subr.bf16.mxu0 0
      %1630 = vmatpush2.bf16.msra.mxu0 %v1230
      %1631 = vmatprep.subr.bf16.mxu0 0
      %1632 = vmatpush2.bf16.msra.mxu0 %v1225
      %1633 = vmatprep.mubr.bf16.mxu0 %v1429
      %1634 = vmatmul.mubr.bf16.gmra.mxu0 %v1428
      %v1635 = vpop.f32.mrf.mxu0
      %v1636 = vadd.f32 %v1421, %v1635
      %v1637 = vpop.f32.mrf.mxu0
      %v1638 = vpop.f32.mrf.mxu0
      %v1639 = vpop.f32.mrf.mxu0
      %1640 = vdwg.mxu0
      %1641 = vmatprep.subr.bf16.mxu0 0
      %1642 = vmatpush1.bf16.msra.mxu0 0
      %1643 = vmatprep.subr.bf16.mxu0 0
      %1644 = vmatpush1.bf16.msra.mxu0 0
      %1645 = vmatprep.subr.bf16.mxu0 0
      %1646 = vmatpush1.bf16.msra.mxu0 0
      %1647 = vmatprep.subr.bf16.mxu0 0
      %1648 = vmatpush1.bf16.msra.mxu0 0
      %1649 = vmatprep.subr.bf16.mxu0 0
      %1650 = vmatpush1.bf16.msra.mxu0 0
      %1651 = vmatprep.subr.bf16.mxu0 0
      %1652 = vmatpush1.bf16.msra.mxu0 0
      %1653 = vmatprep.subr.bf16.mxu0 0
      %1654 = vmatpush1.bf16.msra.mxu0 %v1406
      %1655 = vmatprep.subr.bf16.mxu0 0
      %1656 = vmatpush1.bf16.msra.mxu0 %v1401
      %1657 = vmatprep.subr.bf16.mxu0 0
      %1658 = vmatpush2.bf16.msra.mxu0 0
      %1659 = vmatprep.subr.bf16.mxu0 0
      %1660 = vmatpush2.bf16.msra.mxu0 0
      %1661 = vmatprep.subr.bf16.mxu0 0
      %1662 = vmatpush2.bf16.msra.mxu0 0
      %1663 = vmatprep.subr.bf16.mxu0 0
      %1664 = vmatpush2.bf16.msra.mxu0 0
      %1665 = vmatprep.subr.bf16.mxu0 0
      %1666 = vmatpush2.bf16.msra.mxu0 0
      %1667 = vmatprep.subr.bf16.mxu0 0
      %1668 = vmatpush2.bf16.msra.mxu0 0
      %1669 = vmatprep.subr.bf16.mxu0 0
      %1670 = vmatpush2.bf16.msra.mxu0 0
      %1671 = vmatprep.subr.bf16.mxu0 0
      %1672 = vmatpush2.bf16.msra.mxu0 0
      %1673 = vmatprep.mubr.bf16.mxu0 0
      %1674 = vmatmul.mubr.bf16.gmra.mxu0 %v1435
      %v1675 = vpop.f32.mrf.mxu0
      %v1676 = vadd.f32 %v1636, %v1675
      %v1677 = vpop.f32.mrf.mxu0
      %v1678 = vpop.f32.mrf.mxu0
      %v1679 = vpop.f32.mrf.mxu0
      %1680 = vdwg.mxu0
      %v1681 = vld [vmem:[%s7] sm:$0x1f]
      %v1683 = vlaneseq
      %v1684 = vshrl.u32 %v1683, 7
      %v1685 = vsub.s32 0, %v1684
      %v1686 = vrot.slane %v1681, %v1685
      %v1687 = vlaneseq
      %v1688 = vshrl.u32 %v1687, 7
      %v1689 = vsub.s32 1, %v1688
      %v1690 = vrot.slane %v1681, %v1689
      %v1691 = vlaneseq
      %v1692 = vshrl.u32 %v1691, 7
      %v1693 = vsub.s32 2, %v1692
      %v1694 = vrot.slane %v1681, %v1693
      %v1695 = vlaneseq
      %v1696 = vshrl.u32 %v1695, 7
      %v1697 = vsub.s32 3, %v1696
      %v1698 = vrot.slane %v1681, %v1697
      %v1699 = vlaneseq
      %v1700 = vshrl.u32 %v1699, 7
      %v1701 = vsub.s32 4, %v1700
      %v1702 = vrot.slane %v1681, %v1701
      %v1708 = vmul.f32 %v1513, %v1686
      %v1709 = vmul.f32 %v1515, %v1690
      %v1710 = vmul.f32 %v1595, %v1694
      %v1711 = vmul.f32 %v1597, %v1698
      %v1712 = vmul.f32 %v1676, %v1702
      %v1713 = vpack.c.bf16 %v1708, %v1708
      %v1714 = vpack.c.bf16 %v1709, %v1709
      %v1715 = vpack.c.bf16 %v1710, %v1710
      %v1716 = vpack.c.bf16 %v1711, %v1711
      %v1717 = vpack.c.bf16 %v1712, %v1712
      %v1723 = vunpack.c.l.b16 %v1713
      %v1724 = vunpack.c.l.b16 %v1714
      %v1725 = vunpack.c.l.b16 %v1715
      %v1726 = vunpack.c.l.b16 %v1716
      %v1727 = vunpack.c.l.b16 %v1717
      %v1728 = vpack.c.b16 %v1724, %v1723
      %v1729 = vpack.c.b16 %v1726, %v1725
      %v1730 = vpack.c.b16 %v1727, %v1727
      %1734 = vst [vmem:[%s325] sm:$0x77] %v1728
      %1735 = vst [vmem:[%s325 + $0x8] sm:$0x77] %v1729
      %1736 = vst [vmem:[%s325 + $0x10] sm:$0x7] %v1730
      %p1737 = scmp.lt.s32.totalorder %s19, 1
      %s1738 = scalar_select %p1737, %s19, 1
      %s1739 = smul.addr %s1738, 5
      %s1740 = smul.addr %s1739, 4
      %s1741 = scalar_lea.vmem %s8, %s1740
      // Predicated region
      $region53: #{diff_model_forward.2} parent=51 // pred_check
        %p1742 = pneg %p215
      $region54: #{diff_model_forward.2} parent=51 // pred_check_branch
        %1744 = sbr.rel (%p1742) target = $region56
      $region55: #{diff_model_forward.2} parent=51 // pred_region
        _
      $region56: #{diff_model_forward.2} parent=51 // pred_fallthru
        _
    $region52: #{diff_model_forward.2} parent=5 // pred_fallthru
      _
    %p1745 = scmp.le.s32.totalorder 2, %s14
    // Predicated region
    $region57: #{diff_model_forward.2} parent=5 // pred_check
      %p1746 = pneg %p1745
    $region58: #{diff_model_forward.2} parent=5 // pred_check_branch
      %1748 = sbr.rel (%p1746) target = $region60
    $region59: #{diff_model_forward.2} parent=5 // pred_region
      %s1749 = ssub.s32 %s14, 2
      // Predicated region
      $region61: #{diff_model_forward.2} parent=59 // pred_check
        %p1750 = pneg %p221
      $region62: #{diff_model_forward.2} parent=59 // pred_check_branch
        %1752 = sbr.rel (%p1750) target = $region64
      $region63: #{diff_model_forward.2} parent=59 // pred_region
        %p1753 = scmp.lt.s32.totalorder %s20, 1
        %s1754 = scalar_select %p1753, %s20, 1
        %s1755 = smul.addr %s1754, 5
        %s1756 = smul.addr %s1755, 4
        %s1757 = scalar_lea.vmem %s8, %s1756
      $region64: #{diff_model_forward.2} parent=59 // pred_fallthru
        _
    $region60: #{diff_model_forward.2} parent=5 // pred_fallthru
      _
  $region6: #{diff_model_forward.2} parent=0 // loop_footer
    %s18 = sadd.s32 1, %s14
  $region7: #{diff_model_forward.2} parent=0 // loop_footer_branch
    %13 = sbr.rel target = $region3
  $region8: #{diff_model_forward.2} parent=0 // loop_exit
    _

// kernel: diff_model_forward.3
$region0: #{diff_model_forward.3}
  #allocation0 [shape = 'u32[]', space=smem, size = 0x4, offset = 0x4, fixed_abs, tag = 'smem constant byte address 0x4 - core index']
  #allocation1 [shape = 'u32[144,128]{1,0:T(1,128)}', space=vmem, size = 0x12000, scoped, tag = 'internal scratch']
  %s0 = inlined_call_operand.vmem [shape: bf16[2,2,3,640], index: 0, kind: input, shape index: {}]
  %s1 = inlined_call_operand.vmem [shape: f32[2,3,49], index: 1, kind: input, shape index: {}]
  %s2 = inlined_call_operand.vmem [shape: f32[2,3,1], index: 2, kind: input, shape index: {}]
  %s3 = inlined_call_operand.vmem [shape: f32[2,3,1], index: 3, kind: input, shape index: {}]
  %s4 = inlined_call_operand.vmem [shape: f32[2,3,1], index: 4, kind: input, shape index: {}]
  %s5 = inlined_call_operand.vmem [shape: bf16[2,12,3], index: 5, kind: input, shape index: {}]
  %s6 = inlined_call_operand.vmem [shape: f32[2,12,1], index: 6, kind: input, shape index: {}]
  %s7 = inlined_call_operand.vmem [shape: bf16[2,3,12], index: 7, kind: input, shape index: {}]
  %s8 = inlined_call_operand.vmem [shape: f32[2,3,1], index: 8, kind: input, shape index: {}]
  %s9 = inlined_call_operand.vmem [shape: f32[2,2,3,384], index: 9, kind: output, shape index: {}]
  %s10 = sld [smem:[#allocation0]]
  $region69: #{diff_model_forward.3} parent=0
    _
  %s12 = ssub.s32 1, %s10
  %s13 = scalar_select 0, %s12, %s10
  loop: start=0, step=1, limit=6
  $region2: #{diff_model_forward.3} parent=0 // loop_pre_header
    _
  $region3: #{diff_model_forward.3} parent=0 // loop_header
    %s15 = sphi 0, %s19
    %p16 = scmp.ge.s32.totalorder %s15, 6
    %s22 = sphi 0, %s34
    %s23 = sphi 0, %s30
    %s24 = sphi 0, %s22
    %s25 = sphi 0, %s23
    %s26 = sphi 0, %s24
    %s27 = sphi 0, %s25
    %s41 = sphi 0, %s43
    %s44 = sphi 0, %s41
    %s45 = sphi 0, %s44
    %s61 = sphi 0, %s45
    %s67 = sphi 0, %s69
    %s70 = sphi 0, %s67
    %s71 = sphi 0, %s70
    %s87 = sphi 0, %s71
    %s93 = sphi 0, %s95
    %s96 = sphi 0, %s93
    %s97 = sphi 0, %s96
    %s113 = sphi 0, %s97
    %s119 = sphi 0, %s121
    %s122 = sphi 0, %s119
    %s123 = sphi 0, %s122
    %s139 = sphi 0, %s123
    %s145 = sphi 0, %s147
    %s148 = sphi 0, %s145
    %s149 = sphi 0, %s148
    %s165 = sphi 0, %s149
    %s171 = sphi 0, %s173
    %s174 = sphi 0, %s171
    %s175 = sphi 0, %s174
    %s191 = sphi 0, %s175
    %s197 = sphi 0, %s199
    %s200 = sphi 0, %s197
    %s201 = sphi 0, %s200
    %s217 = sphi 0, %s201
    %s223 = sphi 0, %s225
    %s226 = sphi 0, %s223
    %s227 = sphi 0, %s226
    %s243 = sphi 0, %s227
    %s249 = sphi 0, %s251
    %s252 = sphi 0, %s249
    %s253 = sphi 0, %s252
    %s269 = sphi 0, %s253
    %s277 = sphi 0, %s279
    %s280 = sphi 0, %s277
    %s281 = sphi 0, %s280
    %s297 = sphi 0, %s281
  $region4: #{diff_model_forward.3} parent=0 // loop_header_branch
    %18 = sbr.rel (%p16) target = $region8
  $region5: #{diff_model_forward.3} parent=0 // loop_body
    %s20 = ssub.s32 %s15, 1
    %s21 = ssub.s32 %s15, 2
    %s28 = sadd.s32 1, %s23
    %p29 = scmp.ge.s32.totalorder %s28, 2
    %s30 = scalar_select %p29, 0, %s28
    %s31 = sadd.s32 1, %s22
    %s32 = scalar_select %p29, %s31, %s22
    %p33 = scmp.ge.s32.totalorder %s32, 2
    %s34 = scalar_select %p33, 0, %s32
    %s35 = ssub.s32 1, %s22
    %s36 = ssub.s32 1, %s34
    %s37 = ssub.s32 %s23, %s30
    %s38 = ssub.s32 %s35, %s36
    %s39 = sor.u32 %s37, %s38
    %p40 = scmp.eq.s32.totalorder %s39, 0
    %s42 = sadd.s32 %s41, 1
    %s43 = scalar_select %p40, %s41, %s42
    %p46 = pneg %p40
    %p47 = scmp.eq.s32.totalorder %s15, 3
    %p48 = por %p46, %p47
    %p49 = scmp.ne.s32.totalorder %s41, %s44
    %p50 = scmp.eq.s32.totalorder %s15, 0
    %p51 = por %p49, %p50
    %p52 = scmp.ne.s32.totalorder %s41, %s44
    %p53 = scmp.eq.s32.totalorder %s20, 3
    %p54 = por %p52, %p53
    %p55 = scmp.ne.s32.totalorder %s44, %s45
    %p56 = scmp.eq.s32.totalorder %s20, 0
    %p57 = por %p55, %p56
    %p58 = scmp.ne.s32.totalorder %s44, %s45
    %p59 = scmp.eq.s32.totalorder %s21, 3
    %p60 = por %p58, %p59
    %p62 = scmp.ne.s32.totalorder %s45, %s61
    %p63 = scmp.eq.s32.totalorder %s21, 0
    %p64 = por %p62, %p63
    %s65 = ssub.s32 %s22, %s34
    %p66 = scmp.eq.s32.totalorder %s65, 0
    %s68 = sadd.s32 %s67, 1
    %s69 = scalar_select %p66, %s67, %s68
    %p72 = pneg %p66
    %p73 = scmp.eq.s32.totalorder %s15, 3
    %p74 = por %p72, %p73
    %p75 = scmp.ne.s32.totalorder %s67, %s70
    %p76 = scmp.eq.s32.totalorder %s15, 0
    %p77 = por %p75, %p76
    %p78 = scmp.ne.s32.totalorder %s67, %s70
    %p79 = scmp.eq.s32.totalorder %s20, 3
    %p80 = por %p78, %p79
    %p81 = scmp.ne.s32.totalorder %s70, %s71
    %p82 = scmp.eq.s32.totalorder %s20, 0
    %p83 = por %p81, %p82
    %p84 = scmp.ne.s32.totalorder %s70, %s71
    %p85 = scmp.eq.s32.totalorder %s21, 3
    %p86 = por %p84, %p85
    %p88 = scmp.ne.s32.totalorder %s71, %s87
    %p89 = scmp.eq.s32.totalorder %s21, 0
    %p90 = por %p88, %p89
    %s91 = ssub.s32 %s22, %s34
    %p92 = scmp.eq.s32.totalorder %s91, 0
    %s94 = sadd.s32 %s93, 1
    %s95 = scalar_select %p92, %s93, %s94
    %p98 = pneg %p92
    %p99 = scmp.eq.s32.totalorder %s15, 3
    %p100 = por %p98, %p99
    %p101 = scmp.ne.s32.totalorder %s93, %s96
    %p102 = scmp.eq.s32.totalorder %s15, 0
    %p103 = por %p101, %p102
    %p104 = scmp.ne.s32.totalorder %s93, %s96
    %p105 = scmp.eq.s32.totalorder %s20, 3
    %p106 = por %p104, %p105
    %p107 = scmp.ne.s32.totalorder %s96, %s97
    %p108 = scmp.eq.s32.totalorder %s20, 0
    %p109 = por %p107, %p108
    %p110 = scmp.ne.s32.totalorder %s96, %s97
    %p111 = scmp.eq.s32.totalorder %s21, 3
    %p112 = por %p110, %p111
    %p114 = scmp.ne.s32.totalorder %s97, %s113
    %p115 = scmp.eq.s32.totalorder %s21, 0
    %p116 = por %p114, %p115
    %s117 = ssub.s32 %s22, %s34
    %p118 = scmp.eq.s32.totalorder %s117, 0
    %s120 = sadd.s32 %s119, 1
    %s121 = scalar_select %p118, %s119, %s120
    %p124 = pneg %p118
    %p125 = scmp.eq.s32.totalorder %s15, 3
    %p126 = por %p124, %p125
    %p127 = scmp.ne.s32.totalorder %s119, %s122
    %p128 = scmp.eq.s32.totalorder %s15, 0
    %p129 = por %p127, %p128
    %p130 = scmp.ne.s32.totalorder %s119, %s122
    %p131 = scmp.eq.s32.totalorder %s20, 3
    %p132 = por %p130, %p131
    %p133 = scmp.ne.s32.totalorder %s122, %s123
    %p134 = scmp.eq.s32.totalorder %s20, 0
    %p135 = por %p133, %p134
    %p136 = scmp.ne.s32.totalorder %s122, %s123
    %p137 = scmp.eq.s32.totalorder %s21, 3
    %p138 = por %p136, %p137
    %p140 = scmp.ne.s32.totalorder %s123, %s139
    %p141 = scmp.eq.s32.totalorder %s21, 0
    %p142 = por %p140, %p141
    %s143 = ssub.s32 %s22, %s34
    %p144 = scmp.eq.s32.totalorder %s143, 0
    %s146 = sadd.s32 %s145, 1
    %s147 = scalar_select %p144, %s145, %s146
    %p150 = pneg %p144
    %p151 = scmp.eq.s32.totalorder %s15, 3
    %p152 = por %p150, %p151
    %p153 = scmp.ne.s32.totalorder %s145, %s148
    %p154 = scmp.eq.s32.totalorder %s15, 0
    %p155 = por %p153, %p154
    %p156 = scmp.ne.s32.totalorder %s145, %s148
    %p157 = scmp.eq.s32.totalorder %s20, 3
    %p158 = por %p156, %p157
    %p159 = scmp.ne.s32.totalorder %s148, %s149
    %p160 = scmp.eq.s32.totalorder %s20, 0
    %p161 = por %p159, %p160
    %p162 = scmp.ne.s32.totalorder %s148, %s149
    %p163 = scmp.eq.s32.totalorder %s21, 3
    %p164 = por %p162, %p163
    %p166 = scmp.ne.s32.totalorder %s149, %s165
    %p167 = scmp.eq.s32.totalorder %s21, 0
    %p168 = por %p166, %p167
    %s169 = ssub.s32 %s22, %s34
    %p170 = scmp.eq.s32.totalorder %s169, 0
    %s172 = sadd.s32 %s171, 1
    %s173 = scalar_select %p170, %s171, %s172
    %p176 = pneg %p170
    %p177 = scmp.eq.s32.totalorder %s15, 3
    %p178 = por %p176, %p177
    %p179 = scmp.ne.s32.totalorder %s171, %s174
    %p180 = scmp.eq.s32.totalorder %s15, 0
    %p181 = por %p179, %p180
    %p182 = scmp.ne.s32.totalorder %s171, %s174
    %p183 = scmp.eq.s32.totalorder %s20, 3
    %p184 = por %p182, %p183
    %p185 = scmp.ne.s32.totalorder %s174, %s175
    %p186 = scmp.eq.s32.totalorder %s20, 0
    %p187 = por %p185, %p186
    %p188 = scmp.ne.s32.totalorder %s174, %s175
    %p189 = scmp.eq.s32.totalorder %s21, 3
    %p190 = por %p188, %p189
    %p192 = scmp.ne.s32.totalorder %s175, %s191
    %p193 = scmp.eq.s32.totalorder %s21, 0
    %p194 = por %p192, %p193
    %s195 = ssub.s32 %s22, %s34
    %p196 = scmp.eq.s32.totalorder %s195, 0
    %s198 = sadd.s32 %s197, 1
    %s199 = scalar_select %p196, %s197, %s198
    %p202 = pneg %p196
    %p203 = scmp.eq.s32.totalorder %s15, 3
    %p204 = por %p202, %p203
    %p205 = scmp.ne.s32.totalorder %s197, %s200
    %p206 = scmp.eq.s32.totalorder %s15, 0
    %p207 = por %p205, %p206
    %p208 = scmp.ne.s32.totalorder %s197, %s200
    %p209 = scmp.eq.s32.totalorder %s20, 3
    %p210 = por %p208, %p209
    %p211 = scmp.ne.s32.totalorder %s200, %s201
    %p212 = scmp.eq.s32.totalorder %s20, 0
    %p213 = por %p211, %p212
    %p214 = scmp.ne.s32.totalorder %s200, %s201
    %p215 = scmp.eq.s32.totalorder %s21, 3
    %p216 = por %p214, %p215
    %p218 = scmp.ne.s32.totalorder %s201, %s217
    %p219 = scmp.eq.s32.totalorder %s21, 0
    %p220 = por %p218, %p219
    %s221 = ssub.s32 %s22, %s34
    %p222 = scmp.eq.s32.totalorder %s221, 0
    %s224 = sadd.s32 %s223, 1
    %s225 = scalar_select %p222, %s223, %s224
    %p228 = pneg %p222
    %p229 = scmp.eq.s32.totalorder %s15, 3
    %p230 = por %p228, %p229
    %p231 = scmp.ne.s32.totalorder %s223, %s226
    %p232 = scmp.eq.s32.totalorder %s15, 0
    %p233 = por %p231, %p232
    %p234 = scmp.ne.s32.totalorder %s223, %s226
    %p235 = scmp.eq.s32.totalorder %s20, 3
    %p236 = por %p234, %p235
    %p237 = scmp.ne.s32.totalorder %s226, %s227
    %p238 = scmp.eq.s32.totalorder %s20, 0
    %p239 = por %p237, %p238
    %p240 = scmp.ne.s32.totalorder %s226, %s227
    %p241 = scmp.eq.s32.totalorder %s21, 3
    %p242 = por %p240, %p241
    %p244 = scmp.ne.s32.totalorder %s227, %s243
    %p245 = scmp.eq.s32.totalorder %s21, 0
    %p246 = por %p244, %p245
    %s247 = ssub.s32 %s22, %s34
    %p248 = scmp.eq.s32.totalorder %s247, 0
    %s250 = sadd.s32 %s249, 1
    %s251 = scalar_select %p248, %s249, %s250
    %p254 = pneg %p248
    %p255 = scmp.eq.s32.totalorder %s15, 3
    %p256 = por %p254, %p255
    %p257 = scmp.ne.s32.totalorder %s249, %s252
    %p258 = scmp.eq.s32.totalorder %s15, 0
    %p259 = por %p257, %p258
    %p260 = scmp.ne.s32.totalorder %s249, %s252
    %p261 = scmp.eq.s32.totalorder %s20, 3
    %p262 = por %p260, %p261
    %p263 = scmp.ne.s32.totalorder %s252, %s253
    %p264 = scmp.eq.s32.totalorder %s20, 0
    %p265 = por %p263, %p264
    %p266 = scmp.ne.s32.totalorder %s252, %s253
    %p267 = scmp.eq.s32.totalorder %s21, 3
    %p268 = por %p266, %p267
    %p270 = scmp.ne.s32.totalorder %s253, %s269
    %p271 = scmp.eq.s32.totalorder %s21, 0
    %p272 = por %p270, %p271
    %s273 = ssub.s32 %s22, %s34
    %s274 = ssub.s32 %s23, %s30
    %s275 = sor.u32 %s273, %s274
    %p276 = scmp.eq.s32.totalorder %s275, 0
    %s278 = sadd.s32 %s277, 1
    %s279 = scalar_select %p276, %s277, %s278
    %p282 = pneg %p276
    %p283 = scmp.eq.s32.totalorder %s15, 3
    %p284 = por %p282, %p283
    %p285 = scmp.ne.s32.totalorder %s277, %s280
    %p286 = scmp.eq.s32.totalorder %s15, 0
    %p287 = por %p285, %p286
    %p288 = scmp.ne.s32.totalorder %s277, %s280
    %p289 = scmp.eq.s32.totalorder %s20, 3
    %p290 = por %p288, %p289
    %p291 = scmp.ne.s32.totalorder %s280, %s281
    %p292 = scmp.eq.s32.totalorder %s20, 0
    %p293 = por %p291, %p292
    %p294 = scmp.ne.s32.totalorder %s280, %s281
    %p295 = scmp.eq.s32.totalorder %s21, 3
    %p296 = por %p294, %p295
    %p298 = scmp.ne.s32.totalorder %s281, %s297
    %p299 = scmp.eq.s32.totalorder %s21, 0
    %p300 = por %p298, %p299
    %p301 = scmp.le.s32.totalorder 1, %s15
    %p302 = scmp.lt.s32.totalorder %s15, 5
    %p303 = pnand %p301, %p302
    %p304 = pneg %p303
    // Predicated region
    $region9: #{diff_model_forward.3} parent=5 // pred_check
      _
    $region10: #{diff_model_forward.3} parent=5 // pred_check_branch
      %306 = sbr.rel (%p303) target = $region12
    $region11: #{diff_model_forward.3} parent=5 // pred_region
      %s307 = ssub.s32 %s15, 1
    $region12: #{diff_model_forward.3} parent=5 // pred_fallthru
      _
    %p308 = scmp.lt.s32.totalorder %s15, 4
    // Predicated region
    $region13: #{diff_model_forward.3} parent=5 // pred_check
      %p309 = pneg %p308
    $region14: #{diff_model_forward.3} parent=5 // pred_check_branch
      %311 = sbr.rel (%p309) target = $region16
    $region15: #{diff_model_forward.3} parent=5 // pred_region
      // Predicated region
      $region17: #{diff_model_forward.3} parent=15 // pred_check
        %p312 = pneg %p51
      $region18: #{diff_model_forward.3} parent=15 // pred_check_branch
        %314 = sbr.rel (%p312) target = $region20
      $region19: #{diff_model_forward.3} parent=15 // pred_region
        %s315 = ssub.s32 1, %s22
        %p316 = scmp.lt.s32.totalorder %s23, 1
        %s317 = scalar_select %p316, %s23, 1
        %p318 = scmp.lt.s32.totalorder %s315, 1
        %s319 = scalar_select %p318, %s315, 1
        %s320 = smul.addr %s319, 5
        %s321 = smul.addr %s317, 10
        %s322 = sadd.s32 %s320, %s321
        %s323 = smul.addr %s322, 2
        %s324 = scalar_lea.vmem %s0, %s323
        %s325 = ssub.s32 1, %s22
      $region20: #{diff_model_forward.3} parent=15 // pred_fallthru
        _
      // Predicated region
      $region21: #{diff_model_forward.3} parent=15 // pred_check
        %p326 = pneg %p77
      $region22: #{diff_model_forward.3} parent=15 // pred_check_branch
        %328 = sbr.rel (%p326) target = $region24
      $region23: #{diff_model_forward.3} parent=15 // pred_region
        %p329 = scmp.lt.s32.totalorder %s22, 1
        %s330 = scalar_select %p329, %s22, 1
        %s331 = smul.addr %s330, 4
        %s332 = scalar_lea.vmem %s1, %s331
      $region24: #{diff_model_forward.3} parent=15 // pred_fallthru
        _
      // Predicated region
      $region25: #{diff_model_forward.3} parent=15 // pred_check
        %p333 = pneg %p103
      $region26: #{diff_model_forward.3} parent=15 // pred_check_branch
        %335 = sbr.rel (%p333) target = $region28
      $region27: #{diff_model_forward.3} parent=15 // pred_region
        %p336 = scmp.lt.s32.totalorder %s22, 1
        %s337 = scalar_select %p336, %s22, 1
        %s338 = smul.addr %s337, 4
        %s339 = scalar_lea.vmem %s2, %s338
      $region28: #{diff_model_forward.3} parent=15 // pred_fallthru
        _
      // Predicated region
      $region29: #{diff_model_forward.3} parent=15 // pred_check
        %p340 = pneg %p129
      $region30: #{diff_model_forward.3} parent=15 // pred_check_branch
        %342 = sbr.rel (%p340) target = $region32
      $region31: #{diff_model_forward.3} parent=15 // pred_region
        %p343 = scmp.lt.s32.totalorder %s22, 1
        %s344 = scalar_select %p343, %s22, 1
        %s345 = smul.addr %s344, 4
        %s346 = scalar_lea.vmem %s3, %s345
      $region32: #{diff_model_forward.3} parent=15 // pred_fallthru
        _
      // Predicated region
      $region33: #{diff_model_forward.3} parent=15 // pred_check
        %p347 = pneg %p155
      $region34: #{diff_model_forward.3} parent=15 // pred_check_branch
        %349 = sbr.rel (%p347) target = $region36
      $region35: #{diff_model_forward.3} parent=15 // pred_region
        %p350 = scmp.lt.s32.totalorder %s22, 1
        %s351 = scalar_select %p350, %s22, 1
        %s352 = smul.addr %s351, 4
        %s353 = scalar_lea.vmem %s4, %s352
      $region36: #{diff_model_forward.3} parent=15 // pred_fallthru
        _
      // Predicated region
      $region37: #{diff_model_forward.3} parent=15 // pred_check
        %p354 = pneg %p181
      $region38: #{diff_model_forward.3} parent=15 // pred_check_branch
        %356 = sbr.rel (%p354) target = $region40
      $region39: #{diff_model_forward.3} parent=15 // pred_region
        %p357 = scmp.lt.s32.totalorder %s22, 1
        %s358 = scalar_select %p357, %s22, 1
        %s359 = smul.addr %s358, 2
        %s360 = smul.addr %s359, 4
        %s361 = scalar_lea.vmem %s5, %s360
      $region40: #{diff_model_forward.3} parent=15 // pred_fallthru
        _
      // Predicated region
      $region41: #{diff_model_forward.3} parent=15 // pred_check
        %p362 = pneg %p207
      $region42: #{diff_model_forward.3} parent=15 // pred_check_branch
        %364 = sbr.rel (%p362) target = $region44
      $region43: #{diff_model_forward.3} parent=15 // pred_region
        %p365 = scmp.lt.s32.totalorder %s22, 1
        %s366 = scalar_select %p365, %s22, 1
        %s367 = smul.addr %s366, 2
        %s368 = smul.addr %s367, 8
        %s369 = scalar_lea.vmem %s6, %s368
      $region44: #{diff_model_forward.3} parent=15 // pred_fallthru
        _
      // Predicated region
      $region45: #{diff_model_forward.3} parent=15 // pred_check
        %p370 = pneg %p233
      $region46: #{diff_model_forward.3} parent=15 // pred_check_branch
        %372 = sbr.rel (%p370) target = $region48
      $region47: #{diff_model_forward.3} parent=15 // pred_region
        %p373 = scmp.lt.s32.totalorder %s22, 1
        %s374 = scalar_select %p373, %s22, 1
        %s375 = smul.addr %s374, 2
        %s376 = scalar_lea.vmem %s7, %s375
      $region48: #{diff_model_forward.3} parent=15 // pred_fallthru
        _
      // Predicated region
      $region49: #{diff_model_forward.3} parent=15 // pred_check
        %p377 = pneg %p259
      $region50: #{diff_model_forward.3} parent=15 // pred_check_branch
        %379 = sbr.rel (%p377) target = $region52
      $region51: #{diff_model_forward.3} parent=15 // pred_region
        %p380 = scmp.lt.s32.totalorder %s22, 1
        %s381 = scalar_select %p380, %s22, 1
        %s382 = smul.addr %s381, 4
        %s383 = scalar_lea.vmem %s8, %s382
      $region52: #{diff_model_forward.3} parent=15 // pred_fallthru
        _
    $region16: #{diff_model_forward.3} parent=5 // pred_fallthru
      _
    %p384 = scmp.le.s32.totalorder 1, %s15
    %p385 = scmp.lt.s32.totalorder %s15, 5
    %p386 = pnand %p384, %p385
    %p387 = pneg %p386
    // Predicated region
    $region53: #{diff_model_forward.3} parent=5 // pred_check
      _
    $region54: #{diff_model_forward.3} parent=5 // pred_check_branch
      %389 = sbr.rel (%p386) target = $region56
    $region55: #{diff_model_forward.3} parent=5 // pred_region
      %s390 = ssub.s32 %s15, 1
      %s391 = ssub.s32 1, %s24
      %p392 = scmp.lt.s32.totalorder %s25, 1
      %s393 = scalar_select %p392, %s25, 1
      %p394 = scmp.lt.s32.totalorder %s391, 1
      %s395 = scalar_select %p394, %s391, 1
      %s396 = smul.addr %s395, 5
      %s397 = smul.addr %s393, 10
      %s398 = sadd.s32 %s396, %s397
      %s399 = smul.addr %s398, 2
      %s400 = scalar_lea.vmem %s0, %s399
      %p401 = pneg %p57
      %p402 = pneg %p54
      %p403 = scmp.lt.s32.totalorder %s24, 1
      %s404 = scalar_select %p403, %s24, 1
      %s405 = smul.addr %s404, 4
      %s406 = scalar_lea.vmem %s1, %s405
      %p407 = pneg %p83
      %p408 = pneg %p80
      %p409 = scmp.lt.s32.totalorder %s24, 1
      %s410 = scalar_select %p409, %s24, 1
      %s411 = smul.addr %s410, 4
      %s412 = scalar_lea.vmem %s2, %s411
      %p413 = pneg %p109
      %p414 = pneg %p106
      %p415 = scmp.lt.s32.totalorder %s24, 1
      %s416 = scalar_select %p415, %s24, 1
      %s417 = smul.addr %s416, 4
      %s418 = scalar_lea.vmem %s3, %s417
      %p419 = pneg %p135
      %p420 = pneg %p132
      %p421 = scmp.lt.s32.totalorder %s24, 1
      %s422 = scalar_select %p421, %s24, 1
      %s423 = smul.addr %s422, 4
      %s424 = scalar_lea.vmem %s4, %s423
      %p425 = pneg %p161
      %p426 = pneg %p158
      %p427 = scmp.lt.s32.totalorder %s24, 1
      %s428 = scalar_select %p427, %s24, 1
      %s429 = smul.addr %s428, 2
      %s430 = smul.addr %s429, 4
      %s431 = scalar_lea.vmem %s5, %s430
      %p432 = pneg %p187
      %p433 = pneg %p184
      %p434 = scmp.lt.s32.totalorder %s24, 1
      %s435 = scalar_select %p434, %s24, 1
      %s436 = smul.addr %s435, 2
      %s437 = smul.addr %s436, 8
      %s438 = scalar_lea.vmem %s6, %s437
      %p439 = pneg %p213
      %p440 = pneg %p210
      %p441 = scmp.lt.s32.totalorder %s24, 1
      %s442 = scalar_select %p441, %s24, 1
      %s443 = smul.addr %s442, 2
      %s444 = scalar_lea.vmem %s7, %s443
      %p445 = pneg %p239
      %p446 = pneg %p236
      %p447 = scmp.lt.s32.totalorder %s24, 1
      %s448 = scalar_select %p447, %s24, 1
      %s449 = smul.addr %s448, 4
      %s450 = scalar_lea.vmem %s8, %s449
      %p451 = pneg %p265
      %p452 = pneg %p262
      %p453 = pneg %p293
      %p454 = pneg %p290
      %p455 = scmp.lt.s32.totalorder %s24, 1
      %s456 = scalar_select %p455, %s24, 1
      %p457 = scmp.lt.s32.totalorder %s25, 1
      %s458 = scalar_select %p457, %s25, 1
      %s459 = smul.addr %s458, 3
      %s460 = smul.addr %s456, 6
      %s461 = sadd.s32 %s459, %s460
      %s462 = smul.addr %s461, 4
      %s463 = scalar_lea.vmem %s9, %s462
      %s464 = ssub.s32 1, %s24
      %p465 = scmp.lt.s32.totalorder %s25, 1
      %s466 = scalar_select %p465, %s25, 1
      %p467 = scmp.lt.s32.totalorder %s464, 1
      %s468 = scalar_select %p467, %s464, 1
      %s469 = smul.addr %s468, 5
      %s470 = smul.addr %s466, 10
      %s471 = sadd.s32 %s469, %s470
      %s472 = smul.addr %s471, 2
      %s473 = scalar_lea.vmem %s0, %s472
      %s474 = ssub.s32 1, %s24
      %p475 = scmp.lt.s32.totalorder %s24, 1
      %s476 = scalar_select %p475, %s24, 1
      %s477 = smul.addr %s476, 4
      %s478 = scalar_lea.vmem %s1, %s477
      %p479 = scmp.lt.s32.totalorder %s24, 1
      %s480 = scalar_select %p479, %s24, 1
      %s481 = smul.addr %s480, 4
      %s482 = scalar_lea.vmem %s2, %s481
      %p483 = scmp.lt.s32.totalorder %s24, 1
      %s484 = scalar_select %p483, %s24, 1
      %s485 = smul.addr %s484, 4
      %s486 = scalar_lea.vmem %s3, %s485
      %p487 = scmp.lt.s32.totalorder %s24, 1
      %s488 = scalar_select %p487, %s24, 1
      %s489 = smul.addr %s488, 4
      %s490 = scalar_lea.vmem %s4, %s489
      %p491 = scmp.lt.s32.totalorder %s24, 1
      %s492 = scalar_select %p491, %s24, 1
      %s493 = smul.addr %s492, 2
      %s494 = smul.addr %s493, 4
      %s495 = scalar_lea.vmem %s5, %s494
      %p496 = scmp.lt.s32.totalorder %s24, 1
      %s497 = scalar_select %p496, %s24, 1
      %s498 = smul.addr %s497, 2
      %s499 = smul.addr %s498, 8
      %s500 = scalar_lea.vmem %s6, %s499
      %p501 = scmp.lt.s32.totalorder %s24, 1
      %s502 = scalar_select %p501, %s24, 1
      %s503 = smul.addr %s502, 2
      %s504 = scalar_lea.vmem %s7, %s503
      %p505 = scmp.lt.s32.totalorder %s24, 1
      %s506 = scalar_select %p505, %s24, 1
      %s507 = smul.addr %s506, 4
      %s508 = scalar_lea.vmem %s8, %s507
      %p509 = scmp.lt.s32.totalorder %s24, 1
      %s510 = scalar_select %p509, %s24, 1
      %p511 = scmp.lt.s32.totalorder %s25, 1
      %s512 = scalar_select %p511, %s25, 1
      %s513 = smul.addr %s512, 3
      %s514 = smul.addr %s510, 6
      %s515 = sadd.s32 %s513, %s514
      %s516 = smul.addr %s515, 4
      %s517 = scalar_lea.vmem %s9, %s516
      %v519 = vld [vmem:[%s473] sm:$0xff]
      %v520 = vld [vmem:[%s473 + $0x8] sm:$0x3]
      %v521 = vunpack.c.l.bf16 %v519
      %v522 = vunpack.c.h.bf16 %v519
      %v523 = vunpack.c.l.bf16 %v520
      %v524 = vld [vmem:[%s478] sm:$0x7]
      %526 = vset.pattern.permute.xlu0 0
      %527 = vperm.xlu0 %526, %v524
      %v528 = vpop.permute.xlu0 %527
      %v530 = vunpack.c.l.s4 839922192
      %v531 = vunpack.c.0.s8 %v530
      %v532 = vlaneseq
      %v533 = vshrl.u32 %v532, 7
      %v534 = vsub.s32 %v531, %v533
      %v535 = vrot.slane %v528, %v534
      %v537 = vmul.f32 %v521, %v535
      %v538 = vmul.f32 %v522, %v535
      %v539 = vadd.f32 %v537, 0.0
      %v540 = vadd.f32 %v538, 0.0
      %541 = vset.pattern.permute.xlu0 1
      %542 = vperm.xlu0 %541, %v524
      %v543 = vpop.permute.xlu0 %542
      %v545 = vunpack.c.l.s4 839922192
      %v546 = vunpack.c.0.s8 %v545
      %v547 = vlaneseq
      %v548 = vshrl.u32 %v547, 7
      %v549 = vsub.s32 %v546, %v548
      %v550 = vrot.slane %v543, %v549
      %v552 = vmul.f32 %v521, %v550
      %v553 = vmul.f32 %v522, %v550
      %v554 = vadd.f32 %v552, 0.0
      %v555 = vadd.f32 %v553, 0.0
      %556 = vset.pattern.permute.xlu0 2
      %557 = vperm.xlu0 %556, %v524
      %v558 = vpop.permute.xlu0 %557
      %v560 = vunpack.c.l.s4 839922192
      %v561 = vunpack.c.0.s8 %v560
      %v562 = vlaneseq
      %v563 = vshrl.u32 %v562, 7
      %v564 = vsub.s32 %v561, %v563
      %v565 = vrot.slane %v558, %v564
      %v567 = vmul.f32 %v521, %v565
      %v568 = vmul.f32 %v522, %v565
      %v569 = vadd.f32 %v567, 0.0
      %v570 = vadd.f32 %v568, 0.0
      %571 = vset.pattern.permute.xlu0 3
      %572 = vperm.xlu0 %571, %v524
      %v573 = vpop.permute.xlu0 %572
      %v575 = vunpack.c.l.s4 839922192
      %v576 = vunpack.c.0.s8 %v575
      %v577 = vlaneseq
      %v578 = vshrl.u32 %v577, 7
      %v579 = vsub.s32 %v576, %v578
      %v580 = vrot.slane %v573, %v579
      %v582 = vmul.f32 %v521, %v580
      %v583 = vmul.f32 %v522, %v580
      %v584 = vadd.f32 %v582, 0.0
      %v585 = vadd.f32 %v583, 0.0
      %586 = vset.pattern.permute.xlu0 4
      %587 = vperm.xlu0 %586, %v524
      %v588 = vpop.permute.xlu0 %587
      %v590 = vunpack.c.l.s4 839922192
      %v591 = vunpack.c.0.s8 %v590
      %v592 = vlaneseq
      %v593 = vshrl.u32 %v592, 7
      %v594 = vsub.s32 %v591, %v593
      %v595 = vrot.slane %v588, %v594
      %v597 = vmul.f32 %v521, %v595
      %v598 = vmul.f32 %v522, %v595
      %601 = vrot.lane.b32.xlu0 %v597, 124
      %v602 = vpop.permute.xlu0 %601
      %603 = vrot.lane.b32.xlu0 %v598, 124
      %v604 = vpop.permute.xlu0 %603
      %v605 = vrot.slane %v602, 4
      %v606 = vrot.slane %v604, 4
      %vm607 = vcmask 1043456
      %v608 = vsel %vm607, %v605, %v606
      %vm609 = vcmask 1014784
      %v610 = vsel %vm609, %v602, %v608
      %v611 = vsel %vm609, %v604, %v606
      %v614 = vadd.f32 %v539, %v610
      %v615 = vadd.f32 %v540, %v611
      %616 = vset.pattern.permute.xlu0 5
      %617 = vperm.xlu0 %616, %v524
      %v618 = vpop.permute.xlu0 %617
      %v620 = vunpack.c.l.s4 839922192
      %v621 = vunpack.c.0.s8 %v620
      %v622 = vlaneseq
      %v623 = vshrl.u32 %v622, 7
      %v624 = vsub.s32 %v621, %v623
      %v625 = vrot.slane %v618, %v624
      %v627 = vmul.f32 %v521, %v625
      %v628 = vmul.f32 %v522, %v625
      %631 = vrot.lane.b32.xlu0 %v627, 124
      %v632 = vpop.permute.xlu0 %631
      %633 = vrot.lane.b32.xlu0 %v628, 124
      %v634 = vpop.permute.xlu0 %633
      %v635 = vrot.slane %v632, 4
      %v636 = vrot.slane %v634, 4
      %v637 = vsel %vm607, %v635, %v636
      %v638 = vsel %vm609, %v632, %v637
      %v639 = vsel %vm609, %v634, %v636
      %v642 = vadd.f32 %v554, %v638
      %v643 = vadd.f32 %v555, %v639
      %644 = vset.pattern.permute.xlu0 6
      %645 = vperm.xlu0 %644, %v524
      %v646 = vpop.permute.xlu0 %645
      %v648 = vunpack.c.l.s4 839922192
      %v649 = vunpack.c.0.s8 %v648
      %v650 = vlaneseq
      %v651 = vshrl.u32 %v650, 7
      %v652 = vsub.s32 %v649, %v651
      %v653 = vrot.slane %v646, %v652
      %v655 = vmul.f32 %v521, %v653
      %v656 = vmul.f32 %v522, %v653
      %659 = vrot.lane.b32.xlu0 %v655, 124
      %v660 = vpop.permute.xlu0 %659
      %661 = vrot.lane.b32.xlu0 %v656, 124
      %v662 = vpop.permute.xlu0 %661
      %v663 = vrot.slane %v660, 4
      %v664 = vrot.slane %v662, 4
      %v665 = vsel %vm607, %v663, %v664
      %v666 = vsel %vm609, %v660, %v665
      %v667 = vsel %vm609, %v662, %v664
      %v670 = vadd.f32 %v569, %v666
      %v671 = vadd.f32 %v570, %v667
      %672 = vset.pattern.permute.xlu0 7
      %673 = vperm.xlu0 %672, %v524
      %v674 = vpop.permute.xlu0 %673
      %v676 = vunpack.c.l.s4 839922192
      %v677 = vunpack.c.0.s8 %v676
      %v678 = vlaneseq
      %v679 = vshrl.u32 %v678, 7
      %v680 = vsub.s32 %v677, %v679
      %v681 = vrot.slane %v674, %v680
      %v683 = vmul.f32 %v521, %v681
      %v684 = vmul.f32 %v522, %v681
      %687 = vrot.lane.b32.xlu0 %v683, 107
      %v688 = vpop.permute.xlu0 %687
      %689 = vrot.lane.b32.xlu0 %v684, 107
      %v690 = vpop.permute.xlu0 %689
      %v691 = vrot.slane %v688, 4
      %v692 = vrot.slane %v690, 4
      %v693 = vsel %vm607, %v691, %v692
      %vm694 = vcmask 875520
      %v695 = vsel %vm694, %v688, %v693
      %v696 = vsel %vm694, %v690, %v692
      %v699 = vadd.f32 %v584, %v695
      %v700 = vadd.f32 %v585, %v696
      %701 = vset.pattern.permute.xlu0 8
      %702 = vperm.xlu0 %701, %v524
      %v703 = vpop.permute.xlu0 %702
      %v705 = vunpack.c.l.s4 839922192
      %v706 = vunpack.c.0.s8 %v705
      %v707 = vlaneseq
      %v708 = vshrl.u32 %v707, 7
      %v709 = vsub.s32 %v706, %v708
      %v710 = vrot.slane %v703, %v709
      %v712 = vmul.f32 %v521, %v710
      %v713 = vmul.f32 %v522, %v710
      %716 = vrot.lane.b32.xlu0 %v712, 103
      %v717 = vpop.permute.xlu0 %716
      %718 = vrot.lane.b32.xlu0 %v713, 103
      %v719 = vpop.permute.xlu0 %718
      %v720 = vrot.slane %v717, 4
      %v721 = vrot.slane %v719, 4
      %v722 = vsel %vm607, %v720, %v721
      %vm723 = vcmask 842752
      %v724 = vsel %vm723, %v717, %v722
      %v725 = vsel %vm723, %v719, %v721
      %v728 = vadd.f32 %v614, %v724
      %v729 = vadd.f32 %v615, %v725
      %730 = vset.pattern.permute.xlu0 9
      %731 = vperm.xlu0 %730, %v524
      %v732 = vpop.permute.xlu0 %731
      %v734 = vunpack.c.l.s4 839922192
      %v735 = vunpack.c.0.s8 %v734
      %v736 = vlaneseq
      %v737 = vshrl.u32 %v736, 7
      %v738 = vsub.s32 %v735, %v737
      %v739 = vrot.slane %v732, %v738
      %v741 = vmul.f32 %v521, %v739
      %v742 = vmul.f32 %v522, %v739
      %745 = vrot.lane.b32.xlu0 %v741, 103
      %v746 = vpop.permute.xlu0 %745
      %747 = vrot.lane.b32.xlu0 %v742, 103
      %v748 = vpop.permute.xlu0 %747
      %v749 = vrot.slane %v746, 4
      %v750 = vrot.slane %v748, 4
      %v751 = vsel %vm607, %v749, %v750
      %v752 = vsel %vm723, %v746, %v751
      %v753 = vsel %vm723, %v748, %v750
      %v756 = vadd.f32 %v642, %v752
      %v757 = vadd.f32 %v643, %v753
      %758 = vset.pattern.permute.xlu0 10
      %759 = vperm.xlu0 %758, %v524
      %v760 = vpop.permute.xlu0 %759
      %v762 = vunpack.c.l.s4 839922192
      %v763 = vunpack.c.0.s8 %v762
      %v764 = vlaneseq
      %v765 = vshrl.u32 %v764, 7
      %v766 = vsub.s32 %v763, %v765
      %v767 = vrot.slane %v760, %v766
      %v769 = vmul.f32 %v521, %v767
      %v770 = vmul.f32 %v522, %v767
      %773 = vrot.lane.b32.xlu0 %v769, 103
      %v774 = vpop.permute.xlu0 %773
      %775 = vrot.lane.b32.xlu0 %v770, 103
      %v776 = vpop.permute.xlu0 %775
      %v777 = vrot.slane %v774, 4
      %v778 = vrot.slane %v776, 4
      %v779 = vsel %vm607, %v777, %v778
      %v780 = vsel %vm723, %v774, %v779
      %v781 = vsel %vm723, %v776, %v778
      %v784 = vadd.f32 %v670, %v780
      %v785 = vadd.f32 %v671, %v781
      %786 = vset.pattern.permute.xlu0 11
      %787 = vperm.xlu0 %786, %v524
      %v788 = vpop.permute.xlu0 %787
      %v790 = vunpack.c.l.s4 839922192
      %v791 = vunpack.c.0.s8 %v790
      %v792 = vlaneseq
      %v793 = vshrl.u32 %v792, 7
      %v794 = vsub.s32 %v791, %v793
      %v795 = vrot.slane %v788, %v794
      %v797 = vmul.f32 %v521, %v795
      %v798 = vmul.f32 %v522, %v795
      %801 = vrot.lane.b32.xlu0 %v797, 103
      %v802 = vpop.permute.xlu0 %801
      %803 = vrot.lane.b32.xlu0 %v798, 103
      %v804 = vpop.permute.xlu0 %803
      %v805 = vrot.slane %v802, 4
      %v806 = vrot.slane %v804, 4
      %v807 = vsel %vm607, %v805, %v806
      %v808 = vsel %vm723, %v802, %v807
      %v809 = vsel %vm723, %v804, %v806
      %v812 = vadd.f32 %v699, %v808
      %v813 = vadd.f32 %v700, %v809
      %814 = vset.pattern.permute.xlu0 12
      %815 = vperm.xlu0 %814, %v524
      %v816 = vpop.permute.xlu0 %815
      %v818 = vunpack.c.l.s4 839922192
      %v819 = vunpack.c.0.s8 %v818
      %v820 = vlaneseq
      %v821 = vshrl.u32 %v820, 7
      %v822 = vsub.s32 %v819, %v821
      %v823 = vrot.slane %v816, %v822
      %v825 = vmul.f32 %v521, %v823
      %v826 = vmul.f32 %v522, %v823
      %829 = vrot.lane.b32.xlu0 %v825, 99
      %v830 = vpop.permute.xlu0 %829
      %831 = vrot.lane.b32.xlu0 %v826, 99
      %v832 = vpop.permute.xlu0 %831
      %v833 = vrot.slane %v830, 4
      %v834 = vrot.slane %v832, 4
      %v835 = vsel %vm607, %v833, %v834
      %vm836 = vcmask 809984
      %v837 = vsel %vm836, %v830, %v835
      %v838 = vsel %vm836, %v832, %v834
      %v841 = vadd.f32 %v728, %v837
      %v842 = vadd.f32 %v729, %v838
      %843 = vset.pattern.permute.xlu0 13
      %844 = vperm.xlu0 %843, %v524
      %v845 = vpop.permute.xlu0 %844
      %v847 = vunpack.c.l.s4 839922192
      %v848 = vunpack.c.0.s8 %v847
      %v849 = vlaneseq
      %v850 = vshrl.u32 %v849, 7
      %v851 = vsub.s32 %v848, %v850
      %v852 = vrot.slane %v845, %v851
      %v854 = vmul.f32 %v521, %v852
      %v855 = vmul.f32 %v522, %v852
      %858 = vrot.lane.b32.xlu0 %v854, 99
      %v859 = vpop.permute.xlu0 %858
      %860 = vrot.lane.b32.xlu0 %v855, 99
      %v861 = vpop.permute.xlu0 %860
      %v862 = vrot.slane %v859, 4
      %v863 = vrot.slane %v861, 4
      %v864 = vsel %vm607, %v862, %v863
      %v865 = vsel %vm836, %v859, %v864
      %v866 = vsel %vm836, %v861, %v863
      %v869 = vadd.f32 %v756, %v865
      %v870 = vadd.f32 %v757, %v866
      %871 = vset.pattern.permute.xlu0 14
      %872 = vperm.xlu0 %871, %v524
      %v873 = vpop.permute.xlu0 %872
      %v875 = vunpack.c.l.s4 839922192
      %v876 = vunpack.c.0.s8 %v875
      %v877 = vlaneseq
      %v878 = vshrl.u32 %v877, 7
      %v879 = vsub.s32 %v876, %v878
      %v880 = vrot.slane %v873, %v879
      %v882 = vmul.f32 %v521, %v880
      %v883 = vmul.f32 %v522, %v880
      %886 = vrot.lane.b32.xlu0 %v882, 82
      %v887 = vpop.permute.xlu0 %886
      %888 = vrot.lane.b32.xlu0 %v883, 82
      %v889 = vpop.permute.xlu0 %888
      %v890 = vrot.slane %v887, 4
      %v891 = vrot.slane %v889, 4
      %v892 = vsel %vm607, %v890, %v891
      %vm893 = vcmask 670720
      %v894 = vsel %vm893, %v887, %v892
      %v895 = vsel %vm893, %v889, %v891
      %v898 = vadd.f32 %v784, %v894
      %v899 = vadd.f32 %v785, %v895
      %900 = vset.pattern.permute.xlu0 15
      %901 = vperm.xlu0 %900, %v524
      %v902 = vpop.permute.xlu0 %901
      %v904 = vunpack.c.l.s4 839922192
      %v905 = vunpack.c.0.s8 %v904
      %v906 = vlaneseq
      %v907 = vshrl.u32 %v906, 7
      %v908 = vsub.s32 %v905, %v907
      %v909 = vrot.slane %v902, %v908
      %v911 = vmul.f32 %v521, %v909
      %v912 = vmul.f32 %v522, %v909
      %915 = vrot.lane.b32.xlu0 %v911, 82
      %v916 = vpop.permute.xlu0 %915
      %917 = vrot.lane.b32.xlu0 %v912, 82
      %v918 = vpop.permute.xlu0 %917
      %v919 = vrot.slane %v916, 4
      %v920 = vrot.slane %v918, 4
      %v921 = vsel %vm607, %v919, %v920
      %v922 = vsel %vm893, %v916, %v921
      %v923 = vsel %vm893, %v918, %v920
      %v926 = vadd.f32 %v812, %v922
      %v927 = vadd.f32 %v813, %v923
      %928 = vset.pattern.permute.xlu0 16
      %929 = vperm.xlu0 %928, %v524
      %v930 = vpop.permute.xlu0 %929
      %v932 = vunpack.c.l.s4 839922192
      %v933 = vunpack.c.0.s8 %v932
      %v934 = vlaneseq
      %v935 = vshrl.u32 %v934, 7
      %v936 = vsub.s32 %v933, %v935
      %v937 = vrot.slane %v930, %v936
      %v939 = vmul.f32 %v521, %v937
      %v940 = vmul.f32 %v522, %v937
      %943 = vrot.lane.b32.xlu0 %v939, 78
      %v944 = vpop.permute.xlu0 %943
      %945 = vrot.lane.b32.xlu0 %v940, 78
      %v946 = vpop.permute.xlu0 %945
      %v947 = vrot.slane %v944, 4
      %v948 = vrot.slane %v946, 4
      %v949 = vsel %vm607, %v947, %v948
      %vm950 = vcmask 637952
      %v951 = vsel %vm950, %v944, %v949
      %v952 = vsel %vm950, %v946, %v948
      %v955 = vadd.f32 %v841, %v951
      %v956 = vadd.f32 %v842, %v952
      %957 = vset.pattern.permute.xlu0 17
      %958 = vperm.xlu0 %957, %v524
      %v959 = vpop.permute.xlu0 %958
      %v961 = vunpack.c.l.s4 839922192
      %v962 = vunpack.c.0.s8 %v961
      %v963 = vlaneseq
      %v964 = vshrl.u32 %v963, 7
      %v965 = vsub.s32 %v962, %v964
      %v966 = vrot.slane %v959, %v965
      %v968 = vmul.f32 %v521, %v966
      %v969 = vmul.f32 %v522, %v966
      %972 = vrot.lane.b32.xlu0 %v968, 78
      %v973 = vpop.permute.xlu0 %972
      %974 = vrot.lane.b32.xlu0 %v969, 78
      %v975 = vpop.permute.xlu0 %974
      %v976 = vrot.slane %v973, 4
      %v977 = vrot.slane %v975, 4
      %v978 = vsel %vm607, %v976, %v977
      %v979 = vsel %vm950, %v973, %v978
      %v980 = vsel %vm950, %v975, %v977
      %v983 = vadd.f32 %v869, %v979
      %v984 = vadd.f32 %v870, %v980
      %985 = vset.pattern.permute.xlu0 18
      %986 = vperm.xlu0 %985, %v524
      %v987 = vpop.permute.xlu0 %986
      %v989 = vunpack.c.l.s4 839922192
      %v990 = vunpack.c.0.s8 %v989
      %v991 = vlaneseq
      %v992 = vshrl.u32 %v991, 7
      %v993 = vsub.s32 %v990, %v992
      %v994 = vrot.slane %v987, %v993
      %v996 = vmul.f32 %v521, %v994
      %v997 = vmul.f32 %v522, %v994
      %1000 = vrot.lane.b32.xlu0 %v996, 78
      %v1001 = vpop.permute.xlu0 %1000
      %1002 = vrot.lane.b32.xlu0 %v997, 78
      %v1003 = vpop.permute.xlu0 %1002
      %v1004 = vrot.slane %v1001, 4
      %v1005 = vrot.slane %v1003, 4
      %v1006 = vsel %vm607, %v1004, %v1005
      %v1007 = vsel %vm950, %v1001, %v1006
      %v1008 = vsel %vm950, %v1003, %v1005
      %v1011 = vadd.f32 %v898, %v1007
      %v1012 = vadd.f32 %v899, %v1008
      %1013 = vset.pattern.permute.xlu0 19
      %1014 = vperm.xlu0 %1013, %v524
      %v1015 = vpop.permute.xlu0 %1014
      %v1017 = vunpack.c.l.s4 839922192
      %v1018 = vunpack.c.0.s8 %v1017
      %v1019 = vlaneseq
      %v1020 = vshrl.u32 %v1019, 7
      %v1021 = vsub.s32 %v1018, %v1020
      %v1022 = vrot.slane %v1015, %v1021
      %v1024 = vmul.f32 %v521, %v1022
      %v1025 = vmul.f32 %v522, %v1022
      %1028 = vrot.lane.b32.xlu0 %v1024, 78
      %v1029 = vpop.permute.xlu0 %1028
      %1030 = vrot.lane.b32.xlu0 %v1025, 78
      %v1031 = vpop.permute.xlu0 %1030
      %v1032 = vrot.slane %v1029, 4
      %v1033 = vrot.slane %v1031, 4
      %v1034 = vsel %vm607, %v1032, %v1033
      %v1035 = vsel %vm950, %v1029, %v1034
      %v1036 = vsel %vm950, %v1031, %v1033
      %v1039 = vadd.f32 %v926, %v1035
      %v1040 = vadd.f32 %v927, %v1036
      %1041 = vset.pattern.permute.xlu0 20
      %1042 = vperm.xlu0 %1041, %v524
      %v1043 = vpop.permute.xlu0 %1042
      %v1045 = vunpack.c.l.s4 839922192
      %v1046 = vunpack.c.0.s8 %v1045
      %v1047 = vlaneseq
      %v1048 = vshrl.u32 %v1047, 7
      %v1049 = vsub.s32 %v1046, %v1048
      %v1050 = vrot.slane %v1043, %v1049
      %v1052 = vmul.f32 %v521, %v1050
      %v1053 = vmul.f32 %v522, %v1050
      %1056 = vrot.lane.b32.xlu0 %v1052, 74
      %v1057 = vpop.permute.xlu0 %1056
      %1058 = vrot.lane.b32.xlu0 %v1053, 74
      %v1059 = vpop.permute.xlu0 %1058
      %v1060 = vrot.slane %v1057, 4
      %v1061 = vrot.slane %v1059, 4
      %v1062 = vsel %vm607, %v1060, %v1061
      %vm1063 = vcmask 605184
      %v1064 = vsel %vm1063, %v1057, %v1062
      %v1065 = vsel %vm1063, %v1059, %v1061
      %v1068 = vadd.f32 %v955, %v1064
      %v1069 = vadd.f32 %v956, %v1065
      %1070 = vset.pattern.permute.xlu0 21
      %1071 = vperm.xlu0 %1070, %v524
      %v1072 = vpop.permute.xlu0 %1071
      %v1074 = vunpack.c.l.s4 839922192
      %v1075 = vunpack.c.0.s8 %v1074
      %v1076 = vlaneseq
      %v1077 = vshrl.u32 %v1076, 7
      %v1078 = vsub.s32 %v1075, %v1077
      %v1079 = vrot.slane %v1072, %v1078
      %v1081 = vmul.f32 %v521, %v1079
      %v1082 = vmul.f32 %v522, %v1079
      %1085 = vrot.lane.b32.xlu0 %v1081, 57
      %v1086 = vpop.permute.xlu0 %1085
      %1087 = vrot.lane.b32.xlu0 %v1082, 57
      %v1088 = vpop.permute.xlu0 %1087
      %v1089 = vrot.slane %v1086, 4
      %v1090 = vrot.slane %v1088, 4
      %v1091 = vsel %vm607, %v1089, %v1090
      %vm1092 = vcmask 465920
      %v1093 = vsel %vm1092, %v1086, %v1091
      %v1094 = vsel %vm1092, %v1088, %v1090
      %v1097 = vadd.f32 %v983, %v1093
      %v1098 = vadd.f32 %v984, %v1094
      %1099 = vset.pattern.permute.xlu0 22
      %1100 = vperm.xlu0 %1099, %v524
      %v1101 = vpop.permute.xlu0 %1100
      %v1103 = vunpack.c.l.s4 839922192
      %v1104 = vunpack.c.0.s8 %v1103
      %v1105 = vlaneseq
      %v1106 = vshrl.u32 %v1105, 7
      %v1107 = vsub.s32 %v1104, %v1106
      %v1108 = vrot.slane %v1101, %v1107
      %v1110 = vmul.f32 %v521, %v1108
      %v1111 = vmul.f32 %v522, %v1108
      %1114 = vrot.lane.b32.xlu0 %v1110, 57
      %v1115 = vpop.permute.xlu0 %1114
      %1116 = vrot.lane.b32.xlu0 %v1111, 57
      %v1117 = vpop.permute.xlu0 %1116
      %v1118 = vrot.slane %v1115, 4
      %v1119 = vrot.slane %v1117, 4
      %v1120 = vsel %vm607, %v1118, %v1119
      %v1121 = vsel %vm1092, %v1115, %v1120
      %v1122 = vsel %vm1092, %v1117, %v1119
      %v1125 = vadd.f32 %v1011, %v1121
      %v1126 = vadd.f32 %v1012, %v1122
      %1127 = vset.pattern.permute.xlu0 23
      %1128 = vperm.xlu0 %1127, %v524
      %v1129 = vpop.permute.xlu0 %1128
      %v1131 = vunpack.c.l.s4 839922192
      %v1132 = vunpack.c.0.s8 %v1131
      %v1133 = vlaneseq
      %v1134 = vshrl.u32 %v1133, 7
      %v1135 = vsub.s32 %v1132, %v1134
      %v1136 = vrot.slane %v1129, %v1135
      %v1138 = vmul.f32 %v521, %v1136
      %v1139 = vmul.f32 %v522, %v1136
      %1142 = vrot.lane.b32.xlu0 %v1138, 57
      %v1143 = vpop.permute.xlu0 %1142
      %1144 = vrot.lane.b32.xlu0 %v1139, 57
      %v1145 = vpop.permute.xlu0 %1144
      %v1146 = vrot.slane %v1143, 4
      %v1147 = vrot.slane %v1145, 4
      %v1148 = vsel %vm607, %v1146, %v1147
      %v1149 = vsel %vm1092, %v1143, %v1148
      %v1150 = vsel %vm1092, %v1145, %v1147
      %v1153 = vadd.f32 %v1039, %v1149
      %v1154 = vadd.f32 %v1040, %v1150
      %1155 = vset.pattern.permute.xlu0 24
      %1156 = vperm.xlu0 %1155, %v524
      %v1157 = vpop.permute.xlu0 %1156
      %v1159 = vunpack.c.l.s4 839922192
      %v1160 = vunpack.c.0.s8 %v1159
      %v1161 = vlaneseq
      %v1162 = vshrl.u32 %v1161, 7
      %v1163 = vsub.s32 %v1160, %v1162
      %v1164 = vrot.slane %v1157, %v1163
      %v1166 = vmul.f32 %v521, %v1164
      %v1167 = vmul.f32 %v522, %v1164
      %1170 = vrot.lane.b32.xlu0 %v1166, 53
      %v1171 = vpop.permute.xlu0 %1170
      %1172 = vrot.lane.b32.xlu0 %v1167, 53
      %v1173 = vpop.permute.xlu0 %1172
      %v1174 = vrot.slane %v1171, 4
      %v1175 = vrot.slane %v1173, 4
      %v1176 = vsel %vm607, %v1174, %v1175
      %vm1177 = vcmask 433152
      %v1178 = vsel %vm1177, %v1171, %v1176
      %v1179 = vsel %vm1177, %v1173, %v1175
      %v1182 = vadd.f32 %v1068, %v1178
      %v1183 = vadd.f32 %v1069, %v1179
      %1184 = vset.pattern.permute.xlu0 25
      %1185 = vperm.xlu0 %1184, %v524
      %v1186 = vpop.permute.xlu0 %1185
      %v1188 = vunpack.c.l.s4 839922192
      %v1189 = vunpack.c.0.s8 %v1188
      %v1190 = vlaneseq
      %v1191 = vshrl.u32 %v1190, 7
      %v1192 = vsub.s32 %v1189, %v1191
      %v1193 = vrot.slane %v1186, %v1192
      %v1195 = vmul.f32 %v521, %v1193
      %v1196 = vmul.f32 %v522, %v1193
      %1199 = vrot.lane.b32.xlu0 %v1195, 53
      %v1200 = vpop.permute.xlu0 %1199
      %1201 = vrot.lane.b32.xlu0 %v1196, 53
      %v1202 = vpop.permute.xlu0 %1201
      %v1203 = vrot.slane %v1200, 4
      %v1204 = vrot.slane %v1202, 4
      %v1205 = vsel %vm607, %v1203, %v1204
      %v1206 = vsel %vm1177, %v1200, %v1205
      %v1207 = vsel %vm1177, %v1202, %v1204
      %v1210 = vadd.f32 %v1097, %v1206
      %v1211 = vadd.f32 %v1098, %v1207
      %1212 = vset.pattern.permute.xlu0 26
      %1213 = vperm.xlu0 %1212, %v524
      %v1214 = vpop.permute.xlu0 %1213
      %v1216 = vunpack.c.l.s4 839922192
      %v1217 = vunpack.c.0.s8 %v1216
      %v1218 = vlaneseq
      %v1219 = vshrl.u32 %v1218, 7
      %v1220 = vsub.s32 %v1217, %v1219
      %v1221 = vrot.slane %v1214, %v1220
      %v1223 = vmul.f32 %v521, %v1221
      %v1224 = vmul.f32 %v522, %v1221
      %1227 = vrot.lane.b32.xlu0 %v1223, 53
      %v1228 = vpop.permute.xlu0 %1227
      %1229 = vrot.lane.b32.xlu0 %v1224, 53
      %v1230 = vpop.permute.xlu0 %1229
      %v1231 = vrot.slane %v1228, 4
      %v1232 = vrot.slane %v1230, 4
      %v1233 = vsel %vm607, %v1231, %v1232
      %v1234 = vsel %vm1177, %v1228, %v1233
      %v1235 = vsel %vm1177, %v1230, %v1232
      %v1238 = vadd.f32 %v1125, %v1234
      %v1239 = vadd.f32 %v1126, %v1235
      %1240 = vset.pattern.permute.xlu0 27
      %1241 = vperm.xlu0 %1240, %v524
      %v1242 = vpop.permute.xlu0 %1241
      %v1244 = vunpack.c.l.s4 839922192
      %v1245 = vunpack.c.0.s8 %v1244
      %v1246 = vlaneseq
      %v1247 = vshrl.u32 %v1246, 7
      %v1248 = vsub.s32 %v1245, %v1247
      %v1249 = vrot.slane %v1242, %v1248
      %v1251 = vmul.f32 %v521, %v1249
      %v1252 = vmul.f32 %v522, %v1249
      %1255 = vrot.lane.b32.xlu0 %v1251, 53
      %v1256 = vpop.permute.xlu0 %1255
      %1257 = vrot.lane.b32.xlu0 %v1252, 53
      %v1258 = vpop.permute.xlu0 %1257
      %v1259 = vrot.slane %v1256, 4
      %v1260 = vrot.slane %v1258, 4
      %v1261 = vsel %vm607, %v1259, %v1260
      %v1262 = vsel %vm1177, %v1256, %v1261
      %v1263 = vsel %vm1177, %v1258, %v1260
      %v1266 = vadd.f32 %v1153, %v1262
      %v1267 = vadd.f32 %v1154, %v1263
      %1268 = vset.pattern.permute.xlu0 28
      %1269 = vperm.xlu0 %1268, %v524
      %v1270 = vpop.permute.xlu0 %1269
      %v1272 = vunpack.c.l.s4 839922192
      %v1273 = vunpack.c.0.s8 %v1272
      %v1274 = vlaneseq
      %v1275 = vshrl.u32 %v1274, 7
      %v1276 = vsub.s32 %v1273, %v1275
      %v1277 = vrot.slane %v1270, %v1276
      %v1279 = vmul.f32 %v521, %v1277
      %v1280 = vmul.f32 %v522, %v1277
      %1283 = vrot.lane.b32.xlu0 %v1279, 32
      %v1284 = vpop.permute.xlu0 %1283
      %1285 = vrot.lane.b32.xlu0 %v1280, 32
      %v1286 = vpop.permute.xlu0 %1285
      %v1287 = vrot.slane %v1284, 4
      %v1288 = vrot.slane %v1286, 4
      %v1289 = vsel %vm607, %v1287, %v1288
      %vm1290 = vcmask 261120
      %v1291 = vsel %vm1290, %v1284, %v1289
      %v1292 = vsel %vm1290, %v1286, %v1288
      %v1295 = vadd.f32 %v1182, %v1291
      %v1296 = vadd.f32 %v1183, %v1292
      %1297 = vset.pattern.permute.xlu0 29
      %1298 = vperm.xlu0 %1297, %v524
      %v1299 = vpop.permute.xlu0 %1298
      %v1301 = vunpack.c.l.s4 839922192
      %v1302 = vunpack.c.0.s8 %v1301
      %v1303 = vlaneseq
      %v1304 = vshrl.u32 %v1303, 7
      %v1305 = vsub.s32 %v1302, %v1304
      %v1306 = vrot.slane %v1299, %v1305
      %v1308 = vmul.f32 %v521, %v1306
      %v1309 = vmul.f32 %v522, %v1306
      %1312 = vrot.lane.b32.xlu0 %v1308, 32
      %v1313 = vpop.permute.xlu0 %1312
      %1314 = vrot.lane.b32.xlu0 %v1309, 32
      %v1315 = vpop.permute.xlu0 %1314
      %v1316 = vrot.slane %v1313, 4
      %v1317 = vrot.slane %v1315, 4
      %v1318 = vsel %vm607, %v1316, %v1317
      %v1319 = vsel %vm1290, %v1313, %v1318
      %v1320 = vsel %vm1290, %v1315, %v1317
      %v1323 = vadd.f32 %v1210, %v1319
      %v1324 = vadd.f32 %v1211, %v1320
      %1325 = vset.pattern.permute.xlu0 30
      %1326 = vperm.xlu0 %1325, %v524
      %v1327 = vpop.permute.xlu0 %1326
      %v1329 = vunpack.c.l.s4 839922192
      %v1330 = vunpack.c.0.s8 %v1329
      %v1331 = vlaneseq
      %v1332 = vshrl.u32 %v1331, 7
      %v1333 = vsub.s32 %v1330, %v1332
      %v1334 = vrot.slane %v1327, %v1333
      %v1336 = vmul.f32 %v521, %v1334
      %v1337 = vmul.f32 %v522, %v1334
      %1340 = vrot.lane.b32.xlu0 %v1336, 32
      %v1341 = vpop.permute.xlu0 %1340
      %1342 = vrot.lane.b32.xlu0 %v1337, 32
      %v1343 = vpop.permute.xlu0 %1342
      %v1344 = vrot.slane %v1341, 4
      %v1345 = vrot.slane %v1343, 4
      %v1346 = vsel %vm607, %v1344, %v1345
      %v1347 = vsel %vm1290, %v1341, %v1346
      %v1348 = vsel %vm1290, %v1343, %v1345
      %v1351 = vadd.f32 %v1238, %v1347
      %v1352 = vadd.f32 %v1239, %v1348
      %1353 = vset.pattern.permute.xlu0 31
      %1354 = vperm.xlu0 %1353, %v524
      %v1355 = vpop.permute.xlu0 %1354
      %v1357 = vunpack.c.l.s4 839922192
      %v1358 = vunpack.c.0.s8 %v1357
      %v1359 = vlaneseq
      %v1360 = vshrl.u32 %v1359, 7
      %v1361 = vsub.s32 %v1358, %v1360
      %v1362 = vrot.slane %v1355, %v1361
      %v1364 = vmul.f32 %v521, %v1362
      %v1365 = vmul.f32 %v522, %v1362
      %1368 = vrot.lane.b32.xlu0 %v1364, 32
      %v1369 = vpop.permute.xlu0 %1368
      %1370 = vrot.lane.b32.xlu0 %v1365, 32
      %v1371 = vpop.permute.xlu0 %1370
      %v1372 = vrot.slane %v1369, 4
      %v1373 = vrot.slane %v1371, 4
      %v1374 = vsel %vm607, %v1372, %v1373
      %v1375 = vsel %vm1290, %v1369, %v1374
      %v1376 = vsel %vm1290, %v1371, %v1373
      %v1379 = vadd.f32 %v1266, %v1375
      %v1380 = vadd.f32 %v1267, %v1376
      %1381 = vset.pattern.permute.xlu0 32
      %1382 = vperm.xlu0 %1381, %v524
      %v1383 = vpop.permute.xlu0 %1382
      %v1385 = vunpack.c.l.s4 839922192
      %v1386 = vunpack.c.0.s8 %v1385
      %v1387 = vlaneseq
      %v1388 = vshrl.u32 %v1387, 7
      %v1389 = vsub.s32 %v1386, %v1388
      %v1390 = vrot.slane %v1383, %v1389
      %v1392 = vmul.f32 %v521, %v1390
      %v1393 = vmul.f32 %v522, %v1390
      %1396 = vrot.lane.b32.xlu0 %v1392, 28
      %v1397 = vpop.permute.xlu0 %1396
      %1398 = vrot.lane.b32.xlu0 %v1393, 28
      %v1399 = vpop.permute.xlu0 %1398
      %v1400 = vrot.slane %v1397, 4
      %v1401 = vrot.slane %v1399, 4
      %v1402 = vsel %vm607, %v1400, %v1401
      %vm1403 = vcmask 228352
      %v1404 = vsel %vm1403, %v1397, %v1402
      %v1405 = vsel %vm1403, %v1399, %v1401
      %v1408 = vadd.f32 %v1295, %v1404
      %v1409 = vadd.f32 %v1296, %v1405
      %1410 = vset.pattern.permute.xlu0 33
      %1411 = vperm.xlu0 %1410, %v524
      %v1412 = vpop.permute.xlu0 %1411
      %v1414 = vunpack.c.l.s4 839922192
      %v1415 = vunpack.c.0.s8 %v1414
      %v1416 = vlaneseq
      %v1417 = vshrl.u32 %v1416, 7
      %v1418 = vsub.s32 %v1415, %v1417
      %v1419 = vrot.slane %v1412, %v1418
      %v1421 = vmul.f32 %v521, %v1419
      %v1422 = vmul.f32 %v522, %v1419
      %1425 = vrot.lane.b32.xlu0 %v1421, 28
      %v1426 = vpop.permute.xlu0 %1425
      %1427 = vrot.lane.b32.xlu0 %v1422, 28
      %v1428 = vpop.permute.xlu0 %1427
      %v1429 = vrot.slane %v1426, 4
      %v1430 = vrot.slane %v1428, 4
      %v1431 = vsel %vm607, %v1429, %v1430
      %v1432 = vsel %vm1403, %v1426, %v1431
      %v1433 = vsel %vm1403, %v1428, %v1430
      %v1436 = vadd.f32 %v1323, %v1432
      %v1437 = vadd.f32 %v1324, %v1433
      %1438 = vset.pattern.permute.xlu0 34
      %1439 = vperm.xlu0 %1438, %v524
      %v1440 = vpop.permute.xlu0 %1439
      %v1442 = vunpack.c.l.s4 839922192
      %v1443 = vunpack.c.0.s8 %v1442
      %v1444 = vlaneseq
      %v1445 = vshrl.u32 %v1444, 7
      %v1446 = vsub.s32 %v1443, %v1445
      %v1447 = vrot.slane %v1440, %v1446
      %v1449 = vmul.f32 %v521, %v1447
      %v1450 = vmul.f32 %v522, %v1447
      %1453 = vrot.lane.b32.xlu0 %v1449, 28
      %v1454 = vpop.permute.xlu0 %1453
      %1455 = vrot.lane.b32.xlu0 %v1450, 28
      %v1456 = vpop.permute.xlu0 %1455
      %v1457 = vrot.slane %v1454, 4
      %v1458 = vrot.slane %v1456, 4
      %v1459 = vsel %vm607, %v1457, %v1458
      %v1460 = vsel %vm1403, %v1454, %v1459
      %v1461 = vsel %vm1403, %v1456, %v1458
      %v1464 = vadd.f32 %v1351, %v1460
      %v1465 = vadd.f32 %v1352, %v1461
      %1466 = vset.pattern.permute.xlu0 35
      %1467 = vperm.xlu0 %1466, %v524
      %v1468 = vpop.permute.xlu0 %1467
      %v1470 = vunpack.c.l.s4 839922192
      %v1471 = vunpack.c.0.s8 %v1470
      %v1472 = vlaneseq
      %v1473 = vshrl.u32 %v1472, 7
      %v1474 = vsub.s32 %v1471, %v1473
      %v1475 = vrot.slane %v1468, %v1474
      %v1477 = vmul.f32 %v521, %v1475
      %v1478 = vmul.f32 %v522, %v1475
      %1481 = vrot.lane.b32.xlu0 %v1477, 11
      %v1482 = vpop.permute.xlu0 %1481
      %1483 = vrot.lane.b32.xlu0 %v1478, 11
      %v1484 = vpop.permute.xlu0 %1483
      %v1485 = vrot.slane %v1482, 4
      %v1486 = vrot.slane %v1484, 4
      %v1487 = vsel %vm607, %v1485, %v1486
      %vm1488 = vcmask 89088
      %v1489 = vsel %vm1488, %v1482, %v1487
      %v1490 = vsel %vm1488, %v1484, %v1486
      %v1493 = vadd.f32 %v1379, %v1489
      %v1494 = vadd.f32 %v1380, %v1490
      %1495 = vset.pattern.permute.xlu0 36
      %1496 = vperm.xlu0 %1495, %v524
      %v1497 = vpop.permute.xlu0 %1496
      %v1499 = vunpack.c.l.s4 839922192
      %v1500 = vunpack.c.0.s8 %v1499
      %v1501 = vlaneseq
      %v1502 = vshrl.u32 %v1501, 7
      %v1503 = vsub.s32 %v1500, %v1502
      %v1504 = vrot.slane %v1497, %v1503
      %v1506 = vmul.f32 %v521, %v1504
      %v1507 = vmul.f32 %v522, %v1504
      %1510 = vrot.lane.b32.xlu0 %v1506, 7
      %v1511 = vpop.permute.xlu0 %1510
      %1512 = vrot.lane.b32.xlu0 %v1507, 7
      %v1513 = vpop.permute.xlu0 %1512
      %v1514 = vrot.slane %v1511, 4
      %v1515 = vrot.slane %v1513, 4
      %v1516 = vsel %vm607, %v1514, %v1515
      %vm1517 = vcmask 56320
      %v1518 = vsel %vm1517, %v1511, %v1516
      %v1519 = vsel %vm1517, %v1513, %v1515
      %v1522 = vadd.f32 %v1408, %v1518
      %v1523 = vadd.f32 %v1409, %v1519
      %1524 = vset.pattern.permute.xlu0 37
      %1525 = vperm.xlu0 %1524, %v524
      %v1526 = vpop.permute.xlu0 %1525
      %v1528 = vunpack.c.l.s4 839922192
      %v1529 = vunpack.c.0.s8 %v1528
      %v1530 = vlaneseq
      %v1531 = vshrl.u32 %v1530, 7
      %v1532 = vsub.s32 %v1529, %v1531
      %v1533 = vrot.slane %v1526, %v1532
      %v1535 = vmul.f32 %v521, %v1533
      %v1536 = vmul.f32 %v522, %v1533
      %1539 = vrot.lane.b32.xlu0 %v1535, 7
      %v1540 = vpop.permute.xlu0 %1539
      %1541 = vrot.lane.b32.xlu0 %v1536, 7
      %v1542 = vpop.permute.xlu0 %1541
      %v1543 = vrot.slane %v1540, 4
      %v1544 = vrot.slane %v1542, 4
      %v1545 = vsel %vm607, %v1543, %v1544
      %v1546 = vsel %vm1517, %v1540, %v1545
      %v1547 = vsel %vm1517, %v1542, %v1544
      %v1550 = vadd.f32 %v1436, %v1546
      %v1551 = vadd.f32 %v1437, %v1547
      %1552 = vset.pattern.permute.xlu0 38
      %1553 = vperm.xlu0 %1552, %v524
      %v1554 = vpop.permute.xlu0 %1553
      %v1556 = vunpack.c.l.s4 839922192
      %v1557 = vunpack.c.0.s8 %v1556
      %v1558 = vlaneseq
      %v1559 = vshrl.u32 %v1558, 7
      %v1560 = vsub.s32 %v1557, %v1559
      %v1561 = vrot.slane %v1554, %v1560
      %v1563 = vmul.f32 %v521, %v1561
      %v1564 = vmul.f32 %v522, %v1561
      %1567 = vrot.lane.b32.xlu0 %v1563, 7
      %v1568 = vpop.permute.xlu0 %1567
      %1569 = vrot.lane.b32.xlu0 %v1564, 7
      %v1570 = vpop.permute.xlu0 %1569
      %v1571 = vrot.slane %v1568, 4
      %v1572 = vrot.slane %v1570, 4
      %v1573 = vsel %vm607, %v1571, %v1572
      %v1574 = vsel %vm1517, %v1568, %v1573
      %v1575 = vsel %vm1517, %v1570, %v1572
      %v1578 = vadd.f32 %v1464, %v1574
      %v1579 = vadd.f32 %v1465, %v1575
      %1580 = vset.pattern.permute.xlu0 39
      %1581 = vperm.xlu0 %1580, %v524
      %v1582 = vpop.permute.xlu0 %1581
      %v1584 = vunpack.c.l.s4 839922192
      %v1585 = vunpack.c.0.s8 %v1584
      %v1586 = vlaneseq
      %v1587 = vshrl.u32 %v1586, 7
      %v1588 = vsub.s32 %v1585, %v1587
      %v1589 = vrot.slane %v1582, %v1588
      %v1591 = vmul.f32 %v521, %v1589
      %v1592 = vmul.f32 %v522, %v1589
      %1595 = vrot.lane.b32.xlu0 %v1591, 7
      %v1596 = vpop.permute.xlu0 %1595
      %1597 = vrot.lane.b32.xlu0 %v1592, 7
      %v1598 = vpop.permute.xlu0 %1597
      %v1599 = vrot.slane %v1596, 4
      %v1600 = vrot.slane %v1598, 4
      %v1601 = vsel %vm607, %v1599, %v1600
      %v1602 = vsel %vm1517, %v1596, %v1601
      %v1603 = vsel %vm1517, %v1598, %v1600
      %v1606 = vadd.f32 %v1493, %v1602
      %v1607 = vadd.f32 %v1494, %v1603
      %1608 = vset.pattern.permute.xlu0 40
      %1609 = vperm.xlu0 %1608, %v524
      %v1610 = vpop.permute.xlu0 %1609
      %v1612 = vunpack.c.l.s4 839922192
      %v1613 = vunpack.c.0.s8 %v1612
      %v1614 = vlaneseq
      %v1615 = vshrl.u32 %v1614, 7
      %v1616 = vsub.s32 %v1613, %v1615
      %v1617 = vrot.slane %v1610, %v1616
      %v1619 = vmul.f32 %v521, %v1617
      %v1620 = vmul.f32 %v522, %v1617
      %1623 = vrot.lane.b32.xlu0 %v1619, 3
      %v1624 = vpop.permute.xlu0 %1623
      %1625 = vrot.lane.b32.xlu0 %v1620, 3
      %v1626 = vpop.permute.xlu0 %1625
      %v1627 = vrot.slane %v1624, 4
      %v1628 = vrot.slane %v1626, 4
      %v1629 = vsel %vm607, %v1627, %v1628
      %vm1630 = vcmask 23552
      %v1631 = vsel %vm1630, %v1624, %v1629
      %v1632 = vsel %vm1630, %v1626, %v1628
      %v1635 = vadd.f32 %v1522, %v1631
      %v1636 = vadd.f32 %v1523, %v1632
      %1637 = vset.pattern.permute.xlu0 41
      %1638 = vperm.xlu0 %1637, %v524
      %v1639 = vpop.permute.xlu0 %1638
      %v1641 = vunpack.c.l.s4 839922192
      %v1642 = vunpack.c.0.s8 %v1641
      %v1643 = vlaneseq
      %v1644 = vshrl.u32 %v1643, 7
      %v1645 = vsub.s32 %v1642, %v1644
      %v1646 = vrot.slane %v1639, %v1645
      %v1648 = vmul.f32 %v521, %v1646
      %v1649 = vmul.f32 %v522, %v1646
      %1652 = vrot.lane.b32.xlu0 %v1648, 3
      %v1653 = vpop.permute.xlu0 %1652
      %1654 = vrot.lane.b32.xlu0 %v1649, 3
      %v1655 = vpop.permute.xlu0 %1654
      %v1656 = vrot.slane %v1653, 4
      %v1657 = vrot.slane %v1655, 4
      %v1658 = vsel %vm607, %v1656, %v1657
      %v1659 = vsel %vm1630, %v1653, %v1658
      %v1660 = vsel %vm1630, %v1655, %v1657
      %v1663 = vadd.f32 %v1550, %v1659
      %v1664 = vadd.f32 %v1551, %v1660
      %1665 = vset.pattern.permute.xlu0 42
      %1666 = vperm.xlu0 %1665, %v524
      %v1667 = vpop.permute.xlu0 %1666
      %1671 = vrot.lane.b32.xlu0 %v521, 112
      %v1672 = vpop.permute.xlu0 %1671
      %1673 = vrot.lane.b32.xlu0 %v522, 112
      %v1674 = vpop.permute.xlu0 %1673
      %1675 = vrot.lane.b32.xlu0 %v523, 112
      %v1676 = vpop.permute.xlu0 %1675
      %v1677 = vrot.slane %v1672, 4
      %v1678 = vrot.slane %v1674, 4
      %v1679 = vsel %vm607, %v1677, %v1678
      %vm1680 = vcmask 916480
      %v1681 = vsel %vm1680, %v1679, %v1674
      %v1682 = vsel %vm1680, %v1678, %v1676
      %v1686 = vunpack.c.l.s4 839922192
      %v1687 = vunpack.c.0.s8 %v1686
      %v1688 = vlaneseq
      %v1689 = vshrl.u32 %v1688, 7
      %v1690 = vsub.s32 %v1687, %v1689
      %v1691 = vrot.slane %v1667, %v1690
      %v1693 = vmul.f32 %v1681, %v1691
      %v1694 = vmul.f32 %v1682, %v1691
      %1697 = vrot.lane.b32.xlu0 %v1693, 2
      %v1698 = vpop.permute.xlu0 %1697
      %1699 = vrot.lane.b32.xlu0 %v1694, 2
      %v1700 = vpop.permute.xlu0 %1699
      %v1701 = vrot.slane %v1698, 4
      %v1702 = vrot.slane %v1700, 4
      %vm1703 = vcmask 15360
      %v1704 = vsel %vm1703, %v1701, %v1698
      %v1705 = vsel %vm607, %v1701, %v1702
      %v1706 = vsel %vm1703, %v1705, %v1700
      %v1709 = vadd.f32 %v1578, %v1704
      %v1710 = vadd.f32 %v1579, %v1706
      %1711 = vset.pattern.permute.xlu0 43
      %1712 = vperm.xlu0 %1711, %v524
      %v1713 = vpop.permute.xlu0 %1712
      %1714 = vrot.lane.b32.xlu0 %v521, 111
      %v1715 = vpop.permute.xlu0 %1714
      %1716 = vrot.lane.b32.xlu0 %v522, 111
      %v1717 = vpop.permute.xlu0 %1716
      %1718 = vrot.lane.b32.xlu0 %v523, 111
      %v1719 = vpop.permute.xlu0 %1718
      %v1720 = vrot.slane %v1715, 4
      %v1721 = vrot.slane %v1717, 4
      %v1722 = vsel %vm607, %v1720, %v1721
      %vm1723 = vcmask 908288
      %v1724 = vsel %vm1723, %v1722, %v1717
      %v1725 = vsel %vm1723, %v1721, %v1719
      %v1729 = vunpack.c.l.s4 839922192
      %v1730 = vunpack.c.0.s8 %v1729
      %v1731 = vlaneseq
      %v1732 = vshrl.u32 %v1731, 7
      %v1733 = vsub.s32 %v1730, %v1732
      %v1734 = vrot.slane %v1713, %v1733
      %v1736 = vmul.f32 %v1724, %v1734
      %v1737 = vmul.f32 %v1725, %v1734
      %1740 = vrot.lane.b32.xlu0 %v1736, 3
      %v1741 = vpop.permute.xlu0 %1740
      %1742 = vrot.lane.b32.xlu0 %v1737, 3
      %v1743 = vpop.permute.xlu0 %1742
      %v1744 = vrot.slane %v1741, 4
      %v1745 = vrot.slane %v1743, 4
      %v1746 = vsel %vm1630, %v1744, %v1741
      %v1747 = vsel %vm607, %v1744, %v1745
      %v1748 = vsel %vm1630, %v1747, %v1743
      %v1751 = vadd.f32 %v1606, %v1746
      %v1752 = vadd.f32 %v1607, %v1748
      %1753 = vset.pattern.permute.xlu0 44
      %1754 = vperm.xlu0 %1753, %v524
      %v1755 = vpop.permute.xlu0 %1754
      %1756 = vrot.lane.b32.xlu0 %v521, 110
      %v1757 = vpop.permute.xlu0 %1756
      %1758 = vrot.lane.b32.xlu0 %v522, 110
      %v1759 = vpop.permute.xlu0 %1758
      %1760 = vrot.lane.b32.xlu0 %v523, 110
      %v1761 = vpop.permute.xlu0 %1760
      %v1762 = vrot.slane %v1757, 4
      %v1763 = vrot.slane %v1759, 4
      %v1764 = vsel %vm607, %v1762, %v1763
      %vm1765 = vcmask 900096
      %v1766 = vsel %vm1765, %v1764, %v1759
      %v1767 = vsel %vm1765, %v1763, %v1761
      %v1771 = vunpack.c.l.s4 839922192
      %v1772 = vunpack.c.0.s8 %v1771
      %v1773 = vlaneseq
      %v1774 = vshrl.u32 %v1773, 7
      %v1775 = vsub.s32 %v1772, %v1774
      %v1776 = vrot.slane %v1755, %v1775
      %v1778 = vmul.f32 %v1766, %v1776
      %v1779 = vmul.f32 %v1767, %v1776
      %v1780 = vadd.f32 %v1635, %v1778
      %v1781 = vadd.f32 %v1636, %v1779
      %1782 = vset.pattern.permute.xlu0 45
      %1783 = vperm.xlu0 %1782, %v524
      %v1784 = vpop.permute.xlu0 %1783
      %1785 = vrot.lane.b32.xlu0 %v521, 109
      %v1786 = vpop.permute.xlu0 %1785
      %1787 = vrot.lane.b32.xlu0 %v522, 109
      %v1788 = vpop.permute.xlu0 %1787
      %1789 = vrot.lane.b32.xlu0 %v523, 109
      %v1790 = vpop.permute.xlu0 %1789
      %v1791 = vrot.slane %v1786, 4
      %v1792 = vrot.slane %v1788, 4
      %v1793 = vsel %vm607, %v1791, %v1792
      %vm1794 = vcmask 891904
      %v1795 = vsel %vm1794, %v1793, %v1788
      %v1796 = vsel %vm1794, %v1792, %v1790
      %v1800 = vunpack.c.l.s4 839922192
      %v1801 = vunpack.c.0.s8 %v1800
      %v1802 = vlaneseq
      %v1803 = vshrl.u32 %v1802, 7
      %v1804 = vsub.s32 %v1801, %v1803
      %v1805 = vrot.slane %v1784, %v1804
      %v1807 = vmul.f32 %v1795, %v1805
      %v1808 = vmul.f32 %v1796, %v1805
      %1811 = vrot.lane.b32.xlu0 %v1807, 1
      %v1812 = vpop.permute.xlu0 %1811
      %1813 = vrot.lane.b32.xlu0 %v1808, 1
      %v1814 = vpop.permute.xlu0 %1813
      %v1815 = vrot.slane %v1812, 4
      %v1816 = vrot.slane %v1814, 4
      %vm1817 = vcmask 7168
      %v1818 = vsel %vm1817, %v1815, %v1812
      %v1819 = vsel %vm607, %v1815, %v1816
      %v1820 = vsel %vm1817, %v1819, %v1814
      %v1823 = vadd.f32 %v1663, %v1818
      %v1824 = vadd.f32 %v1664, %v1820
      %1825 = vset.pattern.permute.xlu0 46
      %1826 = vperm.xlu0 %1825, %v524
      %v1827 = vpop.permute.xlu0 %1826
      %1828 = vrot.lane.b32.xlu0 %v521, 108
      %v1829 = vpop.permute.xlu0 %1828
      %1830 = vrot.lane.b32.xlu0 %v522, 108
      %v1831 = vpop.permute.xlu0 %1830
      %1832 = vrot.lane.b32.xlu0 %v523, 108
      %v1833 = vpop.permute.xlu0 %1832
      %v1834 = vrot.slane %v1829, 4
      %v1835 = vrot.slane %v1831, 4
      %v1836 = vsel %vm607, %v1834, %v1835
      %vm1837 = vcmask 883712
      %v1838 = vsel %vm1837, %v1836, %v1831
      %v1839 = vsel %vm1837, %v1835, %v1833
      %v1843 = vunpack.c.l.s4 839922192
      %v1844 = vunpack.c.0.s8 %v1843
      %v1845 = vlaneseq
      %v1846 = vshrl.u32 %v1845, 7
      %v1847 = vsub.s32 %v1844, %v1846
      %v1848 = vrot.slane %v1827, %v1847
      %v1850 = vmul.f32 %v1838, %v1848
      %v1851 = vmul.f32 %v1839, %v1848
      %1854 = vrot.lane.b32.xlu0 %v1850, 2
      %v1855 = vpop.permute.xlu0 %1854
      %1856 = vrot.lane.b32.xlu0 %v1851, 2
      %v1857 = vpop.permute.xlu0 %1856
      %v1858 = vrot.slane %v1855, 4
      %v1859 = vrot.slane %v1857, 4
      %v1860 = vsel %vm1703, %v1858, %v1855
      %v1861 = vsel %vm607, %v1858, %v1859
      %v1862 = vsel %vm1703, %v1861, %v1857
      %v1865 = vadd.f32 %v1709, %v1860
      %v1866 = vadd.f32 %v1710, %v1862
      %1867 = vset.pattern.permute.xlu0 47
      %1868 = vperm.xlu0 %1867, %v524
      %v1869 = vpop.permute.xlu0 %1868
      %1870 = vrot.lane.b32.xlu0 %v521, 107
      %v1871 = vpop.permute.xlu0 %1870
      %1872 = vrot.lane.b32.xlu0 %v522, 107
      %v1873 = vpop.permute.xlu0 %1872
      %1874 = vrot.lane.b32.xlu0 %v523, 107
      %v1875 = vpop.permute.xlu0 %1874
      %v1876 = vrot.slane %v1871, 4
      %v1877 = vrot.slane %v1873, 4
      %v1878 = vsel %vm607, %v1876, %v1877
      %v1879 = vsel %vm694, %v1878, %v1873
      %v1880 = vsel %vm694, %v1877, %v1875
      %v1884 = vunpack.c.l.s4 839922192
      %v1885 = vunpack.c.0.s8 %v1884
      %v1886 = vlaneseq
      %v1887 = vshrl.u32 %v1886, 7
      %v1888 = vsub.s32 %v1885, %v1887
      %v1889 = vrot.slane %v1869, %v1888
      %v1891 = vmul.f32 %v1879, %v1889
      %v1892 = vmul.f32 %v1880, %v1889
      %1895 = vrot.lane.b32.xlu0 %v1891, 3
      %v1896 = vpop.permute.xlu0 %1895
      %1897 = vrot.lane.b32.xlu0 %v1892, 3
      %v1898 = vpop.permute.xlu0 %1897
      %v1899 = vrot.slane %v1896, 4
      %v1900 = vrot.slane %v1898, 4
      %v1901 = vsel %vm1630, %v1899, %v1896
      %v1902 = vsel %vm607, %v1899, %v1900
      %v1903 = vsel %vm1630, %v1902, %v1898
      %v1906 = vadd.f32 %v1751, %v1901
      %v1907 = vadd.f32 %v1752, %v1903
      %1908 = vset.pattern.permute.xlu0 48
      %1909 = vperm.xlu0 %1908, %v524
      %v1910 = vpop.permute.xlu0 %1909
      %1911 = vrot.lane.b32.xlu0 %v521, 106
      %v1912 = vpop.permute.xlu0 %1911
      %1913 = vrot.lane.b32.xlu0 %v522, 106
      %v1914 = vpop.permute.xlu0 %1913
      %1915 = vrot.lane.b32.xlu0 %v523, 106
      %v1916 = vpop.permute.xlu0 %1915
      %v1917 = vrot.slane %v1912, 4
      %v1918 = vrot.slane %v1914, 4
      %v1919 = vsel %vm607, %v1917, %v1918
      %vm1920 = vcmask 867328
      %v1921 = vsel %vm1920, %v1919, %v1914
      %v1922 = vsel %vm1920, %v1918, %v1916
      %v1926 = vunpack.c.l.s4 839922192
      %v1927 = vunpack.c.0.s8 %v1926
      %v1928 = vlaneseq
      %v1929 = vshrl.u32 %v1928, 7
      %v1930 = vsub.s32 %v1927, %v1929
      %v1931 = vrot.slane %v1910, %v1930
      %v1933 = vmul.f32 %v1921, %v1931
      %v1934 = vmul.f32 %v1922, %v1931
      %v1935 = vadd.f32 %v1780, %v1933
      %v1936 = vadd.f32 %v1781, %v1934
      %1939 = vrot.lane.b32.xlu0 %v1823, 127
      %v1940 = vpop.permute.xlu0 %1939
      %1941 = vrot.lane.b32.xlu0 %v1824, 127
      %v1942 = vpop.permute.xlu0 %1941
      %v1943 = vrot.slane %v1940, 4
      %v1944 = vrot.slane %v1942, 4
      %v1945 = vsel %vm607, %v1943, %v1944
      %vm1946 = vcmask 1039360
      %v1947 = vsel %vm1946, %v1940, %v1945
      %v1948 = vsel %vm1946, %v1942, %v1944
      %v1951 = vadd.f32 %v1935, %v1947
      %v1952 = vadd.f32 %v1936, %v1948
      %1955 = vrot.lane.b32.xlu0 %v1906, 127
      %v1956 = vpop.permute.xlu0 %1955
      %1957 = vrot.lane.b32.xlu0 %v1907, 127
      %v1958 = vpop.permute.xlu0 %1957
      %v1959 = vrot.slane %v1956, 4
      %v1960 = vrot.slane %v1958, 4
      %v1961 = vsel %vm607, %v1959, %v1960
      %v1962 = vsel %vm1946, %v1956, %v1961
      %v1963 = vsel %vm1946, %v1958, %v1960
      %v1966 = vadd.f32 %v1865, %v1962
      %v1967 = vadd.f32 %v1866, %v1963
      %1970 = vrot.lane.b32.xlu0 %v1966, 126
      %v1971 = vpop.permute.xlu0 %1970
      %1972 = vrot.lane.b32.xlu0 %v1967, 126
      %v1973 = vpop.permute.xlu0 %1972
      %v1974 = vrot.slane %v1971, 4
      %v1975 = vrot.slane %v1973, 4
      %v1976 = vsel %vm607, %v1974, %v1975
      %vm1977 = vcmask 1031168
      %v1978 = vsel %vm1977, %v1971, %v1976
      %v1979 = vsel %vm1977, %v1973, %v1975
      %v1982 = vadd.f32 %v1951, %v1978
      %v1983 = vadd.f32 %v1952, %v1979
      %v1984 = vld [vmem:[%s482] sm:$0x7]
      %1986 = vset.pattern.permute.xlu0 0
      %1987 = vperm.xlu0 %1986, %v1984
      %v1988 = vpop.permute.xlu0 %1987
      %v1990 = vunpack.c.l.s4 839922192
      %v1991 = vunpack.c.0.s8 %v1990
      %v1992 = vlaneseq
      %v1993 = vshrl.u32 %v1992, 7
      %v1994 = vsub.s32 %v1991, %v1993
      %v1995 = vrot.slane %v1988, %v1994
      %v1997 = vadd.f32 %v1982, %v1995
      %v1998 = vadd.f32 %v1983, %v1995
      %v2000 = vcombine.high %v1997, %v1997
      %vm2002 = vcmask 1042432
      %v2003 = vsel %vm2002, %v1997, 0.0
      %v2004 = vrot.slane %v2003, 4
      %v2005 = vadd.f32 %v2003, %v2004
      %v2006 = vrot.slane %v2005, 2
      %v2007 = vadd.f32 %v2005, %v2006
      %v2008 = vrot.slane %v2007, 1
      %v2009 = vadd.f32 %v2007, %v2008
      %v2010 = vsel %vm2002, %v2000, 0.0
      %v2011 = vrot.slane %v2010, 4
      %v2012 = vadd.f32 %v2010, %v2011
      %v2013 = vrot.slane %v2012, 2
      %v2014 = vadd.f32 %v2012, %v2013
      %v2015 = vrot.slane %v2014, 1
      %v2016 = vadd.f32 %v2014, %v2015
      %v2017 = vsel %vm2002, %v1998, 0.0
      %v2018 = vrot.slane %v2017, 4
      %v2019 = vadd.f32 %v2017, %v2018
      %v2020 = vrot.slane %v2019, 2
      %v2021 = vadd.f32 %v2019, %v2020
      %v2022 = vrot.slane %v2021, 1
      %v2023 = vadd.f32 %v2021, %v2022
      %v2024 = vrcp.pop 3.0
      %v2025 = vmul.f32 %v2009, %v2024
      %v2026 = vmul.f32 %v2016, %v2024
      %v2027 = vmul.f32 %v2023, %v2024
      %v2030 = vcombine.low %v2025, %v2026
      %v2032 = vsub.f32 %v1997, %v2030
      %v2033 = vsub.f32 %v1998, %v2027
      %v2034 = vmul.f32 %v2032, %v2032
      %v2035 = vmul.f32 %v2033, %v2033
      %v2037 = vcombine.high %v2034, %v2034
      %v2039 = vsel %vm2002, %v2034, 0.0
      %v2040 = vrot.slane %v2039, 4
      %v2041 = vadd.f32 %v2039, %v2040
      %v2042 = vrot.slane %v2041, 2
      %v2043 = vadd.f32 %v2041, %v2042
      %v2044 = vrot.slane %v2043, 1
      %v2045 = vadd.f32 %v2043, %v2044
      %v2046 = vsel %vm2002, %v2037, 0.0
      %v2047 = vrot.slane %v2046, 4
      %v2048 = vadd.f32 %v2046, %v2047
      %v2049 = vrot.slane %v2048, 2
      %v2050 = vadd.f32 %v2048, %v2049
      %v2051 = vrot.slane %v2050, 1
      %v2052 = vadd.f32 %v2050, %v2051
      %v2053 = vsel %vm2002, %v2035, 0.0
      %v2054 = vrot.slane %v2053, 4
      %v2055 = vadd.f32 %v2053, %v2054
      %v2056 = vrot.slane %v2055, 2
      %v2057 = vadd.f32 %v2055, %v2056
      %v2058 = vrot.slane %v2057, 1
      %v2059 = vadd.f32 %v2057, %v2058
      %v2060 = vmul.f32 %v2045, %v2024
      %v2061 = vmul.f32 %v2052, %v2024
      %v2062 = vmul.f32 %v2059, %v2024
      %v2063 = vadd.f32 %v2060, 1e-06
      %v2064 = vadd.f32 %v2061, 1e-06
      %v2065 = vadd.f32 %v2062, 1e-06
      %v2066 = vrsqrt.pop %v2063
      %v2067 = vrsqrt.pop %v2064
      %v2068 = vrsqrt.pop %v2065
      %v2071 = vcombine.low %v2066, %v2067
      %v2073 = vmul.f32 %v2032, %v2071
      %v2074 = vmul.f32 %v2033, %v2068
      %v2075 = vld [vmem:[%s486] sm:$0x7]
      %2077 = vset.pattern.permute.xlu0 0
      %2078 = vperm.xlu0 %2077, %v2075
      %v2079 = vpop.permute.xlu0 %2078
      %v2081 = vunpack.c.l.s4 839922192
      %v2082 = vunpack.c.0.s8 %v2081
      %v2083 = vlaneseq
      %v2084 = vshrl.u32 %v2083, 7
      %v2085 = vsub.s32 %v2082, %v2084
      %v2086 = vrot.slane %v2079, %v2085
      %v2088 = vmul.f32 %v2073, %v2086
      %v2089 = vmul.f32 %v2074, %v2086
      %v2090 = vld [vmem:[%s490] sm:$0x7]
      %2092 = vset.pattern.permute.xlu0 0
      %2093 = vperm.xlu0 %2092, %v2090
      %v2094 = vpop.permute.xlu0 %2093
      %v2096 = vunpack.c.l.s4 839922192
      %v2097 = vunpack.c.0.s8 %v2096
      %v2098 = vlaneseq
      %v2099 = vshrl.u32 %v2098, 7
      %v2100 = vsub.s32 %v2097, %v2099
      %v2101 = vrot.slane %v2094, %v2100
      %v2103 = vadd.f32 %v2088, %v2101
      %v2104 = vadd.f32 %v2089, %v2101
      %v2105 = vld [vmem:[%s495] sm:$0xf]
      %v2106 = vld [vmem:[%s495 + $0x4] sm:$0x3]
      %v2108 = vcombine.high %v2103, %v2103
      %v2110 = vpack.c.bf16 %v2103, %v2103
      %v2111 = vpack.c.bf16 %v2108, %v2108
      %v2112 = vpack.c.bf16 %v2104, %v2104
      %v2113 = vld [vmem:[%s500] sm:$0xff]
      %v2114 = vld [vmem:[%s500 + $0x8] sm:$0xf]
      %2116 = vset.pattern.permute.xlu0 0
      %2117 = vperm.xlu0 %2116, %v2113
      %v2118 = vpop.permute.xlu0 %2117
      %2121 = vset.pattern.permute.xlu0 0
      %2122 = vperm.xlu0 %2121, %v2114
      %v2123 = vpop.permute.xlu0 %2122
      %v2127 = vunpack.c.l.b16 %v2105
      %v2128 = vunpack.c.l.b16 %v2106
      %v2129 = vpack.c.b16 %v2128, %v2127
      %v2131 = vsel %vm1630, %v2129, 0
      %vm2133 = vcmask 1040384
      %vm2134 = vcmask 1041408
      %v2135 = vsel %vm2133, 4294967295, 65535
      %v2136 = vsel %vm2134, %v2135, 0
      %v2138 = vand.u32 %v2110, %v2136
      %v2141 = vand.u32 %v2111, %v2136
      %v2144 = vand.u32 %v2112, %v2136
      %2146 = vmatprep.subr.bf16.mxu0 0
      %2147 = vmatpush1.bf16.msra.mxu0 0
      %2148 = vmatprep.subr.bf16.mxu0 0
      %2149 = vmatpush1.bf16.msra.mxu0 0
      %2150 = vmatprep.subr.bf16.mxu0 0
      %2151 = vmatpush1.bf16.msra.mxu0 0
      %2152 = vmatprep.subr.bf16.mxu0 0
      %2153 = vmatpush1.bf16.msra.mxu0 0
      %2154 = vmatprep.subr.bf16.mxu0 0
      %2155 = vmatpush1.bf16.msra.mxu0 0
      %2156 = vmatprep.subr.bf16.mxu0 0
      %2157 = vmatpush1.bf16.msra.mxu0 0
      %2158 = vmatprep.subr.bf16.mxu0 0
      %2159 = vmatpush1.bf16.msra.mxu0 0
      %2160 = vmatprep.subr.bf16.mxu0 %v2141
      %2161 = vmatpush1.bf16.msra.mxu0 %v2138
      %2162 = vmatprep.subr.bf16.mxu0 0
      %2163 = vmatpush2.bf16.msra.mxu0 0
      %2164 = vmatprep.subr.bf16.mxu0 0
      %2165 = vmatpush2.bf16.msra.mxu0 0
      %2166 = vmatprep.subr.bf16.mxu0 0
      %2167 = vmatpush2.bf16.msra.mxu0 0
      %2168 = vmatprep.subr.bf16.mxu0 0
      %2169 = vmatpush2.bf16.msra.mxu0 0
      %2170 = vmatprep.subr.bf16.mxu0 0
      %2171 = vmatpush2.bf16.msra.mxu0 0
      %2172 = vmatprep.subr.bf16.mxu0 0
      %2173 = vmatpush2.bf16.msra.mxu0 0
      %2174 = vmatprep.subr.bf16.mxu0 0
      %2175 = vmatpush2.bf16.msra.mxu0 0
      %2176 = vmatprep.subr.bf16.mxu0 0
      %2177 = vmatpush2.bf16.msra.mxu0 0
      %2178 = vmatprep.mubr.bf16.mxu0 0
      %2179 = vmatmul.mubr.bf16.gmra.mxu0 %v2131
      %v2180 = vpop.f32.mrf.mxu0
      %v2181 = vadd.f32 %v2118, %v2180
      %v2182 = vpop.f32.mrf.mxu0
      %v2183 = vadd.f32 %v2118, %v2182
      %v2184 = vpop.f32.mrf.mxu0
      %v2185 = vadd.f32 %v2123, %v2184
      %v2186 = vpop.f32.mrf.mxu0
      %v2187 = vadd.f32 %v2123, %v2186
      %2188 = vdwg.mxu0
      %2189 = vmatprep.subr.bf16.mxu0 0
      %2190 = vmatpush1.bf16.msra.mxu0 0
      %2191 = vmatprep.subr.bf16.mxu0 0
      %2192 = vmatpush1.bf16.msra.mxu0 0
      %2193 = vmatprep.subr.bf16.mxu0 0
      %2194 = vmatpush1.bf16.msra.mxu0 0
      %2195 = vmatprep.subr.bf16.mxu0 0
      %2196 = vmatpush1.bf16.msra.mxu0 0
      %2197 = vmatprep.subr.bf16.mxu0 0
      %2198 = vmatpush1.bf16.msra.mxu0 0
      %2199 = vmatprep.subr.bf16.mxu0 0
      %2200 = vmatpush1.bf16.msra.mxu0 0
      %2201 = vmatprep.subr.bf16.mxu0 0
      %2202 = vmatpush1.bf16.msra.mxu0 0
      %2203 = vmatprep.subr.bf16.mxu0 0
      %2204 = vmatpush1.bf16.msra.mxu0 %v2144
      %2205 = vmatprep.subr.bf16.mxu0 0
      %2206 = vmatpush2.bf16.msra.mxu0 0
      %2207 = vmatprep.subr.bf16.mxu0 0
      %2208 = vmatpush2.bf16.msra.mxu0 0
      %2209 = vmatprep.subr.bf16.mxu0 0
      %2210 = vmatpush2.bf16.msra.mxu0 0
      %2211 = vmatprep.subr.bf16.mxu0 0
      %2212 = vmatpush2.bf16.msra.mxu0 0
      %2213 = vmatprep.subr.bf16.mxu0 0
      %2214 = vmatpush2.bf16.msra.mxu0 0
      %2215 = vmatprep.subr.bf16.mxu0 0
      %2216 = vmatpush2.bf16.msra.mxu0 0
      %2217 = vmatprep.subr.bf16.mxu0 0
      %2218 = vmatpush2.bf16.msra.mxu0 0
      %2219 = vmatprep.subr.bf16.mxu0 0
      %2220 = vmatpush2.bf16.msra.mxu0 0
      %2221 = vmatprep.mubr.bf16.mxu0 0
      %2222 = vmatmul.mubr.bf16.gmra.mxu0 %v2131
      %v2223 = vpop.f32.mrf.mxu0
      %v2224 = vadd.f32 %v2118, %v2223
      %v2225 = vpop.f32.mrf.mxu0
      %v2226 = vpop.f32.mrf.mxu0
      %v2227 = vadd.f32 %v2123, %v2226
      %v2228 = vpop.f32.mrf.mxu0
      %2229 = vdwg.mxu0
      %v2230 = vmul.f32 %v2181, %v2181
      %v2231 = vmul.f32 %v2183, %v2183
      %v2232 = vmul.f32 %v2224, %v2224
      %v2233 = vmul.f32 %v2185, %v2185
      %v2234 = vmul.f32 %v2187, %v2187
      %v2235 = vmul.f32 %v2227, %v2227
      %v2236 = vmul.f32 %v2181, %v2230
      %v2237 = vmul.f32 %v2183, %v2231
      %v2238 = vmul.f32 %v2224, %v2232
      %v2239 = vmul.f32 %v2185, %v2233
      %v2240 = vmul.f32 %v2187, %v2234
      %v2241 = vmul.f32 %v2227, %v2235
      %v2242 = vmul.f32 %v2236, 0.044715
      %v2243 = vmul.f32 %v2237, 0.044715
      %v2244 = vmul.f32 %v2238, 0.044715
      %v2245 = vmul.f32 %v2239, 0.044715
      %v2246 = vmul.f32 %v2240, 0.044715
      %v2247 = vmul.f32 %v2241, 0.044715
      %v2248 = vadd.f32 %v2181, %v2242
      %v2249 = vadd.f32 %v2183, %v2243
      %v2250 = vadd.f32 %v2224, %v2244
      %v2251 = vadd.f32 %v2185, %v2245
      %v2252 = vadd.f32 %v2187, %v2246
      %v2253 = vadd.f32 %v2227, %v2247
      %v2254 = vmul.f32 %v2248, 0.7978846
      %v2255 = vmul.f32 %v2249, 0.7978846
      %v2256 = vmul.f32 %v2250, 0.7978846
      %v2257 = vmul.f32 %v2251, 0.7978846
      %v2258 = vmul.f32 %v2252, 0.7978846
      %v2259 = vmul.f32 %v2253, 0.7978846
      %v2260 = vtanh.pop %v2254
      %v2261 = vtanh.pop %v2255
      %v2262 = vtanh.pop %v2256
      %v2263 = vtanh.pop %v2257
      %v2264 = vtanh.pop %v2258
      %v2265 = vtanh.pop %v2259
      %v2266 = vadd.f32 %v2260, 1.0
      %v2267 = vadd.f32 %v2261, 1.0
      %v2268 = vadd.f32 %v2262, 1.0
      %v2269 = vadd.f32 %v2263, 1.0
      %v2270 = vadd.f32 %v2264, 1.0
      %v2271 = vadd.f32 %v2265, 1.0
      %v2272 = vmul.f32 %v2266, 0.5
      %v2273 = vmul.f32 %v2267, 0.5
      %v2274 = vmul.f32 %v2268, 0.5
      %v2275 = vmul.f32 %v2269, 0.5
      %v2276 = vmul.f32 %v2270, 0.5
      %v2277 = vmul.f32 %v2271, 0.5
      %v2278 = vmul.f32 %v2181, %v2272
      %v2279 = vmul.f32 %v2183, %v2273
      %v2280 = vmul.f32 %v2224, %v2274
      %v2281 = vmul.f32 %v2185, %v2275
      %v2282 = vmul.f32 %v2187, %v2276
      %v2283 = vmul.f32 %v2227, %v2277
      %v2284 = vld [vmem:[%s504] sm:$0x3]
      %v2285 = vpack.c.bf16 %v2281, %v2278
      %v2286 = vpack.c.bf16 %v2282, %v2279
      %v2287 = vpack.c.bf16 %v2283, %v2280
      %v2288 = vld [vmem:[%s508] sm:$0x7]
      %2290 = vset.pattern.permute.xlu0 0
      %2291 = vperm.xlu0 %2290, %v2288
      %v2292 = vpop.permute.xlu0 %2291
      %vm2294 = vcmask 97280
      %v2296 = vsel %vm2294, %v2284, 0
      %vm2298 = vcmask 1045504
      %v2300 = vsel %vm2298, %v2285, 0
      %v2303 = vsel %vm2298, %v2286, 0
      %v2306 = vsel %vm2298, %v2287, 0
      %2308 = vmatprep.subr.bf16.mxu0 0
      %2309 = vmatpush1.bf16.msra.mxu0 0
      %2310 = vmatprep.subr.bf16.mxu0 0
      %2311 = vmatpush1.bf16.msra.mxu0 0
      %2312 = vmatprep.subr.bf16.mxu0 0
      %2313 = vmatpush1.bf16.msra.mxu0 0
      %2314 = vmatprep.subr.bf16.mxu0 0
      %2315 = vmatpush1.bf16.msra.mxu0 0
      %2316 = vmatprep.subr.bf16.mxu0 0
      %2317 = vmatpush1.bf16.msra.mxu0 0
      %2318 = vmatprep.subr.bf16.mxu0 0
      %2319 = vmatpush1.bf16.msra.mxu0 0
      %2320 = vmatprep.subr.bf16.mxu0 0
      %2321 = vmatpush1.bf16.msra.mxu0 0
      %2322 = vmatprep.subr.bf16.mxu0 %v2303
      %2323 = vmatpush1.bf16.msra.mxu0 %v2300
      %2324 = vmatprep.subr.bf16.mxu0 0
      %2325 = vmatpush2.bf16.msra.mxu0 0
      %2326 = vmatprep.subr.bf16.mxu0 0
      %2327 = vmatpush2.bf16.msra.mxu0 0
      %2328 = vmatprep.subr.bf16.mxu0 0
      %2329 = vmatpush2.bf16.msra.mxu0 0
      %2330 = vmatprep.subr.bf16.mxu0 0
      %2331 = vmatpush2.bf16.msra.mxu0 0
      %2332 = vmatprep.subr.bf16.mxu0 0
      %2333 = vmatpush2.bf16.msra.mxu0 0
      %2334 = vmatprep.subr.bf16.mxu0 0
      %2335 = vmatpush2.bf16.msra.mxu0 0
      %2336 = vmatprep.subr.bf16.mxu0 0
      %2337 = vmatpush2.bf16.msra.mxu0 0
      %2338 = vmatprep.subr.bf16.mxu0 0
      %2339 = vmatpush2.bf16.msra.mxu0 0
      %2340 = vmatprep.mubr.bf16.mxu0 0
      %2341 = vmatmul.mubr.bf16.gmra.mxu0 %v2296
      %v2342 = vpop.f32.mrf.mxu0
      %v2343 = vadd.f32 %v2292, %v2342
      %v2344 = vpop.f32.mrf.mxu0
      %v2345 = vadd.f32 %v2292, %v2344
      %v2346 = vpop.f32.mrf.mxu0
      %v2347 = vpop.f32.mrf.mxu0
      %2348 = vdwg.mxu0
      %2349 = vmatprep.subr.bf16.mxu0 0
      %2350 = vmatpush1.bf16.msra.mxu0 0
      %2351 = vmatprep.subr.bf16.mxu0 0
      %2352 = vmatpush1.bf16.msra.mxu0 0
      %2353 = vmatprep.subr.bf16.mxu0 0
      %2354 = vmatpush1.bf16.msra.mxu0 0
      %2355 = vmatprep.subr.bf16.mxu0 0
      %2356 = vmatpush1.bf16.msra.mxu0 0
      %2357 = vmatprep.subr.bf16.mxu0 0
      %2358 = vmatpush1.bf16.msra.mxu0 0
      %2359 = vmatprep.subr.bf16.mxu0 0
      %2360 = vmatpush1.bf16.msra.mxu0 0
      %2361 = vmatprep.subr.bf16.mxu0 0
      %2362 = vmatpush1.bf16.msra.mxu0 0
      %2363 = vmatprep.subr.bf16.mxu0 0
      %2364 = vmatpush1.bf16.msra.mxu0 %v2306
      %2365 = vmatprep.subr.bf16.mxu0 0
      %2366 = vmatpush2.bf16.msra.mxu0 0
      %2367 = vmatprep.subr.bf16.mxu0 0
      %2368 = vmatpush2.bf16.msra.mxu0 0
      %2369 = vmatprep.subr.bf16.mxu0 0
      %2370 = vmatpush2.bf16.msra.mxu0 0
      %2371 = vmatprep.subr.bf16.mxu0 0
      %2372 = vmatpush2.bf16.msra.mxu0 0
      %2373 = vmatprep.subr.bf16.mxu0 0
      %2374 = vmatpush2.bf16.msra.mxu0 0
      %2375 = vmatprep.subr.bf16.mxu0 0
      %2376 = vmatpush2.bf16.msra.mxu0 0
      %2377 = vmatprep.subr.bf16.mxu0 0
      %2378 = vmatpush2.bf16.msra.mxu0 0
      %2379 = vmatprep.subr.bf16.mxu0 0
      %2380 = vmatpush2.bf16.msra.mxu0 0
      %2381 = vmatprep.mubr.bf16.mxu0 0
      %2382 = vmatmul.mubr.bf16.gmra.mxu0 %v2296
      %v2383 = vpop.f32.mrf.mxu0
      %v2384 = vadd.f32 %v2292, %v2383
      %v2385 = vpop.f32.mrf.mxu0
      %v2386 = vpop.f32.mrf.mxu0
      %v2387 = vpop.f32.mrf.mxu0
      %2388 = vdwg.mxu0
      %v2392 = vcombine.low %v2343, %v2345
      %2393 = vrot.lane.b32.xlu0 %v2392, 75
      %v2394 = vpop.permute.xlu0 %2393
      %2395 = vrot.lane.b32.xlu0 %v2384, 75
      %v2396 = vpop.permute.xlu0 %2395
      %v2397 = vrot.slane %v2394, 4
      %v2398 = vrot.slane %v2396, 4
      %vm2399 = vcmask 613376
      %v2400 = vsel %vm2399, %v2397, %v2394
      %v2401 = vsel %vm607, %v2397, %v2398
      %v2402 = vsel %vm2399, %v2401, %v2396
      %v2405 = vadd.f32 %v521, %v2400
      %v2406 = vadd.f32 %v522, %v2402
      %2409 = vrot.lane.b32.xlu0 %v2405, 53
      %v2410 = vpop.permute.xlu0 %2409
      %2411 = vrot.lane.b32.xlu0 %v2406, 53
      %v2412 = vpop.permute.xlu0 %2411
      %v2413 = vrot.slane %v2410, 4
      %v2414 = vrot.slane %v2412, 4
      %v2415 = vsel %vm607, %v2413, %v2414
      %v2416 = vsel %vm1177, %v2410, %v2415
      %v2417 = vsel %vm1177, %v2412, %v2414
      %2420 = vst [vmem:[%s517] sm:$0x77] %v2416
      %2421 = vst [vmem:[%s517 + $0x8] sm:$0x7] %v2417
      %p2422 = scmp.lt.s32.totalorder %s24, 1
      %s2423 = scalar_select %p2422, %s24, 1
      %p2424 = scmp.lt.s32.totalorder %s25, 1
      %s2425 = scalar_select %p2424, %s25, 1
      %s2426 = smul.addr %s2425, 3
      %s2427 = smul.addr %s2423, 6
      %s2428 = sadd.s32 %s2426, %s2427
      %s2429 = smul.addr %s2428, 4
      %s2430 = scalar_lea.vmem %s9, %s2429
      // Predicated region
      $region57: #{diff_model_forward.3} parent=55 // pred_check
        %p2431 = pneg %p290
      $region58: #{diff_model_forward.3} parent=55 // pred_check_branch
        %2433 = sbr.rel (%p2431) target = $region60
      $region59: #{diff_model_forward.3} parent=55 // pred_region
        _
      $region60: #{diff_model_forward.3} parent=55 // pred_fallthru
        _
    $region56: #{diff_model_forward.3} parent=5 // pred_fallthru
      _
    %p2434 = scmp.le.s32.totalorder 2, %s15
    // Predicated region
    $region61: #{diff_model_forward.3} parent=5 // pred_check
      %p2435 = pneg %p2434
    $region62: #{diff_model_forward.3} parent=5 // pred_check_branch
      %2437 = sbr.rel (%p2435) target = $region64
    $region63: #{diff_model_forward.3} parent=5 // pred_region
      %s2438 = ssub.s32 %s15, 2
      // Predicated region
      $region65: #{diff_model_forward.3} parent=63 // pred_check
        %p2439 = pneg %p296
      $region66: #{diff_model_forward.3} parent=63 // pred_check_branch
        %2441 = sbr.rel (%p2439) target = $region68
      $region67: #{diff_model_forward.3} parent=63 // pred_region
        %p2442 = scmp.lt.s32.totalorder %s26, 1
        %s2443 = scalar_select %p2442, %s26, 1
        %p2444 = scmp.lt.s32.totalorder %s27, 1
        %s2445 = scalar_select %p2444, %s27, 1
        %s2446 = smul.addr %s2445, 3
        %s2447 = smul.addr %s2443, 6
        %s2448 = sadd.s32 %s2446, %s2447
        %s2449 = smul.addr %s2448, 4
        %s2450 = scalar_lea.vmem %s9, %s2449
      $region68: #{diff_model_forward.3} parent=63 // pred_fallthru
        _
    $region64: #{diff_model_forward.3} parent=5 // pred_fallthru
      _
  $region6: #{diff_model_forward.3} parent=0 // loop_footer
    %s19 = sadd.s32 1, %s15
  $region7: #{diff_model_forward.3} parent=0 // loop_footer_branch
    %14 = sbr.rel target = $region3
  $region8: #{diff_model_forward.3} parent=0 // loop_exit
    _

</llo_original>
